<compile_context>
chip_gen: v7x
topology: tpu7x:2x2x1
jax: 0.10.0
libtpu: 0.0.40
codegen_flags: <defaults>
</compile_context>

<pallas_src>
import jax
import jax.numpy as jnp
from jax.experimental import pallas as pl
from jax.experimental.pallas import tpu as pltpu


LANE = 128      # lane width: final logits padded to a lane-dense slab
TILE_B = 256    # batch rows per grid step (multiple of 8, VMEM-safe on v7x)


# --------------------------------------------------------------------------
# Fused Pallas kernel: five matmuls, bf16 on the MXU, f32 bias/ReLU.
# All weights/biases are resident VMEM refs; x/out are batch-tiled blocks.
# --------------------------------------------------------------------------
def _fused_cnn_kernel(x_ref,
                      w1_ref, b1_ref,     # conv1 as Toeplitz matrix
                      w2_ref, b2_ref,     # conv2 as Toeplitz matrix
                      w3_ref, b3_ref,     # fc1 (rows pre-permuted to HWC order)
                      w4_ref, b4_ref,     # fc2
                      w5_ref, b5_ref,     # fc3 (padded to 128 output lanes)
                      out_ref):
    def dense(h, w_ref, b_ref, relu):
        acc = jnp.dot(h.astype(jnp.bfloat16), w_ref[...],
                      preferred_element_type=jnp.float32)
        acc = acc + b_ref[...]            # (1, n) f32 bias broadcasts over rows
        if relu:
            acc = jnp.maximum(acc, 0.0)
        return acc

    h = dense(x_ref[...], w1_ref, b1_ref, relu=True)    # conv1 -> (tb, 512)
    h = dense(h,          w2_ref, b2_ref, relu=True)    # conv2 -> (tb, 128)
    h = dense(h,          w3_ref, b3_ref, relu=True)    # fc1   -> (tb, 256)
    h = dense(h,          w4_ref, b4_ref, relu=True)    # fc2   -> (tb, 64)
    h = dense(h,          w5_ref, b5_ref, relu=False)   # fc3   -> (tb, 128)
    out_ref[...] = h.astype(out_ref.dtype)


# --------------------------------------------------------------------------
# One-time parameter preprocessing (pure XLA glue, outside the kernel).
# --------------------------------------------------------------------------
def feature_spatial(h, w):
    oh1 = (h - 8) // 4 + 1
    ow1 = (w - 8) // 4 + 1
    return oh1, ow1, oh1 - 2, ow1 - 2


def _conv_to_matrix(w_hwio, in_h, in_w, stride):
    """Dense Toeplitz operator (in_h*in_w*cin, oh*ow*cout) for a VALID conv.

    Row ordering is (y, x, cin) -- matching an NHWC flatten of the input.
    Column ordering is (oh, ow, cout) -- position-major, channel-minor.
    """
    kh, kw, cin, cout = w_hwio.shape
    oh = (in_h - kh) // stride + 1
    ow = (in_w - kw) // stride + 1
    m = jnp.zeros((in_h, in_w, cin, oh, ow, cout), w_hwio.dtype)
    for p in range(oh):
        for q in range(ow):
            m = m.at[p * stride:p * stride + kh,
                     q * stride:q * stride + kw, :, p, q, :].set(w_hwio)
    return m.reshape(in_h * in_w * cin, oh * ow * cout)


def init_cnn_params(h, w, c, action_dim, key):
    _, _, oh2, ow2 = feature_spatial(h, w)
    feature_size = 32 * oh2 * ow2
    ks = jax.random.split(key, 10)

    def dense_init(k, shape, fan_in):
        return jax.random.normal(k, shape, jnp.float32) / jnp.sqrt(fan_in)

    return {
        "conv1_w": dense_init(ks[0], (8, 8, c, 32), 8 * 8 * c),
        "conv1_b": dense_init(ks[1], (32,), 8 * 8 * c),
        "conv2_w": dense_init(ks[2], (3, 3, 32, 32), 3 * 3 * 32),
        "conv2_b": dense_init(ks[3], (32,), 3 * 3 * 32),
        # fc1 rows follow PyTorch's NCHW flatten ordering (c, h, w).
        "fc1_w": dense_init(ks[4], (feature_size, 256), feature_size),
        "fc1_b": dense_init(ks[5], (256,), feature_size),
        "fc2_w": dense_init(ks[6], (256, 64), 256),
        "fc2_b": dense_init(ks[7], (64,), 256),
        "fc3_w": dense_init(ks[8], (64, action_dim), 64),
        "fc3_b": dense_init(ks[9], (action_dim,), 64),
    }


def prepare_params(params, h, w, c, action_dim):
    """Build the fused-kernel operands: Toeplitz conv matrices, permuted fc1,
    padded fc3, bf16 weights, f32 (1, n) biases."""
    oh1, ow1, oh2, ow2 = feature_spatial(h, w)
    feat = 32 * oh2 * ow2

    w1 = _conv_to_matrix(params["conv1_w"], h, w, stride=4)     # (h*w*c, 16*32)
    b1 = jnp.tile(params["conv1_b"], oh1 * ow1)                 # (oh1*ow1*32,)
    w2 = _conv_to_matrix(params["conv2_w"], oh1, ow1, stride=1)  # (512, 128)
    b2 = jnp.tile(params["conv2_b"], oh2 * ow2)                 # (oh2*ow2*32,)

    # Permute fc1 rows from PyTorch NCHW-flatten order (c, h, w) to the
    # (h, w, c) order produced by the conv2 Toeplitz matmul.
    w3 = (params["fc1_w"].reshape(32, oh2, ow2, -1)
          .transpose(1, 2, 0, 3).reshape(feat, -1))
    b3 = params["fc1_b"]
    w4 = params["fc2_w"]
    b4 = params["fc2_b"]

    n_out = ((action_dim + LANE - 1) // LANE) * LANE
    pad = n_out - action_dim
    w5 = jnp.pad(params["fc3_w"], ((0, 0), (0, pad)))
    b5 = jnp.pad(params["fc3_b"], ((0, pad),))

    bf, f32 = jnp.bfloat16, jnp.float32
    return {
        "w1": w1.astype(bf), "b1": b1.reshape(1, -1).astype(f32),
        "w2": w2.astype(bf), "b2": b2.reshape(1, -1).astype(f32),
        "w3": w3.astype(bf), "b3": b3.reshape(1, -1).astype(f32),
        "w4": w4.astype(bf), "b4": b4.reshape(1, -1).astype(f32),
        "w5": w5.astype(bf), "b5": b5.reshape(1, -1).astype(f32),
        "action_dim": action_dim,
    }


# --------------------------------------------------------------------------
# Forward pass: one pallas_call over batch tiles.
# --------------------------------------------------------------------------
def cnn_forward(prep, state_nhwc):
    n, h, w, c = state_nhwc.shape
    in_dim = h * w * c
    x = state_nhwc.reshape(n, in_dim).astype(jnp.bfloat16)

    n_out = prep["b5"].shape[1]
    tb = min(TILE_B, n)              # tb == n (full extent) or a multiple of 8
    grid = (pl.cdiv(n, tb),)

    vmem = pl.BlockSpec(memory_space=pltpu.MemorySpace.VMEM)   # resident operand
    out_padded = pl.pallas_call(
        _fused_cnn_kernel,
        out_shape=jax.ShapeDtypeStruct((n, n_out), jnp.float32),
        grid=grid,
        in_specs=[pl.BlockSpec((tb, in_dim), lambda i: (i, 0))] + [vmem] * 10,
        out_specs=pl.BlockSpec((tb, n_out), lambda i: (i, 0)),
        compiler_params=pltpu.CompilerParams(
            dimension_semantics=("parallel",),
            vmem_limit_bytes=32 * 1024 * 1024),
    )(x,
      prep["w1"], prep["b1"], prep["w2"], prep["b2"],
      prep["w3"], prep["b3"], prep["w4"], prep["b4"],
      prep["w5"], prep["b5"])
    return out_padded[:, :prep["action_dim"]]


# --------------------------------------------------------------------------
# Pure-JAX f32 reference (im2col path) for a sanity check.
# --------------------------------------------------------------------------
def _im2col(x, kh, kw, stride):
    _, hh, ww, _ = x.shape
    oh = (hh - kh) // stride + 1
    ow = (ww - kw) // stride + 1
    cols = []
    for i in range(kh):
        for j in range(kw):
            cols.append(x[:, i:i + stride * oh:stride,
                          j:j + stride * ow:stride, :])
    return jnp.concatenate(cols, axis=-1)   # patch ordering (kh, kw, C)


def cnn_reference(params, state_nhwc):
    def conv_relu(x, w_hwio, b, stride):
        kh, kw, cin, cout = w_hwio.shape
        n = x.shape[0]
        cols = _im2col(x, kh, kw, stride)
        oh, ow = cols.shape[1], cols.shape[2]
        out = cols.reshape(n * oh * ow, kh * kw * cin) @ w_hwio.reshape(-1, cout) + b
        return jnp.maximum(out, 0.0).reshape(n, oh, ow, cout)

    x = conv_relu(state_nhwc, params["conv1_w"], params["conv1_b"], 4)
    x = conv_relu(x, params["conv2_w"], params["conv2_b"], 1)
    n = x.shape[0]
    x = jnp.transpose(x, (0, 3, 1, 2)).reshape(n, -1)   # NCHW flatten (PyTorch)
    x = jnp.maximum(x @ params["fc1_w"] + params["fc1_b"], 0.0)
    x = jnp.maximum(x @ params["fc2_w"] + params["fc2_b"], 0.0)
    return x @ params["fc3_w"] + params["fc3_b"]


if __name__ == "__main__":
    # Small shapes consistent with the module:
    #   h = w = 20, c = 4 -> conv1 out 4x4, conv2 out 2x2, feature_size = 128
    batch, h, w, c, action_dim = 2, 20, 20, 4, 6

    key = jax.random.PRNGKey(0)
    pkey, xkey = jax.random.split(key)
    params = init_cnn_params(h, w, c, action_dim, pkey)
    prep = prepare_params(params, h, w, c, action_dim)

    state = jax.random.normal(xkey, (batch, h, w, c), jnp.float32)  # NHWC

    out = cnn_forward(prep, state)
    out = jax.block_until_ready(out)
    assert out.shape == (batch, action_dim), out.shape
    assert out.dtype == jnp.float32
    assert bool(jnp.all(jnp.isfinite(out)))

    # Loose tolerance: kernel uses bf16 matmuls with f32 accumulation.
    ref = cnn_reference(params, state)
    max_err = float(jnp.max(jnp.abs(out - ref)))
    assert max_err < 2e-1, f"mismatch vs f32 reference: {max_err}"

    print("KERNEL_OK")
</pallas_src>

<mosaic_0001>
module attributes {stable_mosaic.version = 11 : i64} {
  func.func @_fused_cnn_kernel(%arg0: i32, %arg1: memref<2x1600xbf16, #tpu.memory_space<vmem>>, %arg2: memref<1600x512xbf16, #tpu.memory_space<vmem>>, %arg3: memref<1x512xf32, #tpu.memory_space<vmem>>, %arg4: memref<512x128xbf16, #tpu.memory_space<vmem>>, %arg5: memref<1x128xf32, #tpu.memory_space<vmem>>, %arg6: memref<128x256xbf16, #tpu.memory_space<vmem>>, %arg7: memref<1x256xf32, #tpu.memory_space<vmem>>, %arg8: memref<256x64xbf16, #tpu.memory_space<vmem>>, %arg9: memref<1x64xf32, #tpu.memory_space<vmem>>, %arg10: memref<64x128xbf16, #tpu.memory_space<vmem>>, %arg11: memref<1x128xf32, #tpu.memory_space<vmem>>, %arg12: memref<2x128xf32, #tpu.memory_space<vmem>>) attributes {dimension_semantics = [#tpu.dimension_semantics<parallel>], iteration_bounds = array<i64: 1>, scalar_prefetch = 0 : i64, scratch_operands = 0 : i64, tpu.core_type = #tpu.core_type<tc>, window_params = [{transform_indices = @transform_0, window_bounds = array<i64: 2, 1600>}, {pipeline_mode = #tpu.pipeline_mode<synchronous>, transform_indices = @transform_1, window_bounds = array<i64: 1600, 512>}, {pipeline_mode = #tpu.pipeline_mode<synchronous>, transform_indices = @transform_2, window_bounds = array<i64: 1, 512>}, {pipeline_mode = #tpu.pipeline_mode<synchronous>, transform_indices = @transform_3, window_bounds = array<i64: 512, 128>}, {pipeline_mode = #tpu.pipeline_mode<synchronous>, transform_indices = @transform_4, window_bounds = array<i64: 1, 128>}, {pipeline_mode = #tpu.pipeline_mode<synchronous>, transform_indices = @transform_5, window_bounds = array<i64: 128, 256>}, {pipeline_mode = #tpu.pipeline_mode<synchronous>, transform_indices = @transform_6, window_bounds = array<i64: 1, 256>}, {pipeline_mode = #tpu.pipeline_mode<synchronous>, transform_indices = @transform_7, window_bounds = array<i64: 256, 64>}, {pipeline_mode = #tpu.pipeline_mode<synchronous>, transform_indices = @transform_8, window_bounds = array<i64: 1, 64>}, {pipeline_mode = #tpu.pipeline_mode<synchronous>, transform_indices = @transform_9, window_bounds = array<i64: 64, 128>}, {pipeline_mode = #tpu.pipeline_mode<synchronous>, transform_indices = @transform_10, window_bounds = array<i64: 1, 128>}, {transform_indices = @transform_11, window_bounds = array<i64: 2, 128>}]} {
    %c0 = arith.constant 0 : index
    %c0_0 = arith.constant 0 : index
    %0 = vector.load %arg1[%c0, %c0_0] : memref<2x1600xbf16, #tpu.memory_space<vmem>>, vector<2x1600xbf16>
    %c0_1 = arith.constant 0 : index
    %c0_2 = arith.constant 0 : index
    %1 = vector.load %arg2[%c0_1, %c0_2] : memref<1600x512xbf16, #tpu.memory_space<vmem>>, vector<1600x512xbf16>
    %cst = arith.constant dense<0.000000e+00> : vector<2x512xf32>
    %2 = tpu.matmul %0, %1, %cst {dimension_numbers = #tpu.dot_dimension_numbers<[1], [0], [0], [1], [0, 0, 1, 1], [], []>} : vector<2x1600xbf16>, vector<1600x512xbf16>, vector<2x512xf32> -> vector<2x512xf32>
    %c0_3 = arith.constant 0 : index
    %c0_4 = arith.constant 0 : index
    %3 = vector.load %arg3[%c0_3, %c0_4] : memref<1x512xf32, #tpu.memory_space<vmem>>, vector<1x512xf32>
    %4 = vector.broadcast %3 : vector<1x512xf32> to vector<2x512xf32>
    %5 = arith.addf %2, %4 : vector<2x512xf32>
    %cst_5 = arith.constant 0.000000e+00 : f32
    %6 = vector.broadcast %cst_5 : f32 to vector<2x512xf32>
    %7 = arith.maximumf %5, %6 : vector<2x512xf32>
    %8 = arith.truncf %7 : vector<2x512xf32> to vector<2x512xbf16>
    %c0_6 = arith.constant 0 : index
    %c0_7 = arith.constant 0 : index
    %9 = vector.load %arg4[%c0_6, %c0_7] : memref<512x128xbf16, #tpu.memory_space<vmem>>, vector<512x128xbf16>
    %cst_8 = arith.constant dense<0.000000e+00> : vector<2x128xf32>
    %10 = tpu.matmul %8, %9, %cst_8 {dimension_numbers = #tpu.dot_dimension_numbers<[1], [0], [0], [1], [0, 0, 1, 1], [], []>} : vector<2x512xbf16>, vector<512x128xbf16>, vector<2x128xf32> -> vector<2x128xf32>
    %c0_9 = arith.constant 0 : index
    %c0_10 = arith.constant 0 : index
    %11 = vector.load %arg5[%c0_9, %c0_10] : memref<1x128xf32, #tpu.memory_space<vmem>>, vector<1x128xf32>
    %12 = vector.broadcast %11 : vector<1x128xf32> to vector<2x128xf32>
    %13 = arith.addf %10, %12 : vector<2x128xf32>
    %cst_11 = arith.constant 0.000000e+00 : f32
    %14 = vector.broadcast %cst_11 : f32 to vector<2x128xf32>
    %15 = arith.maximumf %13, %14 : vector<2x128xf32>
    %16 = arith.truncf %15 : vector<2x128xf32> to vector<2x128xbf16>
    %c0_12 = arith.constant 0 : index
    %c0_13 = arith.constant 0 : index
    %17 = vector.load %arg6[%c0_12, %c0_13] : memref<128x256xbf16, #tpu.memory_space<vmem>>, vector<128x256xbf16>
    %cst_14 = arith.constant dense<0.000000e+00> : vector<2x256xf32>
    %18 = tpu.matmul %16, %17, %cst_14 {dimension_numbers = #tpu.dot_dimension_numbers<[1], [0], [0], [1], [0, 0, 1, 1], [], []>} : vector<2x128xbf16>, vector<128x256xbf16>, vector<2x256xf32> -> vector<2x256xf32>
    %c0_15 = arith.constant 0 : index
    %c0_16 = arith.constant 0 : index
    %19 = vector.load %arg7[%c0_15, %c0_16] : memref<1x256xf32, #tpu.memory_space<vmem>>, vector<1x256xf32>
    %20 = vector.broadcast %19 : vector<1x256xf32> to vector<2x256xf32>
    %21 = arith.addf %18, %20 : vector<2x256xf32>
    %cst_17 = arith.constant 0.000000e+00 : f32
    %22 = vector.broadcast %cst_17 : f32 to vector<2x256xf32>
    %23 = arith.maximumf %21, %22 : vector<2x256xf32>
    %24 = arith.truncf %23 : vector<2x256xf32> to vector<2x256xbf16>
    %c0_18 = arith.constant 0 : index
    %c0_19 = arith.constant 0 : index
    %25 = vector.load %arg8[%c0_18, %c0_19] : memref<256x64xbf16, #tpu.memory_space<vmem>>, vector<256x64xbf16>
    %cst_20 = arith.constant dense<0.000000e+00> : vector<2x64xf32>
    %26 = tpu.matmul %24, %25, %cst_20 {dimension_numbers = #tpu.dot_dimension_numbers<[1], [0], [0], [1], [0, 0, 1, 1], [], []>} : vector<2x256xbf16>, vector<256x64xbf16>, vector<2x64xf32> -> vector<2x64xf32>
    %c0_21 = arith.constant 0 : index
    %c0_22 = arith.constant 0 : index
    %27 = vector.load %arg9[%c0_21, %c0_22] : memref<1x64xf32, #tpu.memory_space<vmem>>, vector<1x64xf32>
    %28 = vector.broadcast %27 : vector<1x64xf32> to vector<2x64xf32>
    %29 = arith.addf %26, %28 : vector<2x64xf32>
    %cst_23 = arith.constant 0.000000e+00 : f32
    %30 = vector.broadcast %cst_23 : f32 to vector<2x64xf32>
    %31 = arith.maximumf %29, %30 : vector<2x64xf32>
    %32 = arith.truncf %31 : vector<2x64xf32> to vector<2x64xbf16>
    %c0_24 = arith.constant 0 : index
    %c0_25 = arith.constant 0 : index
    %33 = vector.load %arg10[%c0_24, %c0_25] : memref<64x128xbf16, #tpu.memory_space<vmem>>, vector<64x128xbf16>
    %cst_26 = arith.constant dense<0.000000e+00> : vector<2x128xf32>
    %34 = tpu.matmul %32, %33, %cst_26 {dimension_numbers = #tpu.dot_dimension_numbers<[1], [0], [0], [1], [0, 0, 1, 1], [], []>} : vector<2x64xbf16>, vector<64x128xbf16>, vector<2x128xf32> -> vector<2x128xf32>
    %c0_27 = arith.constant 0 : index
    %c0_28 = arith.constant 0 : index
    %35 = vector.load %arg11[%c0_27, %c0_28] : memref<1x128xf32, #tpu.memory_space<vmem>>, vector<1x128xf32>
    %36 = vector.broadcast %35 : vector<1x128xf32> to vector<2x128xf32>
    %37 = arith.addf %34, %36 : vector<2x128xf32>
    %c0_29 = arith.constant 0 : index
    %c0_30 = arith.constant 0 : index
    %38 = vector.load %arg12[%c0_29, %c0_30] : memref<2x128xf32, #tpu.memory_space<vmem>>, vector<2x128xf32>
    tpu.vector_store %arg12[%c0_29, %c0_30], %37 {strides = array<i32>} : memref<2x128xf32, #tpu.memory_space<vmem>>, vector<2x128xf32>,
    return
  }
  func.func @transform_0(%arg0: i32) -> (i32, i32) {
    %c0_i32 = arith.constant 0 : i32
    %c0_i32_0 = arith.constant 0 : i32
    return %arg0, %c0_i32 : i32, i32
  }
  func.func @transform_1(%arg0: i32) -> (i32, i32) {
    %c0_i32 = arith.constant 0 : i32
    %c0_i32_0 = arith.constant 0 : i32
    %c0_i32_1 = arith.constant 0 : i32
    return %c0_i32, %c0_i32_0 : i32, i32
  }
  func.func @transform_2(%arg0: i32) -> (i32, i32) {
    %c0_i32 = arith.constant 0 : i32
    %c0_i32_0 = arith.constant 0 : i32
    %c0_i32_1 = arith.constant 0 : i32
    return %c0_i32, %c0_i32_0 : i32, i32
  }
  func.func @transform_3(%arg0: i32) -> (i32, i32) {
    %c0_i32 = arith.constant 0 : i32
    %c0_i32_0 = arith.constant 0 : i32
    %c0_i32_1 = arith.constant 0 : i32
    return %c0_i32, %c0_i32_0 : i32, i32
  }
  func.func @transform_4(%arg0: i32) -> (i32, i32) {
    %c0_i32 = arith.constant 0 : i32
    %c0_i32_0 = arith.constant 0 : i32
    %c0_i32_1 = arith.constant 0 : i32
    return %c0_i32, %c0_i32_0 : i32, i32
  }
  func.func @transform_5(%arg0: i32) -> (i32, i32) {
    %c0_i32 = arith.constant 0 : i32
    %c0_i32_0 = arith.constant 0 : i32
    %c0_i32_1 = arith.constant 0 : i32
    return %c0_i32, %c0_i32_0 : i32, i32
  }
  func.func @transform_6(%arg0: i32) -> (i32, i32) {
    %c0_i32 = arith.constant 0 : i32
    %c0_i32_0 = arith.constant 0 : i32
    %c0_i32_1 = arith.constant 0 : i32
    return %c0_i32, %c0_i32_0 : i32, i32
  }
  func.func @transform_7(%arg0: i32) -> (i32, i32) {
    %c0_i32 = arith.constant 0 : i32
    %c0_i32_0 = arith.constant 0 : i32
    %c0_i32_1 = arith.constant 0 : i32
    return %c0_i32, %c0_i32_0 : i32, i32
  }
  func.func @transform_8(%arg0: i32) -> (i32, i32) {
    %c0_i32 = arith.constant 0 : i32
    %c0_i32_0 = arith.constant 0 : i32
    %c0_i32_1 = arith.constant 0 : i32
    return %c0_i32, %c0_i32_0 : i32, i32
  }
  func.func @transform_9(%arg0: i32) -> (i32, i32) {
    %c0_i32 = arith.constant 0 : i32
    %c0_i32_0 = arith.constant 0 : i32
    %c0_i32_1 = arith.constant 0 : i32
    return %c0_i32, %c0_i32_0 : i32, i32
  }
  func.func @transform_10(%arg0: i32) -> (i32, i32) {
    %c0_i32 = arith.constant 0 : i32
    %c0_i32_0 = arith.constant 0 : i32
    %c0_i32_1 = arith.constant 0 : i32
    return %c0_i32, %c0_i32_0 : i32, i32
  }
  func.func @transform_11(%arg0: i32) -> (i32, i32) {
    %c0_i32 = arith.constant 0 : i32
    %c0_i32_0 = arith.constant 0 : i32
    return %arg0, %c0_i32 : i32, i32
  }
}

</mosaic_0001>

<llo_original>
// kernel: tpu_custom_call.1
$region0: #{tpu_custom_call.1}
  #allocation0 [shape = 'u32[]', space=smem, size = 0x4, offset = 0x4, fixed_abs, tag = 'smem constant byte address 0x4 - core index']
  #allocation1 [shape = 'u32[144,128]{1,0:T(1,128)}', space=vmem, size = 0x12000, scoped, tag = 'internal scratch']
  %s0 = inlined_call_operand.hbm [shape: bf16[2,1600], index: 0, kind: input, shape index: {}]
  %s1 = inlined_call_operand.hbm [shape: bf16[1600,512], index: 1, kind: input, shape index: {}]
  %s2 = inlined_call_operand.hbm [shape: f32[1,512], index: 2, kind: input, shape index: {}]
  %s3 = inlined_call_operand.hbm [shape: bf16[512,128], index: 3, kind: input, shape index: {}]
  %s4 = inlined_call_operand.hbm [shape: f32[1,128], index: 4, kind: input, shape index: {}]
  %s5 = inlined_call_operand.hbm [shape: bf16[128,256], index: 5, kind: input, shape index: {}]
  %s6 = inlined_call_operand.hbm [shape: f32[1,256], index: 6, kind: input, shape index: {}]
  %s7 = inlined_call_operand.vmem [shape: bf16[256,64], index: 7, kind: input, shape index: {}]
  %s8 = inlined_call_operand.hbm [shape: f32[1,64], index: 8, kind: input, shape index: {}]
  %s9 = inlined_call_operand.hbm [shape: bf16[64,128], index: 9, kind: input, shape index: {}]
  %s10 = inlined_call_operand.hbm [shape: f32[1,128], index: 10, kind: input, shape index: {}]
  %s11 = inlined_call_operand.hbm [shape: f32[2,128], index: 11, kind: output, shape index: {}]
  %s12 = sld [smem:[#allocation0]]
  $region94: #{tpu_custom_call.1} parent=0
    _
  %s14 = ssub.s32 1, %s12
  %s15 = scalar_select 0, %s14, %s12
  $region1: #{tpu_custom_call.1} parent=0
    #allocation2 [shape = 'u8[6656]{0}', space=vmem, size = 0x1c00, scoped, tag = 'input window, operand 0, single buffered']
    #allocation3 [shape = 's32[1]{0}', space=sflag, size = 0x4, scoped, tag = 'scoped memory for tpu_custom_call.1']
    #allocation4 [shape = 's32[1]{0}', space=sflag, size = 0x4, scoped, tag = 'scoped memory for tpu_custom_call.1']
    #allocation5 [shape = 'u8[1638400]{0}', space=vmem, size = 0x190000, scoped, tag = 'input window, operand 1, single buffered']
    #allocation6 [shape = 's32[1]{0}', space=sflag, size = 0x4, scoped, tag = 'scoped memory for tpu_custom_call.1']
    #allocation7 [shape = 'u8[2048]{0}', space=vmem, size = 0x800, scoped, tag = 'input window, operand 2, single buffered']
    #allocation8 [shape = 'u8[131072]{0}', space=vmem, size = 0x20000, scoped, tag = 'input window, operand 3, single buffered']
    #allocation9 [shape = 's32[1]{0}', space=sflag, size = 0x4, scoped, tag = 'scoped memory for tpu_custom_call.1']
    #allocation10 [shape = 'u8[512]{0}', space=vmem, size = 0x400, scoped, tag = 'input window, operand 4, single buffered']
    #allocation11 [shape = 'u8[65536]{0}', space=vmem, size = 0x10000, scoped, tag = 'input window, operand 5, single buffered']
    #allocation12 [shape = 's32[1]{0}', space=sflag, size = 0x4, scoped, tag = 'scoped memory for tpu_custom_call.1']
    #allocation13 [shape = 'u8[1024]{0}', space=vmem, size = 0x400, scoped, tag = 'input window, operand 6, single buffered']
    #allocation14 [shape = 'u8[512]{0}', space=vmem, size = 0x400, scoped, tag = 'input window, operand 8, single buffered']
    #allocation15 [shape = 's32[1]{0}', space=sflag, size = 0x4, scoped, tag = 'scoped memory for tpu_custom_call.1']
    #allocation16 [shape = 'u8[16384]{0}', space=vmem, size = 0x4000, scoped, tag = 'input window, operand 9, single buffered']
    #allocation17 [shape = 'u8[512]{0}', space=vmem, size = 0x400, scoped, tag = 'input window, operand 10, single buffered']
    #allocation18 [shape = 's32[1]{0}', space=sflag, size = 0x4, scoped, tag = 'scoped memory for tpu_custom_call.1']
    #allocation19 [shape = 'u8[1024]{0}', space=vmem, size = 0x400, scoped, tag = 'output window, operand 0, single buffered']
    %16 = vsyncpa [#allocation3], 0
    %17 = vsyncpa [#allocation6], 0
    %18 = vsyncpa [#allocation9], 0
    %19 = vsyncpa [#allocation12], 0
    %20 = vsyncpa [#allocation15], 0
    %21 = vsyncpa [#allocation18], 0
    %22 = vsyncpa [#allocation4], 0
    // Predicated region
    $region2: #{tpu_custom_call.1} parent=1 // pred_check
      _
    $region3: #{tpu_custom_call.1} parent=1 // pred_check_branch
      %24 = sbr.rel (0) target = $region5
    $region4: #{tpu_custom_call.1} parent=1 // pred_region
      %s26 = ssub.s32 208, 208
      %27 = vsyncadd [#allocation3], %s26
      %s29 = sshll.u32 [#allocation2], 4
      %s30 = int_to_ptr.vmem [resolvable:$true] %s29
      %32 = dma.hbm_to_vmem [thread:$0]  %s0, 208, %s30, [#allocation3]
    $region5: #{tpu_custom_call.1} parent=1 // pred_fallthru
      _
    // Predicated region
    $region6: #{tpu_custom_call.1} parent=1 // pred_check
      _
    $region7: #{tpu_custom_call.1} parent=1 // pred_check_branch
      %34 = sbr.rel (0) target = $region9
    $region8: #{tpu_custom_call.1} parent=1 // pred_region
      %s36 = ssub.s32 51200, 51200
      %37 = vsyncadd [#allocation6], %s36
      %s38 = sshll.u32 [#allocation5], 4
      %s39 = int_to_ptr.vmem [resolvable:$true] %s38
      %44 = dma.hbm_to_vmem [thread:$0]  %s1, 51200, %s39, [#allocation6], 256, 256, 16
    $region9: #{tpu_custom_call.1} parent=1 // pred_fallthru
      _
    // Predicated region
    $region10: #{tpu_custom_call.1} parent=1 // pred_check
      _
    $region11: #{tpu_custom_call.1} parent=1 // pred_check_branch
      %46 = sbr.rel (0) target = $region13
    $region12: #{tpu_custom_call.1} parent=1 // pred_region
      %s48 = ssub.s32 64, 64
      %49 = vsyncadd [#allocation6], %s48
      %s51 = sshll.u32 [#allocation7], 4
      %s52 = int_to_ptr.vmem [resolvable:$true] %s51
      %54 = dma.hbm_to_vmem [thread:$0]  %s2, 64, %s52, [#allocation6]
    $region13: #{tpu_custom_call.1} parent=1 // pred_fallthru
      _
    // Predicated region
    $region14: #{tpu_custom_call.1} parent=1 // pred_check
      _
    $region15: #{tpu_custom_call.1} parent=1 // pred_check_branch
      %56 = sbr.rel (0) target = $region17
    $region16: #{tpu_custom_call.1} parent=1 // pred_region
      %s58 = ssub.s32 4096, 4096
      %59 = vsyncadd [#allocation9], %s58
      %s60 = sshll.u32 [#allocation8], 4
      %s61 = int_to_ptr.vmem [resolvable:$true] %s60
      %66 = dma.hbm_to_vmem [thread:$0]  %s3, 4096, %s61, [#allocation9], 64, 64, 4
    $region17: #{tpu_custom_call.1} parent=1 // pred_fallthru
      _
    // Predicated region
    $region18: #{tpu_custom_call.1} parent=1 // pred_check
      _
    $region19: #{tpu_custom_call.1} parent=1 // pred_check_branch
      %68 = sbr.rel (0) target = $region21
    $region20: #{tpu_custom_call.1} parent=1 // pred_region
      %s70 = ssub.s32 16, 16
      %71 = vsyncadd [#allocation9], %s70
      %s73 = sshll.u32 [#allocation10], 4
      %s74 = int_to_ptr.vmem [resolvable:$true] %s73
      %76 = dma.hbm_to_vmem [thread:$0]  %s4, 16, %s74, [#allocation9]
    $region21: #{tpu_custom_call.1} parent=1 // pred_fallthru
      _
    // Predicated region
    $region22: #{tpu_custom_call.1} parent=1 // pred_check
      _
    $region23: #{tpu_custom_call.1} parent=1 // pred_check_branch
      %78 = sbr.rel (0) target = $region25
    $region24: #{tpu_custom_call.1} parent=1 // pred_region
      %s80 = ssub.s32 2048, 2048
      %81 = vsyncadd [#allocation12], %s80
      %s82 = sshll.u32 [#allocation11], 4
      %s83 = int_to_ptr.vmem [resolvable:$true] %s82
      %88 = dma.hbm_to_vmem [thread:$0]  %s5, 2048, %s83, [#allocation12], 128, 128, 8
    $region25: #{tpu_custom_call.1} parent=1 // pred_fallthru
      _
    // Predicated region
    $region26: #{tpu_custom_call.1} parent=1 // pred_check
      _
    $region27: #{tpu_custom_call.1} parent=1 // pred_check_branch
      %90 = sbr.rel (0) target = $region29
    $region28: #{tpu_custom_call.1} parent=1 // pred_region
      %s92 = ssub.s32 32, 32
      %93 = vsyncadd [#allocation12], %s92
      %s95 = sshll.u32 [#allocation13], 4
      %s96 = int_to_ptr.vmem [resolvable:$true] %s95
      %98 = dma.hbm_to_vmem [thread:$0]  %s6, 32, %s96, [#allocation12]
    $region29: #{tpu_custom_call.1} parent=1 // pred_fallthru
      _
    // Predicated region
    $region30: #{tpu_custom_call.1} parent=1 // pred_check
      _
    $region31: #{tpu_custom_call.1} parent=1 // pred_check_branch
      %100 = sbr.rel (0) target = $region33
    $region32: #{tpu_custom_call.1} parent=1 // pred_region
      _
    $region33: #{tpu_custom_call.1} parent=1 // pred_fallthru
      _
    // Predicated region
    $region34: #{tpu_custom_call.1} parent=1 // pred_check
      _
    $region35: #{tpu_custom_call.1} parent=1 // pred_check_branch
      %102 = sbr.rel (0) target = $region37
    $region36: #{tpu_custom_call.1} parent=1 // pred_region
      %s104 = ssub.s32 16, 16
      %105 = vsyncadd [#allocation15], %s104
      %s107 = sshll.u32 [#allocation14], 4
      %s108 = int_to_ptr.vmem [resolvable:$true] %s107
      %110 = dma.hbm_to_vmem [thread:$0]  %s8, 16, %s108, [#allocation15]
    $region37: #{tpu_custom_call.1} parent=1 // pred_fallthru
      _
    // Predicated region
    $region38: #{tpu_custom_call.1} parent=1 // pred_check
      _
    $region39: #{tpu_custom_call.1} parent=1 // pred_check_branch
      %112 = sbr.rel (0) target = $region41
    $region40: #{tpu_custom_call.1} parent=1 // pred_region
      %s114 = ssub.s32 512, 512
      %115 = vsyncadd [#allocation15], %s114
      %s116 = sshll.u32 [#allocation16], 4
      %s117 = int_to_ptr.vmem [resolvable:$true] %s116
      %122 = dma.hbm_to_vmem [thread:$0]  %s9, 512, %s117, [#allocation15], 64, 64, 4
    $region41: #{tpu_custom_call.1} parent=1 // pred_fallthru
      _
    // Predicated region
    $region42: #{tpu_custom_call.1} parent=1 // pred_check
      _
    $region43: #{tpu_custom_call.1} parent=1 // pred_check_branch
      %124 = sbr.rel (0) target = $region45
    $region44: #{tpu_custom_call.1} parent=1 // pred_region
      %s126 = ssub.s32 16, 16
      %127 = vsyncadd [#allocation18], %s126
      %s129 = sshll.u32 [#allocation17], 4
      %s130 = int_to_ptr.vmem [resolvable:$true] %s129
      %132 = dma.hbm_to_vmem [thread:$0]  %s10, 16, %s130, [#allocation18]
    $region45: #{tpu_custom_call.1} parent=1 // pred_fallthru
      _
    // Predicated region
    $region46: #{tpu_custom_call.1} parent=1 // pred_check
      _
    $region47: #{tpu_custom_call.1} parent=1 // pred_check_branch
      %134 = sbr.rel (0) target = $region49
    $region48: #{tpu_custom_call.1} parent=1 // pred_region
      %135 = dma.done [#allocation3], 208
    $region49: #{tpu_custom_call.1} parent=1 // pred_fallthru
      _
    // Predicated region
    $region50: #{tpu_custom_call.1} parent=1 // pred_check
      _
    $region51: #{tpu_custom_call.1} parent=1 // pred_check_branch
      %137 = sbr.rel (0) target = $region53
    $region52: #{tpu_custom_call.1} parent=1 // pred_region
      %138 = dma.done [#allocation6], 51200
    $region53: #{tpu_custom_call.1} parent=1 // pred_fallthru
      _
    // Predicated region
    $region54: #{tpu_custom_call.1} parent=1 // pred_check
      _
    $region55: #{tpu_custom_call.1} parent=1 // pred_check_branch
      %140 = sbr.rel (0) target = $region57
    $region56: #{tpu_custom_call.1} parent=1 // pred_region
      %141 = dma.done [#allocation6], 64
    $region57: #{tpu_custom_call.1} parent=1 // pred_fallthru
      _
    // Predicated region
    $region58: #{tpu_custom_call.1} parent=1 // pred_check
      _
    $region59: #{tpu_custom_call.1} parent=1 // pred_check_branch
      %143 = sbr.rel (0) target = $region61
    $region60: #{tpu_custom_call.1} parent=1 // pred_region
      %144 = dma.done [#allocation9], 4096
    $region61: #{tpu_custom_call.1} parent=1 // pred_fallthru
      _
    // Predicated region
    $region62: #{tpu_custom_call.1} parent=1 // pred_check
      _
    $region63: #{tpu_custom_call.1} parent=1 // pred_check_branch
      %146 = sbr.rel (0) target = $region65
    $region64: #{tpu_custom_call.1} parent=1 // pred_region
      %147 = dma.done [#allocation9], 16
    $region65: #{tpu_custom_call.1} parent=1 // pred_fallthru
      _
    // Predicated region
    $region66: #{tpu_custom_call.1} parent=1 // pred_check
      _
    $region67: #{tpu_custom_call.1} parent=1 // pred_check_branch
      %149 = sbr.rel (0) target = $region69
    $region68: #{tpu_custom_call.1} parent=1 // pred_region
      %150 = dma.done [#allocation12], 2048
    $region69: #{tpu_custom_call.1} parent=1 // pred_fallthru
      _
    // Predicated region
    $region70: #{tpu_custom_call.1} parent=1 // pred_check
      _
    $region71: #{tpu_custom_call.1} parent=1 // pred_check_branch
      %152 = sbr.rel (0) target = $region73
    $region72: #{tpu_custom_call.1} parent=1 // pred_region
      %153 = dma.done [#allocation12], 32
    $region73: #{tpu_custom_call.1} parent=1 // pred_fallthru
      _
    // Predicated region
    $region74: #{tpu_custom_call.1} parent=1 // pred_check
      _
    $region75: #{tpu_custom_call.1} parent=1 // pred_check_branch
      %155 = sbr.rel (0) target = $region77
    $region76: #{tpu_custom_call.1} parent=1 // pred_region
      %156 = dma.done [#allocation15], 16
    $region77: #{tpu_custom_call.1} parent=1 // pred_fallthru
      _
    // Predicated region
    $region78: #{tpu_custom_call.1} parent=1 // pred_check
      _
    $region79: #{tpu_custom_call.1} parent=1 // pred_check_branch
      %158 = sbr.rel (0) target = $region81
    $region80: #{tpu_custom_call.1} parent=1 // pred_region
      %159 = dma.done [#allocation15], 512
    $region81: #{tpu_custom_call.1} parent=1 // pred_fallthru
      _
    // Predicated region
    $region82: #{tpu_custom_call.1} parent=1 // pred_check
      _
    $region83: #{tpu_custom_call.1} parent=1 // pred_check_branch
      %161 = sbr.rel (0) target = $region85
    $region84: #{tpu_custom_call.1} parent=1 // pred_region
      %162 = dma.done [#allocation18], 16
    $region85: #{tpu_custom_call.1} parent=1 // pred_fallthru
      _
    %v164 = vld [vmem:[#allocation2] sm:$0xff]
    %v165 = vld [vmem:[#allocation2 + $0x8] sm:$0x1f]
    %v166 = vld [vmem:[#allocation5] sm:$0xff]
    %v167 = vld [vmem:[#allocation5 + $0x8] sm:$0xff]
    %v168 = vld [vmem:[#allocation5 + $0x10] sm:$0xff]
    %v169 = vld [vmem:[#allocation5 + $0x18] sm:$0xff]
    %v170 = vld [vmem:[#allocation5 + $0x20] sm:$0xff]
    %v171 = vld [vmem:[#allocation5 + $0x28] sm:$0xff]
    %v172 = vld [vmem:[#allocation5 + $0x30] sm:$0xff]
    %v173 = vld [vmem:[#allocation5 + $0x38] sm:$0xff]
    %v174 = vld [vmem:[#allocation5 + $0x40] sm:$0xff]
    %v175 = vld [vmem:[#allocation5 + $0x48] sm:$0xff]
    %v176 = vld [vmem:[#allocation5 + $0x50] sm:$0xff]
    %v177 = vld [vmem:[#allocation5 + $0x58] sm:$0xff]
    %v178 = vld [vmem:[#allocation5 + $0x60] sm:$0xff]
    %v179 = vld [vmem:[#allocation5 + $0x68] sm:$0xff]
    %v180 = vld [vmem:[#allocation5 + $0x70] sm:$0xff]
    %v181 = vld [vmem:[#allocation5 + $0x78] sm:$0xff]
    %v182 = vld [vmem:[#allocation5 + $0x80] sm:$0xff]
    %v183 = vld [vmem:[#allocation5 + $0x88] sm:$0xff]
    %v184 = vld [vmem:[#allocation5 + $0x90] sm:$0xff]
    %v185 = vld [vmem:[#allocation5 + $0x98] sm:$0xff]
    %v186 = vld [vmem:[#allocation5 + $0xa0] sm:$0xff]
    %v187 = vld [vmem:[#allocation5 + $0xa8] sm:$0xff]
    %v188 = vld [vmem:[#allocation5 + $0xb0] sm:$0xff]
    %v189 = vld [vmem:[#allocation5 + $0xb8] sm:$0xff]
    %v190 = vld [vmem:[#allocation5 + $0xc0] sm:$0xff]
    %v191 = vld [vmem:[#allocation5 + $0xc8] sm:$0xff]
    %v192 = vld [vmem:[#allocation5 + $0xd0] sm:$0xff]
    %v193 = vld [vmem:[#allocation5 + $0xd8] sm:$0xff]
    %v194 = vld [vmem:[#allocation5 + $0xe0] sm:$0xff]
    %v195 = vld [vmem:[#allocation5 + $0xe8] sm:$0xff]
    %v196 = vld [vmem:[#allocation5 + $0xf0] sm:$0xff]
    %v197 = vld [vmem:[#allocation5 + $0xf8] sm:$0xff]
    %v198 = vld [vmem:[#allocation5 + $0x100] sm:$0xff]
    %v199 = vld [vmem:[#allocation5 + $0x108] sm:$0xff]
    %v200 = vld [vmem:[#allocation5 + $0x110] sm:$0xff]
    %v201 = vld [vmem:[#allocation5 + $0x118] sm:$0xff]
    %v202 = vld [vmem:[#allocation5 + $0x120] sm:$0xff]
    %v203 = vld [vmem:[#allocation5 + $0x128] sm:$0xff]
    %v204 = vld [vmem:[#allocation5 + $0x130] sm:$0xff]
    %v205 = vld [vmem:[#allocation5 + $0x138] sm:$0xff]
    %v206 = vld [vmem:[#allocation5 + $0x140] sm:$0xff]
    %v207 = vld [vmem:[#allocation5 + $0x148] sm:$0xff]
    %v208 = vld [vmem:[#allocation5 + $0x150] sm:$0xff]
    %v209 = vld [vmem:[#allocation5 + $0x158] sm:$0xff]
    %v210 = vld [vmem:[#allocation5 + $0x160] sm:$0xff]
    %v211 = vld [vmem:[#allocation5 + $0x168] sm:$0xff]
    %v212 = vld [vmem:[#allocation5 + $0x170] sm:$0xff]
    %v213 = vld [vmem:[#allocation5 + $0x178] sm:$0xff]
    %v214 = vld [vmem:[#allocation5 + $0x180] sm:$0xff]
    %v215 = vld [vmem:[#allocation5 + $0x188] sm:$0xff]
    %v216 = vld [vmem:[#allocation5 + $0x190] sm:$0xff]
    %v217 = vld [vmem:[#allocation5 + $0x198] sm:$0xff]
    %v218 = vld [vmem:[#allocation5 + $0x1a0] sm:$0xff]
    %v219 = vld [vmem:[#allocation5 + $0x1a8] sm:$0xff]
    %v220 = vld [vmem:[#allocation5 + $0x1b0] sm:$0xff]
    %v221 = vld [vmem:[#allocation5 + $0x1b8] sm:$0xff]
    %v222 = vld [vmem:[#allocation5 + $0x1c0] sm:$0xff]
    %v223 = vld [vmem:[#allocation5 + $0x1c8] sm:$0xff]
    %v224 = vld [vmem:[#allocation5 + $0x1d0] sm:$0xff]
    %v225 = vld [vmem:[#allocation5 + $0x1d8] sm:$0xff]
    %v226 = vld [vmem:[#allocation5 + $0x1e0] sm:$0xff]
    %v227 = vld [vmem:[#allocation5 + $0x1e8] sm:$0xff]
    %v228 = vld [vmem:[#allocation5 + $0x1f0] sm:$0xff]
    %v229 = vld [vmem:[#allocation5 + $0x1f8] sm:$0xff]
    %v230 = vld [vmem:[#allocation5 + $0x200] sm:$0xff]
    %v231 = vld [vmem:[#allocation5 + $0x208] sm:$0xff]
    %v232 = vld [vmem:[#allocation5 + $0x210] sm:$0xff]
    %v233 = vld [vmem:[#allocation5 + $0x218] sm:$0xff]
    %v234 = vld [vmem:[#allocation5 + $0x220] sm:$0xff]
    %v235 = vld [vmem:[#allocation5 + $0x228] sm:$0xff]
    %v236 = vld [vmem:[#allocation5 + $0x230] sm:$0xff]
    %v237 = vld [vmem:[#allocation5 + $0x238] sm:$0xff]
    %v238 = vld [vmem:[#allocation5 + $0x240] sm:$0xff]
    %v239 = vld [vmem:[#allocation5 + $0x248] sm:$0xff]
    %v240 = vld [vmem:[#allocation5 + $0x250] sm:$0xff]
    %v241 = vld [vmem:[#allocation5 + $0x258] sm:$0xff]
    %v242 = vld [vmem:[#allocation5 + $0x260] sm:$0xff]
    %v243 = vld [vmem:[#allocation5 + $0x268] sm:$0xff]
    %v244 = vld [vmem:[#allocation5 + $0x270] sm:$0xff]
    %v245 = vld [vmem:[#allocation5 + $0x278] sm:$0xff]
    %v246 = vld [vmem:[#allocation5 + $0x280] sm:$0xff]
    %v247 = vld [vmem:[#allocation5 + $0x288] sm:$0xff]
    %v248 = vld [vmem:[#allocation5 + $0x290] sm:$0xff]
    %v249 = vld [vmem:[#allocation5 + $0x298] sm:$0xff]
    %v250 = vld [vmem:[#allocation5 + $0x2a0] sm:$0xff]
    %v251 = vld [vmem:[#allocation5 + $0x2a8] sm:$0xff]
    %v252 = vld [vmem:[#allocation5 + $0x2b0] sm:$0xff]
    %v253 = vld [vmem:[#allocation5 + $0x2b8] sm:$0xff]
    %v254 = vld [vmem:[#allocation5 + $0x2c0] sm:$0xff]
    %v255 = vld [vmem:[#allocation5 + $0x2c8] sm:$0xff]
    %v256 = vld [vmem:[#allocation5 + $0x2d0] sm:$0xff]
    %v257 = vld [vmem:[#allocation5 + $0x2d8] sm:$0xff]
    %v258 = vld [vmem:[#allocation5 + $0x2e0] sm:$0xff]
    %v259 = vld [vmem:[#allocation5 + $0x2e8] sm:$0xff]
    %v260 = vld [vmem:[#allocation5 + $0x2f0] sm:$0xff]
    %v261 = vld [vmem:[#allocation5 + $0x2f8] sm:$0xff]
    %v262 = vld [vmem:[#allocation5 + $0x300] sm:$0xff]
    %v263 = vld [vmem:[#allocation5 + $0x308] sm:$0xff]
    %v264 = vld [vmem:[#allocation5 + $0x310] sm:$0xff]
    %v265 = vld [vmem:[#allocation5 + $0x318] sm:$0xff]
    %v266 = vld [vmem:[#allocation5 + $0x320] sm:$0xff]
    %v267 = vld [vmem:[#allocation5 + $0x328] sm:$0xff]
    %v268 = vld [vmem:[#allocation5 + $0x330] sm:$0xff]
    %v269 = vld [vmem:[#allocation5 + $0x338] sm:$0xff]
    %v270 = vld [vmem:[#allocation5 + $0x340] sm:$0xff]
    %v271 = vld [vmem:[#allocation5 + $0x348] sm:$0xff]
    %v272 = vld [vmem:[#allocation5 + $0x350] sm:$0xff]
    %v273 = vld [vmem:[#allocation5 + $0x358] sm:$0xff]
    %v274 = vld [vmem:[#allocation5 + $0x360] sm:$0xff]
    %v275 = vld [vmem:[#allocation5 + $0x368] sm:$0xff]
    %v276 = vld [vmem:[#allocation5 + $0x370] sm:$0xff]
    %v277 = vld [vmem:[#allocation5 + $0x378] sm:$0xff]
    %v278 = vld [vmem:[#allocation5 + $0x380] sm:$0xff]
    %v279 = vld [vmem:[#allocation5 + $0x388] sm:$0xff]
    %v280 = vld [vmem:[#allocation5 + $0x390] sm:$0xff]
    %v281 = vld [vmem:[#allocation5 + $0x398] sm:$0xff]
    %v282 = vld [vmem:[#allocation5 + $0x3a0] sm:$0xff]
    %v283 = vld [vmem:[#allocation5 + $0x3a8] sm:$0xff]
    %v284 = vld [vmem:[#allocation5 + $0x3b0] sm:$0xff]
    %v285 = vld [vmem:[#allocation5 + $0x3b8] sm:$0xff]
    %v286 = vld [vmem:[#allocation5 + $0x3c0] sm:$0xff]
    %v287 = vld [vmem:[#allocation5 + $0x3c8] sm:$0xff]
    %v288 = vld [vmem:[#allocation5 + $0x3d0] sm:$0xff]
    %v289 = vld [vmem:[#allocation5 + $0x3d8] sm:$0xff]
    %v290 = vld [vmem:[#allocation5 + $0x3e0] sm:$0xff]
    %v291 = vld [vmem:[#allocation5 + $0x3e8] sm:$0xff]
    %v292 = vld [vmem:[#allocation5 + $0x3f0] sm:$0xff]
    %v293 = vld [vmem:[#allocation5 + $0x3f8] sm:$0xff]
    %v294 = vld [vmem:[#allocation5 + $0x400] sm:$0xff]
    %v295 = vld [vmem:[#allocation5 + $0x408] sm:$0xff]
    %v296 = vld [vmem:[#allocation5 + $0x410] sm:$0xff]
    %v297 = vld [vmem:[#allocation5 + $0x418] sm:$0xff]
    %v298 = vld [vmem:[#allocation5 + $0x420] sm:$0xff]
    %v299 = vld [vmem:[#allocation5 + $0x428] sm:$0xff]
    %v300 = vld [vmem:[#allocation5 + $0x430] sm:$0xff]
    %v301 = vld [vmem:[#allocation5 + $0x438] sm:$0xff]
    %v302 = vld [vmem:[#allocation5 + $0x440] sm:$0xff]
    %v303 = vld [vmem:[#allocation5 + $0x448] sm:$0xff]
    %v304 = vld [vmem:[#allocation5 + $0x450] sm:$0xff]
    %v305 = vld [vmem:[#allocation5 + $0x458] sm:$0xff]
    %v306 = vld [vmem:[#allocation5 + $0x460] sm:$0xff]
    %v307 = vld [vmem:[#allocation5 + $0x468] sm:$0xff]
    %v308 = vld [vmem:[#allocation5 + $0x470] sm:$0xff]
    %v309 = vld [vmem:[#allocation5 + $0x478] sm:$0xff]
    %v310 = vld [vmem:[#allocation5 + $0x480] sm:$0xff]
    %v311 = vld [vmem:[#allocation5 + $0x488] sm:$0xff]
    %v312 = vld [vmem:[#allocation5 + $0x490] sm:$0xff]
    %v313 = vld [vmem:[#allocation5 + $0x498] sm:$0xff]
    %v314 = vld [vmem:[#allocation5 + $0x4a0] sm:$0xff]
    %v315 = vld [vmem:[#allocation5 + $0x4a8] sm:$0xff]
    %v316 = vld [vmem:[#allocation5 + $0x4b0] sm:$0xff]
    %v317 = vld [vmem:[#allocation5 + $0x4b8] sm:$0xff]
    %v318 = vld [vmem:[#allocation5 + $0x4c0] sm:$0xff]
    %v319 = vld [vmem:[#allocation5 + $0x4c8] sm:$0xff]
    %v320 = vld [vmem:[#allocation5 + $0x4d0] sm:$0xff]
    %v321 = vld [vmem:[#allocation5 + $0x4d8] sm:$0xff]
    %v322 = vld [vmem:[#allocation5 + $0x4e0] sm:$0xff]
    %v323 = vld [vmem:[#allocation5 + $0x4e8] sm:$0xff]
    %v324 = vld [vmem:[#allocation5 + $0x4f0] sm:$0xff]
    %v325 = vld [vmem:[#allocation5 + $0x4f8] sm:$0xff]
    %v326 = vld [vmem:[#allocation5 + $0x500] sm:$0xff]
    %v327 = vld [vmem:[#allocation5 + $0x508] sm:$0xff]
    %v328 = vld [vmem:[#allocation5 + $0x510] sm:$0xff]
    %v329 = vld [vmem:[#allocation5 + $0x518] sm:$0xff]
    %v330 = vld [vmem:[#allocation5 + $0x520] sm:$0xff]
    %v331 = vld [vmem:[#allocation5 + $0x528] sm:$0xff]
    %v332 = vld [vmem:[#allocation5 + $0x530] sm:$0xff]
    %v333 = vld [vmem:[#allocation5 + $0x538] sm:$0xff]
    %v334 = vld [vmem:[#allocation5 + $0x540] sm:$0xff]
    %v335 = vld [vmem:[#allocation5 + $0x548] sm:$0xff]
    %v336 = vld [vmem:[#allocation5 + $0x550] sm:$0xff]
    %v337 = vld [vmem:[#allocation5 + $0x558] sm:$0xff]
    %v338 = vld [vmem:[#allocation5 + $0x560] sm:$0xff]
    %v339 = vld [vmem:[#allocation5 + $0x568] sm:$0xff]
    %v340 = vld [vmem:[#allocation5 + $0x570] sm:$0xff]
    %v341 = vld [vmem:[#allocation5 + $0x578] sm:$0xff]
    %v342 = vld [vmem:[#allocation5 + $0x580] sm:$0xff]
    %v343 = vld [vmem:[#allocation5 + $0x588] sm:$0xff]
    %v344 = vld [vmem:[#allocation5 + $0x590] sm:$0xff]
    %v345 = vld [vmem:[#allocation5 + $0x598] sm:$0xff]
    %v346 = vld [vmem:[#allocation5 + $0x5a0] sm:$0xff]
    %v347 = vld [vmem:[#allocation5 + $0x5a8] sm:$0xff]
    %v348 = vld [vmem:[#allocation5 + $0x5b0] sm:$0xff]
    %v349 = vld [vmem:[#allocation5 + $0x5b8] sm:$0xff]
    %v350 = vld [vmem:[#allocation5 + $0x5c0] sm:$0xff]
    %v351 = vld [vmem:[#allocation5 + $0x5c8] sm:$0xff]
    %v352 = vld [vmem:[#allocation5 + $0x5d0] sm:$0xff]
    %v353 = vld [vmem:[#allocation5 + $0x5d8] sm:$0xff]
    %v354 = vld [vmem:[#allocation5 + $0x5e0] sm:$0xff]
    %v355 = vld [vmem:[#allocation5 + $0x5e8] sm:$0xff]
    %v356 = vld [vmem:[#allocation5 + $0x5f0] sm:$0xff]
    %v357 = vld [vmem:[#allocation5 + $0x5f8] sm:$0xff]
    %v358 = vld [vmem:[#allocation5 + $0x600] sm:$0xff]
    %v359 = vld [vmem:[#allocation5 + $0x608] sm:$0xff]
    %v360 = vld [vmem:[#allocation5 + $0x610] sm:$0xff]
    %v361 = vld [vmem:[#allocation5 + $0x618] sm:$0xff]
    %v362 = vld [vmem:[#allocation5 + $0x620] sm:$0xff]
    %v363 = vld [vmem:[#allocation5 + $0x628] sm:$0xff]
    %v364 = vld [vmem:[#allocation5 + $0x630] sm:$0xff]
    %v365 = vld [vmem:[#allocation5 + $0x638] sm:$0xff]
    %v366 = vld [vmem:[#allocation5 + $0x640] sm:$0xff]
    %v367 = vld [vmem:[#allocation5 + $0x648] sm:$0xff]
    %v368 = vld [vmem:[#allocation5 + $0x650] sm:$0xff]
    %v369 = vld [vmem:[#allocation5 + $0x658] sm:$0xff]
    %v370 = vld [vmem:[#allocation5 + $0x660] sm:$0xff]
    %v371 = vld [vmem:[#allocation5 + $0x668] sm:$0xff]
    %v372 = vld [vmem:[#allocation5 + $0x670] sm:$0xff]
    %v373 = vld [vmem:[#allocation5 + $0x678] sm:$0xff]
    %v374 = vld [vmem:[#allocation5 + $0x680] sm:$0xff]
    %v375 = vld [vmem:[#allocation5 + $0x688] sm:$0xff]
    %v376 = vld [vmem:[#allocation5 + $0x690] sm:$0xff]
    %v377 = vld [vmem:[#allocation5 + $0x698] sm:$0xff]
    %v378 = vld [vmem:[#allocation5 + $0x6a0] sm:$0xff]
    %v379 = vld [vmem:[#allocation5 + $0x6a8] sm:$0xff]
    %v380 = vld [vmem:[#allocation5 + $0x6b0] sm:$0xff]
    %v381 = vld [vmem:[#allocation5 + $0x6b8] sm:$0xff]
    %v382 = vld [vmem:[#allocation5 + $0x6c0] sm:$0xff]
    %v383 = vld [vmem:[#allocation5 + $0x6c8] sm:$0xff]
    %v384 = vld [vmem:[#allocation5 + $0x6d0] sm:$0xff]
    %v385 = vld [vmem:[#allocation5 + $0x6d8] sm:$0xff]
    %v386 = vld [vmem:[#allocation5 + $0x6e0] sm:$0xff]
    %v387 = vld [vmem:[#allocation5 + $0x6e8] sm:$0xff]
    %v388 = vld [vmem:[#allocation5 + $0x6f0] sm:$0xff]
    %v389 = vld [vmem:[#allocation5 + $0x6f8] sm:$0xff]
    %v390 = vld [vmem:[#allocation5 + $0x700] sm:$0xff]
    %v391 = vld [vmem:[#allocation5 + $0x708] sm:$0xff]
    %v392 = vld [vmem:[#allocation5 + $0x710] sm:$0xff]
    %v393 = vld [vmem:[#allocation5 + $0x718] sm:$0xff]
    %v394 = vld [vmem:[#allocation5 + $0x720] sm:$0xff]
    %v395 = vld [vmem:[#allocation5 + $0x728] sm:$0xff]
    %v396 = vld [vmem:[#allocation5 + $0x730] sm:$0xff]
    %v397 = vld [vmem:[#allocation5 + $0x738] sm:$0xff]
    %v398 = vld [vmem:[#allocation5 + $0x740] sm:$0xff]
    %v399 = vld [vmem:[#allocation5 + $0x748] sm:$0xff]
    %v400 = vld [vmem:[#allocation5 + $0x750] sm:$0xff]
    %v401 = vld [vmem:[#allocation5 + $0x758] sm:$0xff]
    %v402 = vld [vmem:[#allocation5 + $0x760] sm:$0xff]
    %v403 = vld [vmem:[#allocation5 + $0x768] sm:$0xff]
    %v404 = vld [vmem:[#allocation5 + $0x770] sm:$0xff]
    %v405 = vld [vmem:[#allocation5 + $0x778] sm:$0xff]
    %v406 = vld [vmem:[#allocation5 + $0x780] sm:$0xff]
    %v407 = vld [vmem:[#allocation5 + $0x788] sm:$0xff]
    %v408 = vld [vmem:[#allocation5 + $0x790] sm:$0xff]
    %v409 = vld [vmem:[#allocation5 + $0x798] sm:$0xff]
    %v410 = vld [vmem:[#allocation5 + $0x7a0] sm:$0xff]
    %v411 = vld [vmem:[#allocation5 + $0x7a8] sm:$0xff]
    %v412 = vld [vmem:[#allocation5 + $0x7b0] sm:$0xff]
    %v413 = vld [vmem:[#allocation5 + $0x7b8] sm:$0xff]
    %v414 = vld [vmem:[#allocation5 + $0x7c0] sm:$0xff]
    %v415 = vld [vmem:[#allocation5 + $0x7c8] sm:$0xff]
    %v416 = vld [vmem:[#allocation5 + $0x7d0] sm:$0xff]
    %v417 = vld [vmem:[#allocation5 + $0x7d8] sm:$0xff]
    %v418 = vld [vmem:[#allocation5 + $0x7e0] sm:$0xff]
    %v419 = vld [vmem:[#allocation5 + $0x7e8] sm:$0xff]
    %v420 = vld [vmem:[#allocation5 + $0x7f0] sm:$0xff]
    %v421 = vld [vmem:[#allocation5 + $0x7f8] sm:$0xff]
    %v422 = vld [vmem:[#allocation5 + $0x800] sm:$0xff]
    %v423 = vld [vmem:[#allocation5 + $0x808] sm:$0xff]
    %v424 = vld [vmem:[#allocation5 + $0x810] sm:$0xff]
    %v425 = vld [vmem:[#allocation5 + $0x818] sm:$0xff]
    %v426 = vld [vmem:[#allocation5 + $0x820] sm:$0xff]
    %v427 = vld [vmem:[#allocation5 + $0x828] sm:$0xff]
    %v428 = vld [vmem:[#allocation5 + $0x830] sm:$0xff]
    %v429 = vld [vmem:[#allocation5 + $0x838] sm:$0xff]
    %v430 = vld [vmem:[#allocation5 + $0x840] sm:$0xff]
    %v431 = vld [vmem:[#allocation5 + $0x848] sm:$0xff]
    %v432 = vld [vmem:[#allocation5 + $0x850] sm:$0xff]
    %v433 = vld [vmem:[#allocation5 + $0x858] sm:$0xff]
    %v434 = vld [vmem:[#allocation5 + $0x860] sm:$0xff]
    %v435 = vld [vmem:[#allocation5 + $0x868] sm:$0xff]
    %v436 = vld [vmem:[#allocation5 + $0x870] sm:$0xff]
    %v437 = vld [vmem:[#allocation5 + $0x878] sm:$0xff]
    %v438 = vld [vmem:[#allocation5 + $0x880] sm:$0xff]
    %v439 = vld [vmem:[#allocation5 + $0x888] sm:$0xff]
    %v440 = vld [vmem:[#allocation5 + $0x890] sm:$0xff]
    %v441 = vld [vmem:[#allocation5 + $0x898] sm:$0xff]
    %v442 = vld [vmem:[#allocation5 + $0x8a0] sm:$0xff]
    %v443 = vld [vmem:[#allocation5 + $0x8a8] sm:$0xff]
    %v444 = vld [vmem:[#allocation5 + $0x8b0] sm:$0xff]
    %v445 = vld [vmem:[#allocation5 + $0x8b8] sm:$0xff]
    %v446 = vld [vmem:[#allocation5 + $0x8c0] sm:$0xff]
    %v447 = vld [vmem:[#allocation5 + $0x8c8] sm:$0xff]
    %v448 = vld [vmem:[#allocation5 + $0x8d0] sm:$0xff]
    %v449 = vld [vmem:[#allocation5 + $0x8d8] sm:$0xff]
    %v450 = vld [vmem:[#allocation5 + $0x8e0] sm:$0xff]
    %v451 = vld [vmem:[#allocation5 + $0x8e8] sm:$0xff]
    %v452 = vld [vmem:[#allocation5 + $0x8f0] sm:$0xff]
    %v453 = vld [vmem:[#allocation5 + $0x8f8] sm:$0xff]
    %v454 = vld [vmem:[#allocation5 + $0x900] sm:$0xff]
    %v455 = vld [vmem:[#allocation5 + $0x908] sm:$0xff]
    %v456 = vld [vmem:[#allocation5 + $0x910] sm:$0xff]
    %v457 = vld [vmem:[#allocation5 + $0x918] sm:$0xff]
    %v458 = vld [vmem:[#allocation5 + $0x920] sm:$0xff]
    %v459 = vld [vmem:[#allocation5 + $0x928] sm:$0xff]
    %v460 = vld [vmem:[#allocation5 + $0x930] sm:$0xff]
    %v461 = vld [vmem:[#allocation5 + $0x938] sm:$0xff]
    %v462 = vld [vmem:[#allocation5 + $0x940] sm:$0xff]
    %v463 = vld [vmem:[#allocation5 + $0x948] sm:$0xff]
    %v464 = vld [vmem:[#allocation5 + $0x950] sm:$0xff]
    %v465 = vld [vmem:[#allocation5 + $0x958] sm:$0xff]
    %v466 = vld [vmem:[#allocation5 + $0x960] sm:$0xff]
    %v467 = vld [vmem:[#allocation5 + $0x968] sm:$0xff]
    %v468 = vld [vmem:[#allocation5 + $0x970] sm:$0xff]
    %v469 = vld [vmem:[#allocation5 + $0x978] sm:$0xff]
    %v470 = vld [vmem:[#allocation5 + $0x980] sm:$0xff]
    %v471 = vld [vmem:[#allocation5 + $0x988] sm:$0xff]
    %v472 = vld [vmem:[#allocation5 + $0x990] sm:$0xff]
    %v473 = vld [vmem:[#allocation5 + $0x998] sm:$0xff]
    %v474 = vld [vmem:[#allocation5 + $0x9a0] sm:$0xff]
    %v475 = vld [vmem:[#allocation5 + $0x9a8] sm:$0xff]
    %v476 = vld [vmem:[#allocation5 + $0x9b0] sm:$0xff]
    %v477 = vld [vmem:[#allocation5 + $0x9b8] sm:$0xff]
    %v478 = vld [vmem:[#allocation5 + $0x9c0] sm:$0xff]
    %v479 = vld [vmem:[#allocation5 + $0x9c8] sm:$0xff]
    %v480 = vld [vmem:[#allocation5 + $0x9d0] sm:$0xff]
    %v481 = vld [vmem:[#allocation5 + $0x9d8] sm:$0xff]
    %v482 = vld [vmem:[#allocation5 + $0x9e0] sm:$0xff]
    %v483 = vld [vmem:[#allocation5 + $0x9e8] sm:$0xff]
    %v484 = vld [vmem:[#allocation5 + $0x9f0] sm:$0xff]
    %v485 = vld [vmem:[#allocation5 + $0x9f8] sm:$0xff]
    %v486 = vld [vmem:[#allocation5 + $0xa00] sm:$0xff]
    %v487 = vld [vmem:[#allocation5 + $0xa08] sm:$0xff]
    %v488 = vld [vmem:[#allocation5 + $0xa10] sm:$0xff]
    %v489 = vld [vmem:[#allocation5 + $0xa18] sm:$0xff]
    %v490 = vld [vmem:[#allocation5 + $0xa20] sm:$0xff]
    %v491 = vld [vmem:[#allocation5 + $0xa28] sm:$0xff]
    %v492 = vld [vmem:[#allocation5 + $0xa30] sm:$0xff]
    %v493 = vld [vmem:[#allocation5 + $0xa38] sm:$0xff]
    %v494 = vld [vmem:[#allocation5 + $0xa40] sm:$0xff]
    %v495 = vld [vmem:[#allocation5 + $0xa48] sm:$0xff]
    %v496 = vld [vmem:[#allocation5 + $0xa50] sm:$0xff]
    %v497 = vld [vmem:[#allocation5 + $0xa58] sm:$0xff]
    %v498 = vld [vmem:[#allocation5 + $0xa60] sm:$0xff]
    %v499 = vld [vmem:[#allocation5 + $0xa68] sm:$0xff]
    %v500 = vld [vmem:[#allocation5 + $0xa70] sm:$0xff]
    %v501 = vld [vmem:[#allocation5 + $0xa78] sm:$0xff]
    %v502 = vld [vmem:[#allocation5 + $0xa80] sm:$0xff]
    %v503 = vld [vmem:[#allocation5 + $0xa88] sm:$0xff]
    %v504 = vld [vmem:[#allocation5 + $0xa90] sm:$0xff]
    %v505 = vld [vmem:[#allocation5 + $0xa98] sm:$0xff]
    %v506 = vld [vmem:[#allocation5 + $0xaa0] sm:$0xff]
    %v507 = vld [vmem:[#allocation5 + $0xaa8] sm:$0xff]
    %v508 = vld [vmem:[#allocation5 + $0xab0] sm:$0xff]
    %v509 = vld [vmem:[#allocation5 + $0xab8] sm:$0xff]
    %v510 = vld [vmem:[#allocation5 + $0xac0] sm:$0xff]
    %v511 = vld [vmem:[#allocation5 + $0xac8] sm:$0xff]
    %v512 = vld [vmem:[#allocation5 + $0xad0] sm:$0xff]
    %v513 = vld [vmem:[#allocation5 + $0xad8] sm:$0xff]
    %v514 = vld [vmem:[#allocation5 + $0xae0] sm:$0xff]
    %v515 = vld [vmem:[#allocation5 + $0xae8] sm:$0xff]
    %v516 = vld [vmem:[#allocation5 + $0xaf0] sm:$0xff]
    %v517 = vld [vmem:[#allocation5 + $0xaf8] sm:$0xff]
    %v518 = vld [vmem:[#allocation5 + $0xb00] sm:$0xff]
    %v519 = vld [vmem:[#allocation5 + $0xb08] sm:$0xff]
    %v520 = vld [vmem:[#allocation5 + $0xb10] sm:$0xff]
    %v521 = vld [vmem:[#allocation5 + $0xb18] sm:$0xff]
    %v522 = vld [vmem:[#allocation5 + $0xb20] sm:$0xff]
    %v523 = vld [vmem:[#allocation5 + $0xb28] sm:$0xff]
    %v524 = vld [vmem:[#allocation5 + $0xb30] sm:$0xff]
    %v525 = vld [vmem:[#allocation5 + $0xb38] sm:$0xff]
    %v526 = vld [vmem:[#allocation5 + $0xb40] sm:$0xff]
    %v527 = vld [vmem:[#allocation5 + $0xb48] sm:$0xff]
    %v528 = vld [vmem:[#allocation5 + $0xb50] sm:$0xff]
    %v529 = vld [vmem:[#allocation5 + $0xb58] sm:$0xff]
    %v530 = vld [vmem:[#allocation5 + $0xb60] sm:$0xff]
    %v531 = vld [vmem:[#allocation5 + $0xb68] sm:$0xff]
    %v532 = vld [vmem:[#allocation5 + $0xb70] sm:$0xff]
    %v533 = vld [vmem:[#allocation5 + $0xb78] sm:$0xff]
    %v534 = vld [vmem:[#allocation5 + $0xb80] sm:$0xff]
    %v535 = vld [vmem:[#allocation5 + $0xb88] sm:$0xff]
    %v536 = vld [vmem:[#allocation5 + $0xb90] sm:$0xff]
    %v537 = vld [vmem:[#allocation5 + $0xb98] sm:$0xff]
    %v538 = vld [vmem:[#allocation5 + $0xba0] sm:$0xff]
    %v539 = vld [vmem:[#allocation5 + $0xba8] sm:$0xff]
    %v540 = vld [vmem:[#allocation5 + $0xbb0] sm:$0xff]
    %v541 = vld [vmem:[#allocation5 + $0xbb8] sm:$0xff]
    %v542 = vld [vmem:[#allocation5 + $0xbc0] sm:$0xff]
    %v543 = vld [vmem:[#allocation5 + $0xbc8] sm:$0xff]
    %v544 = vld [vmem:[#allocation5 + $0xbd0] sm:$0xff]
    %v545 = vld [vmem:[#allocation5 + $0xbd8] sm:$0xff]
    %v546 = vld [vmem:[#allocation5 + $0xbe0] sm:$0xff]
    %v547 = vld [vmem:[#allocation5 + $0xbe8] sm:$0xff]
    %v548 = vld [vmem:[#allocation5 + $0xbf0] sm:$0xff]
    %v549 = vld [vmem:[#allocation5 + $0xbf8] sm:$0xff]
    %v550 = vld [vmem:[#allocation5 + $0xc00] sm:$0xff]
    %v551 = vld [vmem:[#allocation5 + $0xc08] sm:$0xff]
    %v552 = vld [vmem:[#allocation5 + $0xc10] sm:$0xff]
    %v553 = vld [vmem:[#allocation5 + $0xc18] sm:$0xff]
    %v554 = vld [vmem:[#allocation5 + $0xc20] sm:$0xff]
    %v555 = vld [vmem:[#allocation5 + $0xc28] sm:$0xff]
    %v556 = vld [vmem:[#allocation5 + $0xc30] sm:$0xff]
    %v557 = vld [vmem:[#allocation5 + $0xc38] sm:$0xff]
    %v558 = vld [vmem:[#allocation5 + $0xc40] sm:$0xff]
    %v559 = vld [vmem:[#allocation5 + $0xc48] sm:$0xff]
    %v560 = vld [vmem:[#allocation5 + $0xc50] sm:$0xff]
    %v561 = vld [vmem:[#allocation5 + $0xc58] sm:$0xff]
    %v562 = vld [vmem:[#allocation5 + $0xc60] sm:$0xff]
    %v563 = vld [vmem:[#allocation5 + $0xc68] sm:$0xff]
    %v564 = vld [vmem:[#allocation5 + $0xc70] sm:$0xff]
    %v565 = vld [vmem:[#allocation5 + $0xc78] sm:$0xff]
    %v566 = vld [vmem:[#allocation7] sm:$0xf]
    %v568 = vlaneseq
    %v569 = vshrl.u32 %v568, 7
    %v570 = vsub.s32 0, %v569
    %v571 = vrot.slane %v566, %v570
    %v572 = vlaneseq
    %v573 = vshrl.u32 %v572, 7
    %v574 = vsub.s32 1, %v573
    %v575 = vrot.slane %v566, %v574
    %v576 = vlaneseq
    %v577 = vshrl.u32 %v576, 7
    %v578 = vsub.s32 2, %v577
    %v579 = vrot.slane %v566, %v578
    %v580 = vlaneseq
    %v581 = vshrl.u32 %v580, 7
    %v582 = vsub.s32 3, %v581
    %v583 = vrot.slane %v566, %v582
    %v590 = vcombine.high %v164, %v164
    %v592 = vunpack.c.l.s4 1966171168
    %v593 = vunpack.c.0.s8 %v592
    %v594 = vlaneseq
    %v595 = vshrl.u32 %v594, 7
    %v596 = vsub.s32 %v593, %v595
    %v597 = vrot.slane %v164, %v596
    %v599 = vunpack.c.l.s4 1966171168
    %v600 = vunpack.c.0.s8 %v599
    %v601 = vlaneseq
    %v602 = vshrl.u32 %v601, 7
    %v603 = vsub.s32 %v600, %v602
    %v604 = vrot.slane %v590, %v603
    %v605 = vcombine.high %v597, %v597
    %v606 = vcombine.high %v604, %v604
    %v608 = vunpack.c.l.s4 1966171168
    %v609 = vunpack.c.0.s8 %v608
    %v610 = vlaneseq
    %v611 = vshrl.u32 %v610, 7
    %v612 = vsub.s32 %v609, %v611
    %v613 = vrot.slane %v597, %v612
    %v615 = vunpack.c.l.s4 1966171168
    %v616 = vunpack.c.0.s8 %v615
    %v617 = vlaneseq
    %v618 = vshrl.u32 %v617, 7
    %v619 = vsub.s32 %v616, %v618
    %v620 = vrot.slane %v604, %v619
    %v622 = vunpack.c.l.s4 1966171168
    %v623 = vunpack.c.0.s8 %v622
    %v624 = vlaneseq
    %v625 = vshrl.u32 %v624, 7
    %v626 = vsub.s32 %v623, %v625
    %v627 = vrot.slane %v605, %v626
    %v629 = vunpack.c.l.s4 1966171168
    %v630 = vunpack.c.0.s8 %v629
    %v631 = vlaneseq
    %v632 = vshrl.u32 %v631, 7
    %v633 = vsub.s32 %v630, %v632
    %v634 = vrot.slane %v606, %v633
    %v635 = vcombine.high %v613, %v613
    %v636 = vcombine.high %v620, %v620
    %v637 = vcombine.high %v627, %v627
    %v638 = vcombine.high %v634, %v634
    %v639 = vcombine.high %v165, %v165
    %v641 = vunpack.c.l.s4 1966171168
    %v642 = vunpack.c.0.s8 %v641
    %v643 = vlaneseq
    %v644 = vshrl.u32 %v643, 7
    %v645 = vsub.s32 %v642, %v644
    %v646 = vrot.slane %v165, %v645
    %v648 = vunpack.c.l.s4 1966171168
    %v649 = vunpack.c.0.s8 %v648
    %v650 = vlaneseq
    %v651 = vshrl.u32 %v650, 7
    %v652 = vsub.s32 %v649, %v651
    %v653 = vrot.slane %v639, %v652
    %v654 = vcombine.high %v646, %v646
    %v656 = vunpack.c.l.s4 1966171168
    %v657 = vunpack.c.0.s8 %v656
    %v658 = vlaneseq
    %v659 = vshrl.u32 %v658, 7
    %v660 = vsub.s32 %v657, %v659
    %v661 = vrot.slane %v646, %v660
    %v663 = vunpack.c.l.s4 1966171168
    %v664 = vunpack.c.0.s8 %v663
    %v665 = vlaneseq
    %v666 = vshrl.u32 %v665, 7
    %v667 = vsub.s32 %v664, %v666
    %v668 = vrot.slane %v653, %v667
    %v670 = vunpack.c.l.s4 1966171168
    %v671 = vunpack.c.0.s8 %v670
    %v672 = vlaneseq
    %v673 = vshrl.u32 %v672, 7
    %v674 = vsub.s32 %v671, %v673
    %v675 = vrot.slane %v654, %v674
    %v676 = vcombine.high %v661, %v661
    %v677 = vcombine.high %v675, %v675
    %v1090 = vunpack.c.l.b16 %v166
    %v1091 = vunpack.c.h.b16 %v166
    %v1092 = vunpack.c.l.b16 %v167
    %v1093 = vunpack.c.h.b16 %v167
    %v1094 = vunpack.c.l.b16 %v168
    %v1095 = vunpack.c.h.b16 %v168
    %v1096 = vunpack.c.l.b16 %v169
    %v1097 = vunpack.c.h.b16 %v169
    %v1098 = vunpack.c.l.b16 %v170
    %v1099 = vunpack.c.h.b16 %v170
    %v1100 = vunpack.c.l.b16 %v171
    %v1101 = vunpack.c.h.b16 %v171
    %v1102 = vunpack.c.l.b16 %v172
    %v1103 = vunpack.c.h.b16 %v172
    %v1104 = vunpack.c.l.b16 %v173
    %v1105 = vunpack.c.h.b16 %v173
    %v1106 = vunpack.c.l.b16 %v174
    %v1107 = vunpack.c.h.b16 %v174
    %v1108 = vunpack.c.l.b16 %v175
    %v1109 = vunpack.c.h.b16 %v175
    %v1110 = vunpack.c.l.b16 %v176
    %v1111 = vunpack.c.h.b16 %v176
    %v1112 = vunpack.c.l.b16 %v177
    %v1113 = vunpack.c.h.b16 %v177
    %v1114 = vunpack.c.l.b16 %v178
    %v1115 = vunpack.c.h.b16 %v178
    %v1116 = vunpack.c.l.b16 %v179
    %v1117 = vunpack.c.h.b16 %v179
    %v1118 = vunpack.c.l.b16 %v180
    %v1119 = vunpack.c.h.b16 %v180
    %v1120 = vunpack.c.l.b16 %v181
    %v1121 = vunpack.c.h.b16 %v181
    %v1122 = vunpack.c.l.b16 %v182
    %v1123 = vunpack.c.h.b16 %v182
    %v1124 = vunpack.c.l.b16 %v183
    %v1125 = vunpack.c.h.b16 %v183
    %v1126 = vunpack.c.l.b16 %v184
    %v1127 = vunpack.c.h.b16 %v184
    %v1128 = vunpack.c.l.b16 %v185
    %v1129 = vunpack.c.h.b16 %v185
    %v1130 = vunpack.c.l.b16 %v186
    %v1131 = vunpack.c.h.b16 %v186
    %v1132 = vunpack.c.l.b16 %v187
    %v1133 = vunpack.c.h.b16 %v187
    %v1134 = vunpack.c.l.b16 %v188
    %v1135 = vunpack.c.h.b16 %v188
    %v1136 = vunpack.c.l.b16 %v189
    %v1137 = vunpack.c.h.b16 %v189
    %v1138 = vunpack.c.l.b16 %v190
    %v1139 = vunpack.c.h.b16 %v190
    %v1140 = vunpack.c.l.b16 %v191
    %v1141 = vunpack.c.h.b16 %v191
    %v1142 = vunpack.c.l.b16 %v192
    %v1143 = vunpack.c.h.b16 %v192
    %v1144 = vunpack.c.l.b16 %v193
    %v1145 = vunpack.c.h.b16 %v193
    %v1146 = vunpack.c.l.b16 %v194
    %v1147 = vunpack.c.h.b16 %v194
    %v1148 = vunpack.c.l.b16 %v195
    %v1149 = vunpack.c.h.b16 %v195
    %v1150 = vunpack.c.l.b16 %v196
    %v1151 = vunpack.c.h.b16 %v196
    %v1152 = vunpack.c.l.b16 %v197
    %v1153 = vunpack.c.h.b16 %v197
    %v1154 = vunpack.c.l.b16 %v198
    %v1155 = vunpack.c.h.b16 %v198
    %v1156 = vunpack.c.l.b16 %v199
    %v1157 = vunpack.c.h.b16 %v199
    %v1158 = vunpack.c.l.b16 %v200
    %v1159 = vunpack.c.h.b16 %v200
    %v1160 = vunpack.c.l.b16 %v201
    %v1161 = vunpack.c.h.b16 %v201
    %v1162 = vunpack.c.l.b16 %v202
    %v1163 = vunpack.c.h.b16 %v202
    %v1164 = vunpack.c.l.b16 %v203
    %v1165 = vunpack.c.h.b16 %v203
    %v1166 = vunpack.c.l.b16 %v204
    %v1167 = vunpack.c.h.b16 %v204
    %v1168 = vunpack.c.l.b16 %v205
    %v1169 = vunpack.c.h.b16 %v205
    %v1170 = vunpack.c.l.b16 %v206
    %v1171 = vunpack.c.h.b16 %v206
    %v1172 = vunpack.c.l.b16 %v207
    %v1173 = vunpack.c.h.b16 %v207
    %v1174 = vunpack.c.l.b16 %v208
    %v1175 = vunpack.c.h.b16 %v208
    %v1176 = vunpack.c.l.b16 %v209
    %v1177 = vunpack.c.h.b16 %v209
    %v1178 = vunpack.c.l.b16 %v210
    %v1179 = vunpack.c.h.b16 %v210
    %v1180 = vunpack.c.l.b16 %v211
    %v1181 = vunpack.c.h.b16 %v211
    %v1182 = vunpack.c.l.b16 %v212
    %v1183 = vunpack.c.h.b16 %v212
    %v1184 = vunpack.c.l.b16 %v213
    %v1185 = vunpack.c.h.b16 %v213
    %v1186 = vunpack.c.l.b16 %v214
    %v1187 = vunpack.c.h.b16 %v214
    %v1188 = vunpack.c.l.b16 %v215
    %v1189 = vunpack.c.h.b16 %v215
    %v1190 = vunpack.c.l.b16 %v216
    %v1191 = vunpack.c.h.b16 %v216
    %v1192 = vunpack.c.l.b16 %v217
    %v1193 = vunpack.c.h.b16 %v217
    %v1194 = vunpack.c.l.b16 %v218
    %v1195 = vunpack.c.h.b16 %v218
    %v1196 = vunpack.c.l.b16 %v219
    %v1197 = vunpack.c.h.b16 %v219
    %v1198 = vunpack.c.l.b16 %v220
    %v1199 = vunpack.c.h.b16 %v220
    %v1200 = vunpack.c.l.b16 %v221
    %v1201 = vunpack.c.h.b16 %v221
    %v1202 = vunpack.c.l.b16 %v222
    %v1203 = vunpack.c.h.b16 %v222
    %v1204 = vunpack.c.l.b16 %v223
    %v1205 = vunpack.c.h.b16 %v223
    %v1206 = vunpack.c.l.b16 %v224
    %v1207 = vunpack.c.h.b16 %v224
    %v1208 = vunpack.c.l.b16 %v225
    %v1209 = vunpack.c.h.b16 %v225
    %v1210 = vunpack.c.l.b16 %v226
    %v1211 = vunpack.c.h.b16 %v226
    %v1212 = vunpack.c.l.b16 %v227
    %v1213 = vunpack.c.h.b16 %v227
    %v1214 = vunpack.c.l.b16 %v228
    %v1215 = vunpack.c.h.b16 %v228
    %v1216 = vunpack.c.l.b16 %v229
    %v1217 = vunpack.c.h.b16 %v229
    %v1218 = vunpack.c.l.b16 %v230
    %v1219 = vunpack.c.h.b16 %v230
    %v1220 = vunpack.c.l.b16 %v231
    %v1221 = vunpack.c.h.b16 %v231
    %v1222 = vunpack.c.l.b16 %v232
    %v1223 = vunpack.c.h.b16 %v232
    %v1224 = vunpack.c.l.b16 %v233
    %v1225 = vunpack.c.h.b16 %v233
    %v1226 = vunpack.c.l.b16 %v234
    %v1227 = vunpack.c.h.b16 %v234
    %v1228 = vunpack.c.l.b16 %v235
    %v1229 = vunpack.c.h.b16 %v235
    %v1230 = vunpack.c.l.b16 %v236
    %v1231 = vunpack.c.h.b16 %v236
    %v1232 = vunpack.c.l.b16 %v237
    %v1233 = vunpack.c.h.b16 %v237
    %v1234 = vunpack.c.l.b16 %v238
    %v1235 = vunpack.c.h.b16 %v238
    %v1236 = vunpack.c.l.b16 %v239
    %v1237 = vunpack.c.h.b16 %v239
    %v1238 = vunpack.c.l.b16 %v240
    %v1239 = vunpack.c.h.b16 %v240
    %v1240 = vunpack.c.l.b16 %v241
    %v1241 = vunpack.c.h.b16 %v241
    %v1242 = vunpack.c.l.b16 %v242
    %v1243 = vunpack.c.h.b16 %v242
    %v1244 = vunpack.c.l.b16 %v243
    %v1245 = vunpack.c.h.b16 %v243
    %v1246 = vunpack.c.l.b16 %v244
    %v1247 = vunpack.c.h.b16 %v244
    %v1248 = vunpack.c.l.b16 %v245
    %v1249 = vunpack.c.h.b16 %v245
    %v1250 = vunpack.c.l.b16 %v246
    %v1251 = vunpack.c.h.b16 %v246
    %v1252 = vunpack.c.l.b16 %v247
    %v1253 = vunpack.c.h.b16 %v247
    %v1254 = vunpack.c.l.b16 %v248
    %v1255 = vunpack.c.h.b16 %v248
    %v1256 = vunpack.c.l.b16 %v249
    %v1257 = vunpack.c.h.b16 %v249
    %v1258 = vunpack.c.l.b16 %v250
    %v1259 = vunpack.c.h.b16 %v250
    %v1260 = vunpack.c.l.b16 %v251
    %v1261 = vunpack.c.h.b16 %v251
    %v1262 = vunpack.c.l.b16 %v252
    %v1263 = vunpack.c.h.b16 %v252
    %v1264 = vunpack.c.l.b16 %v253
    %v1265 = vunpack.c.h.b16 %v253
    %v1266 = vunpack.c.l.b16 %v254
    %v1267 = vunpack.c.h.b16 %v254
    %v1268 = vunpack.c.l.b16 %v255
    %v1269 = vunpack.c.h.b16 %v255
    %v1270 = vunpack.c.l.b16 %v256
    %v1271 = vunpack.c.h.b16 %v256
    %v1272 = vunpack.c.l.b16 %v257
    %v1273 = vunpack.c.h.b16 %v257
    %v1274 = vunpack.c.l.b16 %v258
    %v1275 = vunpack.c.h.b16 %v258
    %v1276 = vunpack.c.l.b16 %v259
    %v1277 = vunpack.c.h.b16 %v259
    %v1278 = vunpack.c.l.b16 %v260
    %v1279 = vunpack.c.h.b16 %v260
    %v1280 = vunpack.c.l.b16 %v261
    %v1281 = vunpack.c.h.b16 %v261
    %v1282 = vunpack.c.l.b16 %v262
    %v1283 = vunpack.c.h.b16 %v262
    %v1284 = vunpack.c.l.b16 %v263
    %v1285 = vunpack.c.h.b16 %v263
    %v1286 = vunpack.c.l.b16 %v264
    %v1287 = vunpack.c.h.b16 %v264
    %v1288 = vunpack.c.l.b16 %v265
    %v1289 = vunpack.c.h.b16 %v265
    %v1290 = vunpack.c.l.b16 %v266
    %v1291 = vunpack.c.h.b16 %v266
    %v1292 = vunpack.c.l.b16 %v267
    %v1293 = vunpack.c.h.b16 %v267
    %v1294 = vunpack.c.l.b16 %v268
    %v1295 = vunpack.c.h.b16 %v268
    %v1296 = vunpack.c.l.b16 %v269
    %v1297 = vunpack.c.h.b16 %v269
    %v1298 = vunpack.c.l.b16 %v270
    %v1299 = vunpack.c.h.b16 %v270
    %v1300 = vunpack.c.l.b16 %v271
    %v1301 = vunpack.c.h.b16 %v271
    %v1302 = vunpack.c.l.b16 %v272
    %v1303 = vunpack.c.h.b16 %v272
    %v1304 = vunpack.c.l.b16 %v273
    %v1305 = vunpack.c.h.b16 %v273
    %v1306 = vunpack.c.l.b16 %v274
    %v1307 = vunpack.c.h.b16 %v274
    %v1308 = vunpack.c.l.b16 %v275
    %v1309 = vunpack.c.h.b16 %v275
    %v1310 = vunpack.c.l.b16 %v276
    %v1311 = vunpack.c.h.b16 %v276
    %v1312 = vunpack.c.l.b16 %v277
    %v1313 = vunpack.c.h.b16 %v277
    %v1314 = vunpack.c.l.b16 %v278
    %v1315 = vunpack.c.h.b16 %v278
    %v1316 = vunpack.c.l.b16 %v279
    %v1317 = vunpack.c.h.b16 %v279
    %v1318 = vunpack.c.l.b16 %v280
    %v1319 = vunpack.c.h.b16 %v280
    %v1320 = vunpack.c.l.b16 %v281
    %v1321 = vunpack.c.h.b16 %v281
    %v1322 = vunpack.c.l.b16 %v282
    %v1323 = vunpack.c.h.b16 %v282
    %v1324 = vunpack.c.l.b16 %v283
    %v1325 = vunpack.c.h.b16 %v283
    %v1326 = vunpack.c.l.b16 %v284
    %v1327 = vunpack.c.h.b16 %v284
    %v1328 = vunpack.c.l.b16 %v285
    %v1329 = vunpack.c.h.b16 %v285
    %v1330 = vunpack.c.l.b16 %v286
    %v1331 = vunpack.c.h.b16 %v286
    %v1332 = vunpack.c.l.b16 %v287
    %v1333 = vunpack.c.h.b16 %v287
    %v1334 = vunpack.c.l.b16 %v288
    %v1335 = vunpack.c.h.b16 %v288
    %v1336 = vunpack.c.l.b16 %v289
    %v1337 = vunpack.c.h.b16 %v289
    %v1338 = vunpack.c.l.b16 %v290
    %v1339 = vunpack.c.h.b16 %v290
    %v1340 = vunpack.c.l.b16 %v291
    %v1341 = vunpack.c.h.b16 %v291
    %v1342 = vunpack.c.l.b16 %v292
    %v1343 = vunpack.c.h.b16 %v292
    %v1344 = vunpack.c.l.b16 %v293
    %v1345 = vunpack.c.h.b16 %v293
    %v1346 = vunpack.c.l.b16 %v294
    %v1347 = vunpack.c.h.b16 %v294
    %v1348 = vunpack.c.l.b16 %v295
    %v1349 = vunpack.c.h.b16 %v295
    %v1350 = vunpack.c.l.b16 %v296
    %v1351 = vunpack.c.h.b16 %v296
    %v1352 = vunpack.c.l.b16 %v297
    %v1353 = vunpack.c.h.b16 %v297
    %v1354 = vunpack.c.l.b16 %v298
    %v1355 = vunpack.c.h.b16 %v298
    %v1356 = vunpack.c.l.b16 %v299
    %v1357 = vunpack.c.h.b16 %v299
    %v1358 = vunpack.c.l.b16 %v300
    %v1359 = vunpack.c.h.b16 %v300
    %v1360 = vunpack.c.l.b16 %v301
    %v1361 = vunpack.c.h.b16 %v301
    %v1362 = vunpack.c.l.b16 %v302
    %v1363 = vunpack.c.h.b16 %v302
    %v1364 = vunpack.c.l.b16 %v303
    %v1365 = vunpack.c.h.b16 %v303
    %v1366 = vunpack.c.l.b16 %v304
    %v1367 = vunpack.c.h.b16 %v304
    %v1368 = vunpack.c.l.b16 %v305
    %v1369 = vunpack.c.h.b16 %v305
    %v1370 = vunpack.c.l.b16 %v306
    %v1371 = vunpack.c.h.b16 %v306
    %v1372 = vunpack.c.l.b16 %v307
    %v1373 = vunpack.c.h.b16 %v307
    %v1374 = vunpack.c.l.b16 %v308
    %v1375 = vunpack.c.h.b16 %v308
    %v1376 = vunpack.c.l.b16 %v309
    %v1377 = vunpack.c.h.b16 %v309
    %v1378 = vunpack.c.l.b16 %v310
    %v1379 = vunpack.c.h.b16 %v310
    %v1380 = vunpack.c.l.b16 %v311
    %v1381 = vunpack.c.h.b16 %v311
    %v1382 = vunpack.c.l.b16 %v312
    %v1383 = vunpack.c.h.b16 %v312
    %v1384 = vunpack.c.l.b16 %v313
    %v1385 = vunpack.c.h.b16 %v313
    %v1386 = vunpack.c.l.b16 %v314
    %v1387 = vunpack.c.h.b16 %v314
    %v1388 = vunpack.c.l.b16 %v315
    %v1389 = vunpack.c.h.b16 %v315
    %v1390 = vunpack.c.l.b16 %v316
    %v1391 = vunpack.c.h.b16 %v316
    %v1392 = vunpack.c.l.b16 %v317
    %v1393 = vunpack.c.h.b16 %v317
    %v1394 = vunpack.c.l.b16 %v318
    %v1395 = vunpack.c.h.b16 %v318
    %v1396 = vunpack.c.l.b16 %v319
    %v1397 = vunpack.c.h.b16 %v319
    %v1398 = vunpack.c.l.b16 %v320
    %v1399 = vunpack.c.h.b16 %v320
    %v1400 = vunpack.c.l.b16 %v321
    %v1401 = vunpack.c.h.b16 %v321
    %v1402 = vunpack.c.l.b16 %v322
    %v1403 = vunpack.c.h.b16 %v322
    %v1404 = vunpack.c.l.b16 %v323
    %v1405 = vunpack.c.h.b16 %v323
    %v1406 = vunpack.c.l.b16 %v324
    %v1407 = vunpack.c.h.b16 %v324
    %v1408 = vunpack.c.l.b16 %v325
    %v1409 = vunpack.c.h.b16 %v325
    %v1410 = vunpack.c.l.b16 %v326
    %v1411 = vunpack.c.h.b16 %v326
    %v1412 = vunpack.c.l.b16 %v327
    %v1413 = vunpack.c.h.b16 %v327
    %v1414 = vunpack.c.l.b16 %v328
    %v1415 = vunpack.c.h.b16 %v328
    %v1416 = vunpack.c.l.b16 %v329
    %v1417 = vunpack.c.h.b16 %v329
    %v1418 = vunpack.c.l.b16 %v330
    %v1419 = vunpack.c.h.b16 %v330
    %v1420 = vunpack.c.l.b16 %v331
    %v1421 = vunpack.c.h.b16 %v331
    %v1422 = vunpack.c.l.b16 %v332
    %v1423 = vunpack.c.h.b16 %v332
    %v1424 = vunpack.c.l.b16 %v333
    %v1425 = vunpack.c.h.b16 %v333
    %v1426 = vunpack.c.l.b16 %v334
    %v1427 = vunpack.c.h.b16 %v334
    %v1428 = vunpack.c.l.b16 %v335
    %v1429 = vunpack.c.h.b16 %v335
    %v1430 = vunpack.c.l.b16 %v336
    %v1431 = vunpack.c.h.b16 %v336
    %v1432 = vunpack.c.l.b16 %v337
    %v1433 = vunpack.c.h.b16 %v337
    %v1434 = vunpack.c.l.b16 %v338
    %v1435 = vunpack.c.h.b16 %v338
    %v1436 = vunpack.c.l.b16 %v339
    %v1437 = vunpack.c.h.b16 %v339
    %v1438 = vunpack.c.l.b16 %v340
    %v1439 = vunpack.c.h.b16 %v340
    %v1440 = vunpack.c.l.b16 %v341
    %v1441 = vunpack.c.h.b16 %v341
    %v1442 = vunpack.c.l.b16 %v342
    %v1443 = vunpack.c.h.b16 %v342
    %v1444 = vunpack.c.l.b16 %v343
    %v1445 = vunpack.c.h.b16 %v343
    %v1446 = vunpack.c.l.b16 %v344
    %v1447 = vunpack.c.h.b16 %v344
    %v1448 = vunpack.c.l.b16 %v345
    %v1449 = vunpack.c.h.b16 %v345
    %v1450 = vunpack.c.l.b16 %v346
    %v1451 = vunpack.c.h.b16 %v346
    %v1452 = vunpack.c.l.b16 %v347
    %v1453 = vunpack.c.h.b16 %v347
    %v1454 = vunpack.c.l.b16 %v348
    %v1455 = vunpack.c.h.b16 %v348
    %v1456 = vunpack.c.l.b16 %v349
    %v1457 = vunpack.c.h.b16 %v349
    %v1458 = vunpack.c.l.b16 %v350
    %v1459 = vunpack.c.h.b16 %v350
    %v1460 = vunpack.c.l.b16 %v351
    %v1461 = vunpack.c.h.b16 %v351
    %v1462 = vunpack.c.l.b16 %v352
    %v1463 = vunpack.c.h.b16 %v352
    %v1464 = vunpack.c.l.b16 %v353
    %v1465 = vunpack.c.h.b16 %v353
    %v1466 = vunpack.c.l.b16 %v354
    %v1467 = vunpack.c.h.b16 %v354
    %v1468 = vunpack.c.l.b16 %v355
    %v1469 = vunpack.c.h.b16 %v355
    %v1470 = vunpack.c.l.b16 %v356
    %v1471 = vunpack.c.h.b16 %v356
    %v1472 = vunpack.c.l.b16 %v357
    %v1473 = vunpack.c.h.b16 %v357
    %v1474 = vunpack.c.l.b16 %v358
    %v1475 = vunpack.c.h.b16 %v358
    %v1476 = vunpack.c.l.b16 %v359
    %v1477 = vunpack.c.h.b16 %v359
    %v1478 = vunpack.c.l.b16 %v360
    %v1479 = vunpack.c.h.b16 %v360
    %v1480 = vunpack.c.l.b16 %v361
    %v1481 = vunpack.c.h.b16 %v361
    %v1482 = vunpack.c.l.b16 %v362
    %v1483 = vunpack.c.h.b16 %v362
    %v1484 = vunpack.c.l.b16 %v363
    %v1485 = vunpack.c.h.b16 %v363
    %v1486 = vunpack.c.l.b16 %v364
    %v1487 = vunpack.c.h.b16 %v364
    %v1488 = vunpack.c.l.b16 %v365
    %v1489 = vunpack.c.h.b16 %v365
    %v1490 = vunpack.c.l.b16 %v366
    %v1491 = vunpack.c.h.b16 %v366
    %v1492 = vunpack.c.l.b16 %v367
    %v1493 = vunpack.c.h.b16 %v367
    %v1494 = vunpack.c.l.b16 %v368
    %v1495 = vunpack.c.h.b16 %v368
    %v1496 = vunpack.c.l.b16 %v369
    %v1497 = vunpack.c.h.b16 %v369
    %v1498 = vunpack.c.l.b16 %v370
    %v1499 = vunpack.c.h.b16 %v370
    %v1500 = vunpack.c.l.b16 %v371
    %v1501 = vunpack.c.h.b16 %v371
    %v1502 = vunpack.c.l.b16 %v372
    %v1503 = vunpack.c.h.b16 %v372
    %v1504 = vunpack.c.l.b16 %v373
    %v1505 = vunpack.c.h.b16 %v373
    %v1506 = vunpack.c.l.b16 %v374
    %v1507 = vunpack.c.h.b16 %v374
    %v1508 = vunpack.c.l.b16 %v375
    %v1509 = vunpack.c.h.b16 %v375
    %v1510 = vunpack.c.l.b16 %v376
    %v1511 = vunpack.c.h.b16 %v376
    %v1512 = vunpack.c.l.b16 %v377
    %v1513 = vunpack.c.h.b16 %v377
    %v1514 = vunpack.c.l.b16 %v378
    %v1515 = vunpack.c.h.b16 %v378
    %v1516 = vunpack.c.l.b16 %v379
    %v1517 = vunpack.c.h.b16 %v379
    %v1518 = vunpack.c.l.b16 %v380
    %v1519 = vunpack.c.h.b16 %v380
    %v1520 = vunpack.c.l.b16 %v381
    %v1521 = vunpack.c.h.b16 %v381
    %v1522 = vunpack.c.l.b16 %v382
    %v1523 = vunpack.c.h.b16 %v382
    %v1524 = vunpack.c.l.b16 %v383
    %v1525 = vunpack.c.h.b16 %v383
    %v1526 = vunpack.c.l.b16 %v384
    %v1527 = vunpack.c.h.b16 %v384
    %v1528 = vunpack.c.l.b16 %v385
    %v1529 = vunpack.c.h.b16 %v385
    %v1530 = vunpack.c.l.b16 %v386
    %v1531 = vunpack.c.h.b16 %v386
    %v1532 = vunpack.c.l.b16 %v387
    %v1533 = vunpack.c.h.b16 %v387
    %v1534 = vunpack.c.l.b16 %v388
    %v1535 = vunpack.c.h.b16 %v388
    %v1536 = vunpack.c.l.b16 %v389
    %v1537 = vunpack.c.h.b16 %v389
    %v1538 = vunpack.c.l.b16 %v390
    %v1539 = vunpack.c.h.b16 %v390
    %v1540 = vunpack.c.l.b16 %v391
    %v1541 = vunpack.c.h.b16 %v391
    %v1542 = vunpack.c.l.b16 %v392
    %v1543 = vunpack.c.h.b16 %v392
    %v1544 = vunpack.c.l.b16 %v393
    %v1545 = vunpack.c.h.b16 %v393
    %v1546 = vunpack.c.l.b16 %v394
    %v1547 = vunpack.c.h.b16 %v394
    %v1548 = vunpack.c.l.b16 %v395
    %v1549 = vunpack.c.h.b16 %v395
    %v1550 = vunpack.c.l.b16 %v396
    %v1551 = vunpack.c.h.b16 %v396
    %v1552 = vunpack.c.l.b16 %v397
    %v1553 = vunpack.c.h.b16 %v397
    %v1554 = vunpack.c.l.b16 %v398
    %v1555 = vunpack.c.h.b16 %v398
    %v1556 = vunpack.c.l.b16 %v399
    %v1557 = vunpack.c.h.b16 %v399
    %v1558 = vunpack.c.l.b16 %v400
    %v1559 = vunpack.c.h.b16 %v400
    %v1560 = vunpack.c.l.b16 %v401
    %v1561 = vunpack.c.h.b16 %v401
    %v1562 = vunpack.c.l.b16 %v402
    %v1563 = vunpack.c.h.b16 %v402
    %v1564 = vunpack.c.l.b16 %v403
    %v1565 = vunpack.c.h.b16 %v403
    %v1566 = vunpack.c.l.b16 %v404
    %v1567 = vunpack.c.h.b16 %v404
    %v1568 = vunpack.c.l.b16 %v405
    %v1569 = vunpack.c.h.b16 %v405
    %v1570 = vunpack.c.l.b16 %v406
    %v1571 = vunpack.c.h.b16 %v406
    %v1572 = vunpack.c.l.b16 %v407
    %v1573 = vunpack.c.h.b16 %v407
    %v1574 = vunpack.c.l.b16 %v408
    %v1575 = vunpack.c.h.b16 %v408
    %v1576 = vunpack.c.l.b16 %v409
    %v1577 = vunpack.c.h.b16 %v409
    %v1578 = vunpack.c.l.b16 %v410
    %v1579 = vunpack.c.h.b16 %v410
    %v1580 = vunpack.c.l.b16 %v411
    %v1581 = vunpack.c.h.b16 %v411
    %v1582 = vunpack.c.l.b16 %v412
    %v1583 = vunpack.c.h.b16 %v412
    %v1584 = vunpack.c.l.b16 %v413
    %v1585 = vunpack.c.h.b16 %v413
    %v1586 = vunpack.c.l.b16 %v414
    %v1587 = vunpack.c.h.b16 %v414
    %v1588 = vunpack.c.l.b16 %v415
    %v1589 = vunpack.c.h.b16 %v415
    %v1590 = vunpack.c.l.b16 %v416
    %v1591 = vunpack.c.h.b16 %v416
    %v1592 = vunpack.c.l.b16 %v417
    %v1593 = vunpack.c.h.b16 %v417
    %v1594 = vunpack.c.l.b16 %v418
    %v1595 = vunpack.c.h.b16 %v418
    %v1596 = vunpack.c.l.b16 %v419
    %v1597 = vunpack.c.h.b16 %v419
    %v1598 = vunpack.c.l.b16 %v420
    %v1599 = vunpack.c.h.b16 %v420
    %v1600 = vunpack.c.l.b16 %v421
    %v1601 = vunpack.c.h.b16 %v421
    %v1602 = vunpack.c.l.b16 %v422
    %v1603 = vunpack.c.h.b16 %v422
    %v1604 = vunpack.c.l.b16 %v423
    %v1605 = vunpack.c.h.b16 %v423
    %v1606 = vunpack.c.l.b16 %v424
    %v1607 = vunpack.c.h.b16 %v424
    %v1608 = vunpack.c.l.b16 %v425
    %v1609 = vunpack.c.h.b16 %v425
    %v1610 = vunpack.c.l.b16 %v426
    %v1611 = vunpack.c.h.b16 %v426
    %v1612 = vunpack.c.l.b16 %v427
    %v1613 = vunpack.c.h.b16 %v427
    %v1614 = vunpack.c.l.b16 %v428
    %v1615 = vunpack.c.h.b16 %v428
    %v1616 = vunpack.c.l.b16 %v429
    %v1617 = vunpack.c.h.b16 %v429
    %v1618 = vunpack.c.l.b16 %v430
    %v1619 = vunpack.c.h.b16 %v430
    %v1620 = vunpack.c.l.b16 %v431
    %v1621 = vunpack.c.h.b16 %v431
    %v1622 = vunpack.c.l.b16 %v432
    %v1623 = vunpack.c.h.b16 %v432
    %v1624 = vunpack.c.l.b16 %v433
    %v1625 = vunpack.c.h.b16 %v433
    %v1626 = vunpack.c.l.b16 %v434
    %v1627 = vunpack.c.h.b16 %v434
    %v1628 = vunpack.c.l.b16 %v435
    %v1629 = vunpack.c.h.b16 %v435
    %v1630 = vunpack.c.l.b16 %v436
    %v1631 = vunpack.c.h.b16 %v436
    %v1632 = vunpack.c.l.b16 %v437
    %v1633 = vunpack.c.h.b16 %v437
    %v1634 = vunpack.c.l.b16 %v438
    %v1635 = vunpack.c.h.b16 %v438
    %v1636 = vunpack.c.l.b16 %v439
    %v1637 = vunpack.c.h.b16 %v439
    %v1638 = vunpack.c.l.b16 %v440
    %v1639 = vunpack.c.h.b16 %v440
    %v1640 = vunpack.c.l.b16 %v441
    %v1641 = vunpack.c.h.b16 %v441
    %v1642 = vunpack.c.l.b16 %v442
    %v1643 = vunpack.c.h.b16 %v442
    %v1644 = vunpack.c.l.b16 %v443
    %v1645 = vunpack.c.h.b16 %v443
    %v1646 = vunpack.c.l.b16 %v444
    %v1647 = vunpack.c.h.b16 %v444
    %v1648 = vunpack.c.l.b16 %v445
    %v1649 = vunpack.c.h.b16 %v445
    %v1650 = vunpack.c.l.b16 %v446
    %v1651 = vunpack.c.h.b16 %v446
    %v1652 = vunpack.c.l.b16 %v447
    %v1653 = vunpack.c.h.b16 %v447
    %v1654 = vunpack.c.l.b16 %v448
    %v1655 = vunpack.c.h.b16 %v448
    %v1656 = vunpack.c.l.b16 %v449
    %v1657 = vunpack.c.h.b16 %v449
    %v1658 = vunpack.c.l.b16 %v450
    %v1659 = vunpack.c.h.b16 %v450
    %v1660 = vunpack.c.l.b16 %v451
    %v1661 = vunpack.c.h.b16 %v451
    %v1662 = vunpack.c.l.b16 %v452
    %v1663 = vunpack.c.h.b16 %v452
    %v1664 = vunpack.c.l.b16 %v453
    %v1665 = vunpack.c.h.b16 %v453
    %v1666 = vunpack.c.l.b16 %v454
    %v1667 = vunpack.c.h.b16 %v454
    %v1668 = vunpack.c.l.b16 %v455
    %v1669 = vunpack.c.h.b16 %v455
    %v1670 = vunpack.c.l.b16 %v456
    %v1671 = vunpack.c.h.b16 %v456
    %v1672 = vunpack.c.l.b16 %v457
    %v1673 = vunpack.c.h.b16 %v457
    %v1674 = vunpack.c.l.b16 %v458
    %v1675 = vunpack.c.h.b16 %v458
    %v1676 = vunpack.c.l.b16 %v459
    %v1677 = vunpack.c.h.b16 %v459
    %v1678 = vunpack.c.l.b16 %v460
    %v1679 = vunpack.c.h.b16 %v460
    %v1680 = vunpack.c.l.b16 %v461
    %v1681 = vunpack.c.h.b16 %v461
    %v1682 = vunpack.c.l.b16 %v462
    %v1683 = vunpack.c.h.b16 %v462
    %v1684 = vunpack.c.l.b16 %v463
    %v1685 = vunpack.c.h.b16 %v463
    %v1686 = vunpack.c.l.b16 %v464
    %v1687 = vunpack.c.h.b16 %v464
    %v1688 = vunpack.c.l.b16 %v465
    %v1689 = vunpack.c.h.b16 %v465
    %v1690 = vunpack.c.l.b16 %v466
    %v1691 = vunpack.c.h.b16 %v466
    %v1692 = vunpack.c.l.b16 %v467
    %v1693 = vunpack.c.h.b16 %v467
    %v1694 = vunpack.c.l.b16 %v468
    %v1695 = vunpack.c.h.b16 %v468
    %v1696 = vunpack.c.l.b16 %v469
    %v1697 = vunpack.c.h.b16 %v469
    %v1698 = vunpack.c.l.b16 %v470
    %v1699 = vunpack.c.h.b16 %v470
    %v1700 = vunpack.c.l.b16 %v471
    %v1701 = vunpack.c.h.b16 %v471
    %v1702 = vunpack.c.l.b16 %v472
    %v1703 = vunpack.c.h.b16 %v472
    %v1704 = vunpack.c.l.b16 %v473
    %v1705 = vunpack.c.h.b16 %v473
    %v1706 = vunpack.c.l.b16 %v474
    %v1707 = vunpack.c.h.b16 %v474
    %v1708 = vunpack.c.l.b16 %v475
    %v1709 = vunpack.c.h.b16 %v475
    %v1710 = vunpack.c.l.b16 %v476
    %v1711 = vunpack.c.h.b16 %v476
    %v1712 = vunpack.c.l.b16 %v477
    %v1713 = vunpack.c.h.b16 %v477
    %v1714 = vunpack.c.l.b16 %v478
    %v1715 = vunpack.c.h.b16 %v478
    %v1716 = vunpack.c.l.b16 %v479
    %v1717 = vunpack.c.h.b16 %v479
    %v1718 = vunpack.c.l.b16 %v480
    %v1719 = vunpack.c.h.b16 %v480
    %v1720 = vunpack.c.l.b16 %v481
    %v1721 = vunpack.c.h.b16 %v481
    %v1722 = vunpack.c.l.b16 %v482
    %v1723 = vunpack.c.h.b16 %v482
    %v1724 = vunpack.c.l.b16 %v483
    %v1725 = vunpack.c.h.b16 %v483
    %v1726 = vunpack.c.l.b16 %v484
    %v1727 = vunpack.c.h.b16 %v484
    %v1728 = vunpack.c.l.b16 %v485
    %v1729 = vunpack.c.h.b16 %v485
    %v1730 = vunpack.c.l.b16 %v486
    %v1731 = vunpack.c.h.b16 %v486
    %v1732 = vunpack.c.l.b16 %v487
    %v1733 = vunpack.c.h.b16 %v487
    %v1734 = vunpack.c.l.b16 %v488
    %v1735 = vunpack.c.h.b16 %v488
    %v1736 = vunpack.c.l.b16 %v489
    %v1737 = vunpack.c.h.b16 %v489
    %v1738 = vunpack.c.l.b16 %v490
    %v1739 = vunpack.c.h.b16 %v490
    %v1740 = vunpack.c.l.b16 %v491
    %v1741 = vunpack.c.h.b16 %v491
    %v1742 = vunpack.c.l.b16 %v492
    %v1743 = vunpack.c.h.b16 %v492
    %v1744 = vunpack.c.l.b16 %v493
    %v1745 = vunpack.c.h.b16 %v493
    %v1746 = vunpack.c.l.b16 %v494
    %v1747 = vunpack.c.h.b16 %v494
    %v1748 = vunpack.c.l.b16 %v495
    %v1749 = vunpack.c.h.b16 %v495
    %v1750 = vunpack.c.l.b16 %v496
    %v1751 = vunpack.c.h.b16 %v496
    %v1752 = vunpack.c.l.b16 %v497
    %v1753 = vunpack.c.h.b16 %v497
    %v1754 = vunpack.c.l.b16 %v498
    %v1755 = vunpack.c.h.b16 %v498
    %v1756 = vunpack.c.l.b16 %v499
    %v1757 = vunpack.c.h.b16 %v499
    %v1758 = vunpack.c.l.b16 %v500
    %v1759 = vunpack.c.h.b16 %v500
    %v1760 = vunpack.c.l.b16 %v501
    %v1761 = vunpack.c.h.b16 %v501
    %v1762 = vunpack.c.l.b16 %v502
    %v1763 = vunpack.c.h.b16 %v502
    %v1764 = vunpack.c.l.b16 %v503
    %v1765 = vunpack.c.h.b16 %v503
    %v1766 = vunpack.c.l.b16 %v504
    %v1767 = vunpack.c.h.b16 %v504
    %v1768 = vunpack.c.l.b16 %v505
    %v1769 = vunpack.c.h.b16 %v505
    %v1770 = vunpack.c.l.b16 %v506
    %v1771 = vunpack.c.h.b16 %v506
    %v1772 = vunpack.c.l.b16 %v507
    %v1773 = vunpack.c.h.b16 %v507
    %v1774 = vunpack.c.l.b16 %v508
    %v1775 = vunpack.c.h.b16 %v508
    %v1776 = vunpack.c.l.b16 %v509
    %v1777 = vunpack.c.h.b16 %v509
    %v1778 = vunpack.c.l.b16 %v510
    %v1779 = vunpack.c.h.b16 %v510
    %v1780 = vunpack.c.l.b16 %v511
    %v1781 = vunpack.c.h.b16 %v511
    %v1782 = vunpack.c.l.b16 %v512
    %v1783 = vunpack.c.h.b16 %v512
    %v1784 = vunpack.c.l.b16 %v513
    %v1785 = vunpack.c.h.b16 %v513
    %v1786 = vunpack.c.l.b16 %v514
    %v1787 = vunpack.c.h.b16 %v514
    %v1788 = vunpack.c.l.b16 %v515
    %v1789 = vunpack.c.h.b16 %v515
    %v1790 = vunpack.c.l.b16 %v516
    %v1791 = vunpack.c.h.b16 %v516
    %v1792 = vunpack.c.l.b16 %v517
    %v1793 = vunpack.c.h.b16 %v517
    %v1794 = vunpack.c.l.b16 %v518
    %v1795 = vunpack.c.h.b16 %v518
    %v1796 = vunpack.c.l.b16 %v519
    %v1797 = vunpack.c.h.b16 %v519
    %v1798 = vunpack.c.l.b16 %v520
    %v1799 = vunpack.c.h.b16 %v520
    %v1800 = vunpack.c.l.b16 %v521
    %v1801 = vunpack.c.h.b16 %v521
    %v1802 = vunpack.c.l.b16 %v522
    %v1803 = vunpack.c.h.b16 %v522
    %v1804 = vunpack.c.l.b16 %v523
    %v1805 = vunpack.c.h.b16 %v523
    %v1806 = vunpack.c.l.b16 %v524
    %v1807 = vunpack.c.h.b16 %v524
    %v1808 = vunpack.c.l.b16 %v525
    %v1809 = vunpack.c.h.b16 %v525
    %v1810 = vunpack.c.l.b16 %v526
    %v1811 = vunpack.c.h.b16 %v526
    %v1812 = vunpack.c.l.b16 %v527
    %v1813 = vunpack.c.h.b16 %v527
    %v1814 = vunpack.c.l.b16 %v528
    %v1815 = vunpack.c.h.b16 %v528
    %v1816 = vunpack.c.l.b16 %v529
    %v1817 = vunpack.c.h.b16 %v529
    %v1818 = vunpack.c.l.b16 %v530
    %v1819 = vunpack.c.h.b16 %v530
    %v1820 = vunpack.c.l.b16 %v531
    %v1821 = vunpack.c.h.b16 %v531
    %v1822 = vunpack.c.l.b16 %v532
    %v1823 = vunpack.c.h.b16 %v532
    %v1824 = vunpack.c.l.b16 %v533
    %v1825 = vunpack.c.h.b16 %v533
    %v1826 = vunpack.c.l.b16 %v534
    %v1827 = vunpack.c.h.b16 %v534
    %v1828 = vunpack.c.l.b16 %v535
    %v1829 = vunpack.c.h.b16 %v535
    %v1830 = vunpack.c.l.b16 %v536
    %v1831 = vunpack.c.h.b16 %v536
    %v1832 = vunpack.c.l.b16 %v537
    %v1833 = vunpack.c.h.b16 %v537
    %v1834 = vunpack.c.l.b16 %v538
    %v1835 = vunpack.c.h.b16 %v538
    %v1836 = vunpack.c.l.b16 %v539
    %v1837 = vunpack.c.h.b16 %v539
    %v1838 = vunpack.c.l.b16 %v540
    %v1839 = vunpack.c.h.b16 %v540
    %v1840 = vunpack.c.l.b16 %v541
    %v1841 = vunpack.c.h.b16 %v541
    %v1842 = vunpack.c.l.b16 %v542
    %v1843 = vunpack.c.h.b16 %v542
    %v1844 = vunpack.c.l.b16 %v543
    %v1845 = vunpack.c.h.b16 %v543
    %v1846 = vunpack.c.l.b16 %v544
    %v1847 = vunpack.c.h.b16 %v544
    %v1848 = vunpack.c.l.b16 %v545
    %v1849 = vunpack.c.h.b16 %v545
    %v1850 = vunpack.c.l.b16 %v546
    %v1851 = vunpack.c.h.b16 %v546
    %v1852 = vunpack.c.l.b16 %v547
    %v1853 = vunpack.c.h.b16 %v547
    %v1854 = vunpack.c.l.b16 %v548
    %v1855 = vunpack.c.h.b16 %v548
    %v1856 = vunpack.c.l.b16 %v549
    %v1857 = vunpack.c.h.b16 %v549
    %v1858 = vunpack.c.l.b16 %v550
    %v1859 = vunpack.c.h.b16 %v550
    %v1860 = vunpack.c.l.b16 %v551
    %v1861 = vunpack.c.h.b16 %v551
    %v1862 = vunpack.c.l.b16 %v552
    %v1863 = vunpack.c.h.b16 %v552
    %v1864 = vunpack.c.l.b16 %v553
    %v1865 = vunpack.c.h.b16 %v553
    %v1866 = vunpack.c.l.b16 %v554
    %v1867 = vunpack.c.h.b16 %v554
    %v1868 = vunpack.c.l.b16 %v555
    %v1869 = vunpack.c.h.b16 %v555
    %v1870 = vunpack.c.l.b16 %v556
    %v1871 = vunpack.c.h.b16 %v556
    %v1872 = vunpack.c.l.b16 %v557
    %v1873 = vunpack.c.h.b16 %v557
    %v1874 = vunpack.c.l.b16 %v558
    %v1875 = vunpack.c.h.b16 %v558
    %v1876 = vunpack.c.l.b16 %v559
    %v1877 = vunpack.c.h.b16 %v559
    %v1878 = vunpack.c.l.b16 %v560
    %v1879 = vunpack.c.h.b16 %v560
    %v1880 = vunpack.c.l.b16 %v561
    %v1881 = vunpack.c.h.b16 %v561
    %v1882 = vunpack.c.l.b16 %v562
    %v1883 = vunpack.c.h.b16 %v562
    %v1884 = vunpack.c.l.b16 %v563
    %v1885 = vunpack.c.h.b16 %v563
    %v1886 = vunpack.c.l.b16 %v564
    %v1887 = vunpack.c.h.b16 %v564
    %v1888 = vunpack.c.l.b16 %v565
    %v1889 = vunpack.c.h.b16 %v565
    %v1890 = vpack.c.b16 %v1094, %v1090
    %v1891 = vpack.c.b16 %v1095, %v1091
    %v1892 = vpack.c.b16 %v1096, %v1092
    %v1893 = vpack.c.b16 %v1097, %v1093
    %v1894 = vpack.c.b16 %v1102, %v1098
    %v1895 = vpack.c.b16 %v1103, %v1099
    %v1896 = vpack.c.b16 %v1104, %v1100
    %v1897 = vpack.c.b16 %v1105, %v1101
    %v1898 = vpack.c.b16 %v1110, %v1106
    %v1899 = vpack.c.b16 %v1111, %v1107
    %v1900 = vpack.c.b16 %v1112, %v1108
    %v1901 = vpack.c.b16 %v1113, %v1109
    %v1902 = vpack.c.b16 %v1118, %v1114
    %v1903 = vpack.c.b16 %v1119, %v1115
    %v1904 = vpack.c.b16 %v1120, %v1116
    %v1905 = vpack.c.b16 %v1121, %v1117
    %v1906 = vpack.c.b16 %v1126, %v1122
    %v1907 = vpack.c.b16 %v1127, %v1123
    %v1908 = vpack.c.b16 %v1128, %v1124
    %v1909 = vpack.c.b16 %v1129, %v1125
    %v1910 = vpack.c.b16 %v1134, %v1130
    %v1911 = vpack.c.b16 %v1135, %v1131
    %v1912 = vpack.c.b16 %v1136, %v1132
    %v1913 = vpack.c.b16 %v1137, %v1133
    %v1914 = vpack.c.b16 %v1142, %v1138
    %v1915 = vpack.c.b16 %v1143, %v1139
    %v1916 = vpack.c.b16 %v1144, %v1140
    %v1917 = vpack.c.b16 %v1145, %v1141
    %v1918 = vpack.c.b16 %v1150, %v1146
    %v1919 = vpack.c.b16 %v1151, %v1147
    %v1920 = vpack.c.b16 %v1152, %v1148
    %v1921 = vpack.c.b16 %v1153, %v1149
    %v1922 = vpack.c.b16 %v1158, %v1154
    %v1923 = vpack.c.b16 %v1159, %v1155
    %v1924 = vpack.c.b16 %v1160, %v1156
    %v1925 = vpack.c.b16 %v1161, %v1157
    %v1926 = vpack.c.b16 %v1166, %v1162
    %v1927 = vpack.c.b16 %v1167, %v1163
    %v1928 = vpack.c.b16 %v1168, %v1164
    %v1929 = vpack.c.b16 %v1169, %v1165
    %v1930 = vpack.c.b16 %v1174, %v1170
    %v1931 = vpack.c.b16 %v1175, %v1171
    %v1932 = vpack.c.b16 %v1176, %v1172
    %v1933 = vpack.c.b16 %v1177, %v1173
    %v1934 = vpack.c.b16 %v1182, %v1178
    %v1935 = vpack.c.b16 %v1183, %v1179
    %v1936 = vpack.c.b16 %v1184, %v1180
    %v1937 = vpack.c.b16 %v1185, %v1181
    %v1938 = vpack.c.b16 %v1190, %v1186
    %v1939 = vpack.c.b16 %v1191, %v1187
    %v1940 = vpack.c.b16 %v1192, %v1188
    %v1941 = vpack.c.b16 %v1193, %v1189
    %v1942 = vpack.c.b16 %v1198, %v1194
    %v1943 = vpack.c.b16 %v1199, %v1195
    %v1944 = vpack.c.b16 %v1200, %v1196
    %v1945 = vpack.c.b16 %v1201, %v1197
    %v1946 = vpack.c.b16 %v1206, %v1202
    %v1947 = vpack.c.b16 %v1207, %v1203
    %v1948 = vpack.c.b16 %v1208, %v1204
    %v1949 = vpack.c.b16 %v1209, %v1205
    %v1950 = vpack.c.b16 %v1214, %v1210
    %v1951 = vpack.c.b16 %v1215, %v1211
    %v1952 = vpack.c.b16 %v1216, %v1212
    %v1953 = vpack.c.b16 %v1217, %v1213
    %v1954 = vpack.c.b16 %v1222, %v1218
    %v1955 = vpack.c.b16 %v1223, %v1219
    %v1956 = vpack.c.b16 %v1224, %v1220
    %v1957 = vpack.c.b16 %v1225, %v1221
    %v1958 = vpack.c.b16 %v1230, %v1226
    %v1959 = vpack.c.b16 %v1231, %v1227
    %v1960 = vpack.c.b16 %v1232, %v1228
    %v1961 = vpack.c.b16 %v1233, %v1229
    %v1962 = vpack.c.b16 %v1238, %v1234
    %v1963 = vpack.c.b16 %v1239, %v1235
    %v1964 = vpack.c.b16 %v1240, %v1236
    %v1965 = vpack.c.b16 %v1241, %v1237
    %v1966 = vpack.c.b16 %v1246, %v1242
    %v1967 = vpack.c.b16 %v1247, %v1243
    %v1968 = vpack.c.b16 %v1248, %v1244
    %v1969 = vpack.c.b16 %v1249, %v1245
    %v1970 = vpack.c.b16 %v1254, %v1250
    %v1971 = vpack.c.b16 %v1255, %v1251
    %v1972 = vpack.c.b16 %v1256, %v1252
    %v1973 = vpack.c.b16 %v1257, %v1253
    %v1974 = vpack.c.b16 %v1262, %v1258
    %v1975 = vpack.c.b16 %v1263, %v1259
    %v1976 = vpack.c.b16 %v1264, %v1260
    %v1977 = vpack.c.b16 %v1265, %v1261
    %v1978 = vpack.c.b16 %v1270, %v1266
    %v1979 = vpack.c.b16 %v1271, %v1267
    %v1980 = vpack.c.b16 %v1272, %v1268
    %v1981 = vpack.c.b16 %v1273, %v1269
    %v1982 = vpack.c.b16 %v1278, %v1274
    %v1983 = vpack.c.b16 %v1279, %v1275
    %v1984 = vpack.c.b16 %v1280, %v1276
    %v1985 = vpack.c.b16 %v1281, %v1277
    %v1986 = vpack.c.b16 %v1286, %v1282
    %v1987 = vpack.c.b16 %v1287, %v1283
    %v1988 = vpack.c.b16 %v1288, %v1284
    %v1989 = vpack.c.b16 %v1289, %v1285
    %v1990 = vpack.c.b16 %v1294, %v1290
    %v1991 = vpack.c.b16 %v1295, %v1291
    %v1992 = vpack.c.b16 %v1296, %v1292
    %v1993 = vpack.c.b16 %v1297, %v1293
    %v1994 = vpack.c.b16 %v1302, %v1298
    %v1995 = vpack.c.b16 %v1303, %v1299
    %v1996 = vpack.c.b16 %v1304, %v1300
    %v1997 = vpack.c.b16 %v1305, %v1301
    %v1998 = vpack.c.b16 %v1310, %v1306
    %v1999 = vpack.c.b16 %v1311, %v1307
    %v2000 = vpack.c.b16 %v1312, %v1308
    %v2001 = vpack.c.b16 %v1313, %v1309
    %v2002 = vpack.c.b16 %v1318, %v1314
    %v2003 = vpack.c.b16 %v1319, %v1315
    %v2004 = vpack.c.b16 %v1320, %v1316
    %v2005 = vpack.c.b16 %v1321, %v1317
    %v2006 = vpack.c.b16 %v1326, %v1322
    %v2007 = vpack.c.b16 %v1327, %v1323
    %v2008 = vpack.c.b16 %v1328, %v1324
    %v2009 = vpack.c.b16 %v1329, %v1325
    %v2010 = vpack.c.b16 %v1334, %v1330
    %v2011 = vpack.c.b16 %v1335, %v1331
    %v2012 = vpack.c.b16 %v1336, %v1332
    %v2013 = vpack.c.b16 %v1337, %v1333
    %v2014 = vpack.c.b16 %v1342, %v1338
    %v2015 = vpack.c.b16 %v1343, %v1339
    %v2016 = vpack.c.b16 %v1344, %v1340
    %v2017 = vpack.c.b16 %v1345, %v1341
    %v2018 = vpack.c.b16 %v1350, %v1346
    %v2019 = vpack.c.b16 %v1351, %v1347
    %v2020 = vpack.c.b16 %v1352, %v1348
    %v2021 = vpack.c.b16 %v1353, %v1349
    %v2022 = vpack.c.b16 %v1358, %v1354
    %v2023 = vpack.c.b16 %v1359, %v1355
    %v2024 = vpack.c.b16 %v1360, %v1356
    %v2025 = vpack.c.b16 %v1361, %v1357
    %v2026 = vpack.c.b16 %v1366, %v1362
    %v2027 = vpack.c.b16 %v1367, %v1363
    %v2028 = vpack.c.b16 %v1368, %v1364
    %v2029 = vpack.c.b16 %v1369, %v1365
    %v2030 = vpack.c.b16 %v1374, %v1370
    %v2031 = vpack.c.b16 %v1375, %v1371
    %v2032 = vpack.c.b16 %v1376, %v1372
    %v2033 = vpack.c.b16 %v1377, %v1373
    %v2034 = vpack.c.b16 %v1382, %v1378
    %v2035 = vpack.c.b16 %v1383, %v1379
    %v2036 = vpack.c.b16 %v1384, %v1380
    %v2037 = vpack.c.b16 %v1385, %v1381
    %v2038 = vpack.c.b16 %v1390, %v1386
    %v2039 = vpack.c.b16 %v1391, %v1387
    %v2040 = vpack.c.b16 %v1392, %v1388
    %v2041 = vpack.c.b16 %v1393, %v1389
    %v2042 = vpack.c.b16 %v1398, %v1394
    %v2043 = vpack.c.b16 %v1399, %v1395
    %v2044 = vpack.c.b16 %v1400, %v1396
    %v2045 = vpack.c.b16 %v1401, %v1397
    %v2046 = vpack.c.b16 %v1406, %v1402
    %v2047 = vpack.c.b16 %v1407, %v1403
    %v2048 = vpack.c.b16 %v1408, %v1404
    %v2049 = vpack.c.b16 %v1409, %v1405
    %v2050 = vpack.c.b16 %v1414, %v1410
    %v2051 = vpack.c.b16 %v1415, %v1411
    %v2052 = vpack.c.b16 %v1416, %v1412
    %v2053 = vpack.c.b16 %v1417, %v1413
    %v2054 = vpack.c.b16 %v1422, %v1418
    %v2055 = vpack.c.b16 %v1423, %v1419
    %v2056 = vpack.c.b16 %v1424, %v1420
    %v2057 = vpack.c.b16 %v1425, %v1421
    %v2058 = vpack.c.b16 %v1430, %v1426
    %v2059 = vpack.c.b16 %v1431, %v1427
    %v2060 = vpack.c.b16 %v1432, %v1428
    %v2061 = vpack.c.b16 %v1433, %v1429
    %v2062 = vpack.c.b16 %v1438, %v1434
    %v2063 = vpack.c.b16 %v1439, %v1435
    %v2064 = vpack.c.b16 %v1440, %v1436
    %v2065 = vpack.c.b16 %v1441, %v1437
    %v2066 = vpack.c.b16 %v1446, %v1442
    %v2067 = vpack.c.b16 %v1447, %v1443
    %v2068 = vpack.c.b16 %v1448, %v1444
    %v2069 = vpack.c.b16 %v1449, %v1445
    %v2070 = vpack.c.b16 %v1454, %v1450
    %v2071 = vpack.c.b16 %v1455, %v1451
    %v2072 = vpack.c.b16 %v1456, %v1452
    %v2073 = vpack.c.b16 %v1457, %v1453
    %v2074 = vpack.c.b16 %v1462, %v1458
    %v2075 = vpack.c.b16 %v1463, %v1459
    %v2076 = vpack.c.b16 %v1464, %v1460
    %v2077 = vpack.c.b16 %v1465, %v1461
    %v2078 = vpack.c.b16 %v1470, %v1466
    %v2079 = vpack.c.b16 %v1471, %v1467
    %v2080 = vpack.c.b16 %v1472, %v1468
    %v2081 = vpack.c.b16 %v1473, %v1469
    %v2082 = vpack.c.b16 %v1478, %v1474
    %v2083 = vpack.c.b16 %v1479, %v1475
    %v2084 = vpack.c.b16 %v1480, %v1476
    %v2085 = vpack.c.b16 %v1481, %v1477
    %v2086 = vpack.c.b16 %v1486, %v1482
    %v2087 = vpack.c.b16 %v1487, %v1483
    %v2088 = vpack.c.b16 %v1488, %v1484
    %v2089 = vpack.c.b16 %v1489, %v1485
    %v2090 = vpack.c.b16 %v1494, %v1490
    %v2091 = vpack.c.b16 %v1495, %v1491
    %v2092 = vpack.c.b16 %v1496, %v1492
    %v2093 = vpack.c.b16 %v1497, %v1493
    %v2094 = vpack.c.b16 %v1502, %v1498
    %v2095 = vpack.c.b16 %v1503, %v1499
    %v2096 = vpack.c.b16 %v1504, %v1500
    %v2097 = vpack.c.b16 %v1505, %v1501
    %v2098 = vpack.c.b16 %v1510, %v1506
    %v2099 = vpack.c.b16 %v1511, %v1507
    %v2100 = vpack.c.b16 %v1512, %v1508
    %v2101 = vpack.c.b16 %v1513, %v1509
    %v2102 = vpack.c.b16 %v1518, %v1514
    %v2103 = vpack.c.b16 %v1519, %v1515
    %v2104 = vpack.c.b16 %v1520, %v1516
    %v2105 = vpack.c.b16 %v1521, %v1517
    %v2106 = vpack.c.b16 %v1526, %v1522
    %v2107 = vpack.c.b16 %v1527, %v1523
    %v2108 = vpack.c.b16 %v1528, %v1524
    %v2109 = vpack.c.b16 %v1529, %v1525
    %v2110 = vpack.c.b16 %v1534, %v1530
    %v2111 = vpack.c.b16 %v1535, %v1531
    %v2112 = vpack.c.b16 %v1536, %v1532
    %v2113 = vpack.c.b16 %v1537, %v1533
    %v2114 = vpack.c.b16 %v1542, %v1538
    %v2115 = vpack.c.b16 %v1543, %v1539
    %v2116 = vpack.c.b16 %v1544, %v1540
    %v2117 = vpack.c.b16 %v1545, %v1541
    %v2118 = vpack.c.b16 %v1550, %v1546
    %v2119 = vpack.c.b16 %v1551, %v1547
    %v2120 = vpack.c.b16 %v1552, %v1548
    %v2121 = vpack.c.b16 %v1553, %v1549
    %v2122 = vpack.c.b16 %v1558, %v1554
    %v2123 = vpack.c.b16 %v1559, %v1555
    %v2124 = vpack.c.b16 %v1560, %v1556
    %v2125 = vpack.c.b16 %v1561, %v1557
    %v2126 = vpack.c.b16 %v1566, %v1562
    %v2127 = vpack.c.b16 %v1567, %v1563
    %v2128 = vpack.c.b16 %v1568, %v1564
    %v2129 = vpack.c.b16 %v1569, %v1565
    %v2130 = vpack.c.b16 %v1574, %v1570
    %v2131 = vpack.c.b16 %v1575, %v1571
    %v2132 = vpack.c.b16 %v1576, %v1572
    %v2133 = vpack.c.b16 %v1577, %v1573
    %v2134 = vpack.c.b16 %v1582, %v1578
    %v2135 = vpack.c.b16 %v1583, %v1579
    %v2136 = vpack.c.b16 %v1584, %v1580
    %v2137 = vpack.c.b16 %v1585, %v1581
    %v2138 = vpack.c.b16 %v1590, %v1586
    %v2139 = vpack.c.b16 %v1591, %v1587
    %v2140 = vpack.c.b16 %v1592, %v1588
    %v2141 = vpack.c.b16 %v1593, %v1589
    %v2142 = vpack.c.b16 %v1598, %v1594
    %v2143 = vpack.c.b16 %v1599, %v1595
    %v2144 = vpack.c.b16 %v1600, %v1596
    %v2145 = vpack.c.b16 %v1601, %v1597
    %v2146 = vpack.c.b16 %v1606, %v1602
    %v2147 = vpack.c.b16 %v1607, %v1603
    %v2148 = vpack.c.b16 %v1608, %v1604
    %v2149 = vpack.c.b16 %v1609, %v1605
    %v2150 = vpack.c.b16 %v1614, %v1610
    %v2151 = vpack.c.b16 %v1615, %v1611
    %v2152 = vpack.c.b16 %v1616, %v1612
    %v2153 = vpack.c.b16 %v1617, %v1613
    %v2154 = vpack.c.b16 %v1622, %v1618
    %v2155 = vpack.c.b16 %v1623, %v1619
    %v2156 = vpack.c.b16 %v1624, %v1620
    %v2157 = vpack.c.b16 %v1625, %v1621
    %v2158 = vpack.c.b16 %v1630, %v1626
    %v2159 = vpack.c.b16 %v1631, %v1627
    %v2160 = vpack.c.b16 %v1632, %v1628
    %v2161 = vpack.c.b16 %v1633, %v1629
    %v2162 = vpack.c.b16 %v1638, %v1634
    %v2163 = vpack.c.b16 %v1639, %v1635
    %v2164 = vpack.c.b16 %v1640, %v1636
    %v2165 = vpack.c.b16 %v1641, %v1637
    %v2166 = vpack.c.b16 %v1646, %v1642
    %v2167 = vpack.c.b16 %v1647, %v1643
    %v2168 = vpack.c.b16 %v1648, %v1644
    %v2169 = vpack.c.b16 %v1649, %v1645
    %v2170 = vpack.c.b16 %v1654, %v1650
    %v2171 = vpack.c.b16 %v1655, %v1651
    %v2172 = vpack.c.b16 %v1656, %v1652
    %v2173 = vpack.c.b16 %v1657, %v1653
    %v2174 = vpack.c.b16 %v1662, %v1658
    %v2175 = vpack.c.b16 %v1663, %v1659
    %v2176 = vpack.c.b16 %v1664, %v1660
    %v2177 = vpack.c.b16 %v1665, %v1661
    %v2178 = vpack.c.b16 %v1670, %v1666
    %v2179 = vpack.c.b16 %v1671, %v1667
    %v2180 = vpack.c.b16 %v1672, %v1668
    %v2181 = vpack.c.b16 %v1673, %v1669
    %v2182 = vpack.c.b16 %v1678, %v1674
    %v2183 = vpack.c.b16 %v1679, %v1675
    %v2184 = vpack.c.b16 %v1680, %v1676
    %v2185 = vpack.c.b16 %v1681, %v1677
    %v2186 = vpack.c.b16 %v1686, %v1682
    %v2187 = vpack.c.b16 %v1687, %v1683
    %v2188 = vpack.c.b16 %v1688, %v1684
    %v2189 = vpack.c.b16 %v1689, %v1685
    %v2190 = vpack.c.b16 %v1694, %v1690
    %v2191 = vpack.c.b16 %v1695, %v1691
    %v2192 = vpack.c.b16 %v1696, %v1692
    %v2193 = vpack.c.b16 %v1697, %v1693
    %v2194 = vpack.c.b16 %v1702, %v1698
    %v2195 = vpack.c.b16 %v1703, %v1699
    %v2196 = vpack.c.b16 %v1704, %v1700
    %v2197 = vpack.c.b16 %v1705, %v1701
    %v2198 = vpack.c.b16 %v1710, %v1706
    %v2199 = vpack.c.b16 %v1711, %v1707
    %v2200 = vpack.c.b16 %v1712, %v1708
    %v2201 = vpack.c.b16 %v1713, %v1709
    %v2202 = vpack.c.b16 %v1718, %v1714
    %v2203 = vpack.c.b16 %v1719, %v1715
    %v2204 = vpack.c.b16 %v1720, %v1716
    %v2205 = vpack.c.b16 %v1721, %v1717
    %v2206 = vpack.c.b16 %v1726, %v1722
    %v2207 = vpack.c.b16 %v1727, %v1723
    %v2208 = vpack.c.b16 %v1728, %v1724
    %v2209 = vpack.c.b16 %v1729, %v1725
    %v2210 = vpack.c.b16 %v1734, %v1730
    %v2211 = vpack.c.b16 %v1735, %v1731
    %v2212 = vpack.c.b16 %v1736, %v1732
    %v2213 = vpack.c.b16 %v1737, %v1733
    %v2214 = vpack.c.b16 %v1742, %v1738
    %v2215 = vpack.c.b16 %v1743, %v1739
    %v2216 = vpack.c.b16 %v1744, %v1740
    %v2217 = vpack.c.b16 %v1745, %v1741
    %v2218 = vpack.c.b16 %v1750, %v1746
    %v2219 = vpack.c.b16 %v1751, %v1747
    %v2220 = vpack.c.b16 %v1752, %v1748
    %v2221 = vpack.c.b16 %v1753, %v1749
    %v2222 = vpack.c.b16 %v1758, %v1754
    %v2223 = vpack.c.b16 %v1759, %v1755
    %v2224 = vpack.c.b16 %v1760, %v1756
    %v2225 = vpack.c.b16 %v1761, %v1757
    %v2226 = vpack.c.b16 %v1766, %v1762
    %v2227 = vpack.c.b16 %v1767, %v1763
    %v2228 = vpack.c.b16 %v1768, %v1764
    %v2229 = vpack.c.b16 %v1769, %v1765
    %v2230 = vpack.c.b16 %v1774, %v1770
    %v2231 = vpack.c.b16 %v1775, %v1771
    %v2232 = vpack.c.b16 %v1776, %v1772
    %v2233 = vpack.c.b16 %v1777, %v1773
    %v2234 = vpack.c.b16 %v1782, %v1778
    %v2235 = vpack.c.b16 %v1783, %v1779
    %v2236 = vpack.c.b16 %v1784, %v1780
    %v2237 = vpack.c.b16 %v1785, %v1781
    %v2238 = vpack.c.b16 %v1790, %v1786
    %v2239 = vpack.c.b16 %v1791, %v1787
    %v2240 = vpack.c.b16 %v1792, %v1788
    %v2241 = vpack.c.b16 %v1793, %v1789
    %v2242 = vpack.c.b16 %v1798, %v1794
    %v2243 = vpack.c.b16 %v1799, %v1795
    %v2244 = vpack.c.b16 %v1800, %v1796
    %v2245 = vpack.c.b16 %v1801, %v1797
    %v2246 = vpack.c.b16 %v1806, %v1802
    %v2247 = vpack.c.b16 %v1807, %v1803
    %v2248 = vpack.c.b16 %v1808, %v1804
    %v2249 = vpack.c.b16 %v1809, %v1805
    %v2250 = vpack.c.b16 %v1814, %v1810
    %v2251 = vpack.c.b16 %v1815, %v1811
    %v2252 = vpack.c.b16 %v1816, %v1812
    %v2253 = vpack.c.b16 %v1817, %v1813
    %v2254 = vpack.c.b16 %v1822, %v1818
    %v2255 = vpack.c.b16 %v1823, %v1819
    %v2256 = vpack.c.b16 %v1824, %v1820
    %v2257 = vpack.c.b16 %v1825, %v1821
    %v2258 = vpack.c.b16 %v1830, %v1826
    %v2259 = vpack.c.b16 %v1831, %v1827
    %v2260 = vpack.c.b16 %v1832, %v1828
    %v2261 = vpack.c.b16 %v1833, %v1829
    %v2262 = vpack.c.b16 %v1838, %v1834
    %v2263 = vpack.c.b16 %v1839, %v1835
    %v2264 = vpack.c.b16 %v1840, %v1836
    %v2265 = vpack.c.b16 %v1841, %v1837
    %v2266 = vpack.c.b16 %v1846, %v1842
    %v2267 = vpack.c.b16 %v1847, %v1843
    %v2268 = vpack.c.b16 %v1848, %v1844
    %v2269 = vpack.c.b16 %v1849, %v1845
    %v2270 = vpack.c.b16 %v1854, %v1850
    %v2271 = vpack.c.b16 %v1855, %v1851
    %v2272 = vpack.c.b16 %v1856, %v1852
    %v2273 = vpack.c.b16 %v1857, %v1853
    %v2274 = vpack.c.b16 %v1862, %v1858
    %v2275 = vpack.c.b16 %v1863, %v1859
    %v2276 = vpack.c.b16 %v1864, %v1860
    %v2277 = vpack.c.b16 %v1865, %v1861
    %v2278 = vpack.c.b16 %v1870, %v1866
    %v2279 = vpack.c.b16 %v1871, %v1867
    %v2280 = vpack.c.b16 %v1872, %v1868
    %v2281 = vpack.c.b16 %v1873, %v1869
    %v2282 = vpack.c.b16 %v1878, %v1874
    %v2283 = vpack.c.b16 %v1879, %v1875
    %v2284 = vpack.c.b16 %v1880, %v1876
    %v2285 = vpack.c.b16 %v1881, %v1877
    %v2286 = vpack.c.b16 %v1886, %v1882
    %v2287 = vpack.c.b16 %v1887, %v1883
    %v2288 = vpack.c.b16 %v1888, %v1884
    %v2289 = vpack.c.b16 %v1889, %v1885
    %vm2690 = vcmask 523264
    %v2692 = vsel %vm2690, %v668, 0
    %2694 = vmatprep.subr.bf16.mxu0 %v1891
    %2695 = vmatpush1.bf16.msra.mxu0 %v1890
    %2696 = vmatprep.subr.bf16.mxu0 %v1895
    %2697 = vmatpush1.bf16.msra.mxu0 %v1894
    %2698 = vmatprep.subr.bf16.mxu0 %v1899
    %2699 = vmatpush1.bf16.msra.mxu0 %v1898
    %2700 = vmatprep.subr.bf16.mxu0 %v1903
    %2701 = vmatpush1.bf16.msra.mxu0 %v1902
    %2702 = vmatprep.subr.bf16.mxu0 %v1907
    %2703 = vmatpush1.bf16.msra.mxu0 %v1906
    %2704 = vmatprep.subr.bf16.mxu0 %v1911
    %2705 = vmatpush1.bf16.msra.mxu0 %v1910
    %2706 = vmatprep.subr.bf16.mxu0 %v1915
    %2707 = vmatpush1.bf16.msra.mxu0 %v1914
    %2708 = vmatprep.subr.bf16.mxu0 %v1919
    %2709 = vmatpush1.bf16.msra.mxu0 %v1918
    %2710 = vmatprep.subr.bf16.mxu0 %v1923
    %2711 = vmatpush1.bf16.msra.mxu0 %v1922
    %2712 = vmatprep.subr.bf16.mxu0 %v1927
    %2713 = vmatpush1.bf16.msra.mxu0 %v1926
    %2714 = vmatprep.subr.bf16.mxu0 %v1931
    %2715 = vmatpush1.bf16.msra.mxu0 %v1930
    %2716 = vmatprep.subr.bf16.mxu0 %v1935
    %2717 = vmatpush1.bf16.msra.mxu0 %v1934
    %2718 = vmatprep.subr.bf16.mxu0 %v1939
    %2719 = vmatpush1.bf16.msra.mxu0 %v1938
    %2720 = vmatprep.subr.bf16.mxu0 %v1943
    %2721 = vmatpush1.bf16.msra.mxu0 %v1942
    %2722 = vmatprep.subr.bf16.mxu0 %v1947
    %2723 = vmatpush1.bf16.msra.mxu0 %v1946
    %2724 = vmatprep.subr.bf16.mxu0 %v1951
    %2725 = vmatpush1.bf16.msra.mxu0 %v1950
    %2726 = vmatprep.mubr.bf16.mxu0 %v627
    %2727 = vmatmul.mubr.bf16.gmra.mrb[0].mxu0 %v613
    %v2728 = vpop.f32.mrb[0].mxu0
    %v2729 = vadd.f32 %v571, %v2728
    %v2730 = vpop.f32.mrb[0].mxu0
    %v2731 = vadd.f32 %v575, %v2730
    %v2732 = vpop.f32.mrb[0].mxu0
    %v2733 = vpop.f32.mrb[0].mxu0
    %2734 = vdwg.mxu0
    %2735 = vmatprep.subr.bf16.mxu0 %v1955
    %2736 = vmatpush1.bf16.msra.mxu0 %v1954
    %2737 = vmatprep.subr.bf16.mxu0 %v1959
    %2738 = vmatpush1.bf16.msra.mxu0 %v1958
    %2739 = vmatprep.subr.bf16.mxu0 %v1963
    %2740 = vmatpush1.bf16.msra.mxu0 %v1962
    %2741 = vmatprep.subr.bf16.mxu0 %v1967
    %2742 = vmatpush1.bf16.msra.mxu0 %v1966
    %2743 = vmatprep.subr.bf16.mxu0 %v1971
    %2744 = vmatpush1.bf16.msra.mxu0 %v1970
    %2745 = vmatprep.subr.bf16.mxu0 %v1975
    %2746 = vmatpush1.bf16.msra.mxu0 %v1974
    %2747 = vmatprep.subr.bf16.mxu0 %v1979
    %2748 = vmatpush1.bf16.msra.mxu0 %v1978
    %2749 = vmatprep.subr.bf16.mxu0 %v1983
    %2750 = vmatpush1.bf16.msra.mxu0 %v1982
    %2751 = vmatprep.subr.bf16.mxu0 %v1987
    %2752 = vmatpush1.bf16.msra.mxu0 %v1986
    %2753 = vmatprep.subr.bf16.mxu0 %v1991
    %2754 = vmatpush1.bf16.msra.mxu0 %v1990
    %2755 = vmatprep.subr.bf16.mxu0 %v1995
    %2756 = vmatpush1.bf16.msra.mxu0 %v1994
    %2757 = vmatprep.subr.bf16.mxu0 %v1999
    %2758 = vmatpush1.bf16.msra.mxu0 %v1998
    %2759 = vmatprep.subr.bf16.mxu0 %v2003
    %2760 = vmatpush1.bf16.msra.mxu0 %v2002
    %2761 = vmatprep.subr.bf16.mxu0 %v2007
    %2762 = vmatpush1.bf16.msra.mxu0 %v2006
    %2763 = vmatprep.subr.bf16.mxu0 %v2011
    %2764 = vmatpush1.bf16.msra.mxu0 %v2010
    %2765 = vmatprep.subr.bf16.mxu0 %v2015
    %2766 = vmatpush1.bf16.msra.mxu0 %v2014
    %2767 = vmatprep.mubr.bf16.mxu0 %v637
    %2768 = vmatmul.mubr.bf16.gmra.mrb[0].mxu0 %v635
    %v2769 = vpop.f32.mrb[0].mxu0
    %v2770 = vadd.f32 %v2729, %v2769
    %v2771 = vpop.f32.mrb[0].mxu0
    %v2772 = vadd.f32 %v2731, %v2771
    %v2773 = vpop.f32.mrb[0].mxu0
    %v2774 = vpop.f32.mrb[0].mxu0
    %2775 = vdwg.mxu0
    %2776 = vmatprep.subr.bf16.mxu0 %v2019
    %2777 = vmatpush1.bf16.msra.mxu0 %v2018
    %2778 = vmatprep.subr.bf16.mxu0 %v2023
    %2779 = vmatpush1.bf16.msra.mxu0 %v2022
    %2780 = vmatprep.subr.bf16.mxu0 %v2027
    %2781 = vmatpush1.bf16.msra.mxu0 %v2026
    %2782 = vmatprep.subr.bf16.mxu0 %v2031
    %2783 = vmatpush1.bf16.msra.mxu0 %v2030
    %2784 = vmatprep.subr.bf16.mxu0 %v2035
    %2785 = vmatpush1.bf16.msra.mxu0 %v2034
    %2786 = vmatprep.subr.bf16.mxu0 %v2039
    %2787 = vmatpush1.bf16.msra.mxu0 %v2038
    %2788 = vmatprep.subr.bf16.mxu0 %v2043
    %2789 = vmatpush1.bf16.msra.mxu0 %v2042
    %2790 = vmatprep.subr.bf16.mxu0 %v2047
    %2791 = vmatpush1.bf16.msra.mxu0 %v2046
    %2792 = vmatprep.subr.bf16.mxu0 %v2051
    %2793 = vmatpush1.bf16.msra.mxu0 %v2050
    %2794 = vmatprep.subr.bf16.mxu0 %v2055
    %2795 = vmatpush1.bf16.msra.mxu0 %v2054
    %2796 = vmatprep.subr.bf16.mxu0 %v2059
    %2797 = vmatpush1.bf16.msra.mxu0 %v2058
    %2798 = vmatprep.subr.bf16.mxu0 %v2063
    %2799 = vmatpush1.bf16.msra.mxu0 %v2062
    %2800 = vmatprep.subr.bf16.mxu0 %v2067
    %2801 = vmatpush1.bf16.msra.mxu0 %v2066
    %2802 = vmatprep.subr.bf16.mxu0 %v2071
    %2803 = vmatpush1.bf16.msra.mxu0 %v2070
    %2804 = vmatprep.subr.bf16.mxu0 %v2075
    %2805 = vmatpush1.bf16.msra.mxu0 %v2074
    %2806 = vmatprep.subr.bf16.mxu0 %v2079
    %2807 = vmatpush1.bf16.msra.mxu0 %v2078
    %2808 = vmatprep.mubr.bf16.mxu0 %v634
    %2809 = vmatmul.mubr.bf16.gmra.mrb[0].mxu0 %v620
    %v2810 = vpop.f32.mrb[0].mxu0
    %v2811 = vadd.f32 %v2770, %v2810
    %v2812 = vpop.f32.mrb[0].mxu0
    %v2813 = vadd.f32 %v2772, %v2812
    %v2814 = vpop.f32.mrb[0].mxu0
    %v2815 = vpop.f32.mrb[0].mxu0
    %2816 = vdwg.mxu0
    %2817 = vmatprep.subr.bf16.mxu0 %v2083
    %2818 = vmatpush1.bf16.msra.mxu0 %v2082
    %2819 = vmatprep.subr.bf16.mxu0 %v2087
    %2820 = vmatpush1.bf16.msra.mxu0 %v2086
    %2821 = vmatprep.subr.bf16.mxu0 %v2091
    %2822 = vmatpush1.bf16.msra.mxu0 %v2090
    %2823 = vmatprep.subr.bf16.mxu0 %v2095
    %2824 = vmatpush1.bf16.msra.mxu0 %v2094
    %2825 = vmatprep.subr.bf16.mxu0 %v2099
    %2826 = vmatpush1.bf16.msra.mxu0 %v2098
    %2827 = vmatprep.subr.bf16.mxu0 %v2103
    %2828 = vmatpush1.bf16.msra.mxu0 %v2102
    %2829 = vmatprep.subr.bf16.mxu0 %v2107
    %2830 = vmatpush1.bf16.msra.mxu0 %v2106
    %2831 = vmatprep.subr.bf16.mxu0 %v2111
    %2832 = vmatpush1.bf16.msra.mxu0 %v2110
    %2833 = vmatprep.subr.bf16.mxu0 %v2115
    %2834 = vmatpush1.bf16.msra.mxu0 %v2114
    %2835 = vmatprep.subr.bf16.mxu0 %v2119
    %2836 = vmatpush1.bf16.msra.mxu0 %v2118
    %2837 = vmatprep.subr.bf16.mxu0 %v2123
    %2838 = vmatpush1.bf16.msra.mxu0 %v2122
    %2839 = vmatprep.subr.bf16.mxu0 %v2127
    %2840 = vmatpush1.bf16.msra.mxu0 %v2126
    %2841 = vmatprep.subr.bf16.mxu0 %v2131
    %2842 = vmatpush1.bf16.msra.mxu0 %v2130
    %2843 = vmatprep.subr.bf16.mxu0 %v2135
    %2844 = vmatpush1.bf16.msra.mxu0 %v2134
    %2845 = vmatprep.subr.bf16.mxu0 %v2139
    %2846 = vmatpush1.bf16.msra.mxu0 %v2138
    %2847 = vmatprep.subr.bf16.mxu0 %v2143
    %2848 = vmatpush1.bf16.msra.mxu0 %v2142
    %2849 = vmatprep.mubr.bf16.mxu0 %v638
    %2850 = vmatmul.mubr.bf16.gmra.mrb[0].mxu0 %v636
    %v2851 = vpop.f32.mrb[0].mxu0
    %v2852 = vadd.f32 %v2811, %v2851
    %v2853 = vpop.f32.mrb[0].mxu0
    %v2854 = vadd.f32 %v2813, %v2853
    %v2855 = vpop.f32.mrb[0].mxu0
    %v2856 = vpop.f32.mrb[0].mxu0
    %2857 = vdwg.mxu0
    %2858 = vmatprep.subr.bf16.mxu0 %v2147
    %2859 = vmatpush1.bf16.msra.mxu0 %v2146
    %2860 = vmatprep.subr.bf16.mxu0 %v2151
    %2861 = vmatpush1.bf16.msra.mxu0 %v2150
    %2862 = vmatprep.subr.bf16.mxu0 %v2155
    %2863 = vmatpush1.bf16.msra.mxu0 %v2154
    %2864 = vmatprep.subr.bf16.mxu0 %v2159
    %2865 = vmatpush1.bf16.msra.mxu0 %v2158
    %2866 = vmatprep.subr.bf16.mxu0 %v2163
    %2867 = vmatpush1.bf16.msra.mxu0 %v2162
    %2868 = vmatprep.subr.bf16.mxu0 %v2167
    %2869 = vmatpush1.bf16.msra.mxu0 %v2166
    %2870 = vmatprep.subr.bf16.mxu0 %v2171
    %2871 = vmatpush1.bf16.msra.mxu0 %v2170
    %2872 = vmatprep.subr.bf16.mxu0 %v2175
    %2873 = vmatpush1.bf16.msra.mxu0 %v2174
    %2874 = vmatprep.subr.bf16.mxu0 %v2179
    %2875 = vmatpush1.bf16.msra.mxu0 %v2178
    %2876 = vmatprep.subr.bf16.mxu0 %v2183
    %2877 = vmatpush1.bf16.msra.mxu0 %v2182
    %2878 = vmatprep.subr.bf16.mxu0 %v2187
    %2879 = vmatpush1.bf16.msra.mxu0 %v2186
    %2880 = vmatprep.subr.bf16.mxu0 %v2191
    %2881 = vmatpush1.bf16.msra.mxu0 %v2190
    %2882 = vmatprep.subr.bf16.mxu0 %v2195
    %2883 = vmatpush1.bf16.msra.mxu0 %v2194
    %2884 = vmatprep.subr.bf16.mxu0 %v2199
    %2885 = vmatpush1.bf16.msra.mxu0 %v2198
    %2886 = vmatprep.subr.bf16.mxu0 %v2203
    %2887 = vmatpush1.bf16.msra.mxu0 %v2202
    %2888 = vmatprep.subr.bf16.mxu0 %v2207
    %2889 = vmatpush1.bf16.msra.mxu0 %v2206
    %2890 = vmatprep.mubr.bf16.mxu0 %v675
    %2891 = vmatmul.mubr.bf16.gmra.mrb[0].mxu0 %v661
    %v2892 = vpop.f32.mrb[0].mxu0
    %v2893 = vadd.f32 %v2852, %v2892
    %v2894 = vpop.f32.mrb[0].mxu0
    %v2895 = vadd.f32 %v2854, %v2894
    %v2896 = vpop.f32.mrb[0].mxu0
    %v2897 = vpop.f32.mrb[0].mxu0
    %2898 = vdwg.mxu0
    %2899 = vmatprep.subr.bf16.mxu0 %v2211
    %2900 = vmatpush1.bf16.msra.mxu0 %v2210
    %2901 = vmatprep.subr.bf16.mxu0 %v2215
    %2902 = vmatpush1.bf16.msra.mxu0 %v2214
    %2903 = vmatprep.subr.bf16.mxu0 %v2219
    %2904 = vmatpush1.bf16.msra.mxu0 %v2218
    %2905 = vmatprep.subr.bf16.mxu0 %v2223
    %2906 = vmatpush1.bf16.msra.mxu0 %v2222
    %2907 = vmatprep.subr.bf16.mxu0 %v2227
    %2908 = vmatpush1.bf16.msra.mxu0 %v2226
    %2909 = vmatprep.subr.bf16.mxu0 %v2231
    %2910 = vmatpush1.bf16.msra.mxu0 %v2230
    %2911 = vmatprep.subr.bf16.mxu0 %v2235
    %2912 = vmatpush1.bf16.msra.mxu0 %v2234
    %2913 = vmatprep.subr.bf16.mxu0 %v2239
    %2914 = vmatpush1.bf16.msra.mxu0 %v2238
    %2915 = vmatprep.subr.bf16.mxu0 %v2243
    %2916 = vmatpush1.bf16.msra.mxu0 %v2242
    %2917 = vmatprep.subr.bf16.mxu0 %v2247
    %2918 = vmatpush1.bf16.msra.mxu0 %v2246
    %2919 = vmatprep.subr.bf16.mxu0 %v2251
    %2920 = vmatpush1.bf16.msra.mxu0 %v2250
    %2921 = vmatprep.subr.bf16.mxu0 %v2255
    %2922 = vmatpush1.bf16.msra.mxu0 %v2254
    %2923 = vmatprep.subr.bf16.mxu0 %v2259
    %2924 = vmatpush1.bf16.msra.mxu0 %v2258
    %2925 = vmatprep.subr.bf16.mxu0 %v2263
    %2926 = vmatpush1.bf16.msra.mxu0 %v2262
    %2927 = vmatprep.subr.bf16.mxu0 %v2267
    %2928 = vmatpush1.bf16.msra.mxu0 %v2266
    %2929 = vmatprep.subr.bf16.mxu0 %v2271
    %2930 = vmatpush1.bf16.msra.mxu0 %v2270
    %2931 = vmatprep.mubr.bf16.mxu0 %v677
    %2932 = vmatmul.mubr.bf16.gmra.mrb[0].mxu0 %v676
    %v2933 = vpop.f32.mrb[0].mxu0
    %v2934 = vadd.f32 %v2893, %v2933
    %v2935 = vpop.f32.mrb[0].mxu0
    %v2936 = vadd.f32 %v2895, %v2935
    %v2937 = vpop.f32.mrb[0].mxu0
    %v2938 = vpop.f32.mrb[0].mxu0
    %2939 = vdwg.mxu0
    %2940 = vmatprep.subr.bf16.mxu0 %v2275
    %2941 = vmatpush1.bf16.msra.mxu0 %v2274
    %2942 = vmatprep.subr.bf16.mxu0 %v2279
    %2943 = vmatpush1.bf16.msra.mxu0 %v2278
    %2944 = vmatprep.subr.bf16.mxu0 %v2283
    %2945 = vmatpush1.bf16.msra.mxu0 %v2282
    %2946 = vmatprep.subr.bf16.mxu0 %v2287
    %2947 = vmatpush1.bf16.msra.mxu0 %v2286
    %2948 = vmatprep.subr.bf16.mxu0 0
    %2949 = vmatpush1.bf16.msra.mxu0 0
    %2950 = vmatprep.subr.bf16.mxu0 0
    %2951 = vmatpush1.bf16.msra.mxu0 0
    %2952 = vmatprep.subr.bf16.mxu0 0
    %2953 = vmatpush1.bf16.msra.mxu0 0
    %2954 = vmatprep.subr.bf16.mxu0 0
    %2955 = vmatpush1.bf16.msra.mxu0 0
    %2956 = vmatprep.subr.bf16.mxu0 0
    %2957 = vmatpush1.bf16.msra.mxu0 0
    %2958 = vmatprep.subr.bf16.mxu0 0
    %2959 = vmatpush1.bf16.msra.mxu0 0
    %2960 = vmatprep.subr.bf16.mxu0 0
    %2961 = vmatpush1.bf16.msra.mxu0 0
    %2962 = vmatprep.subr.bf16.mxu0 0
    %2963 = vmatpush1.bf16.msra.mxu0 0
    %2964 = vmatprep.subr.bf16.mxu0 0
    %2965 = vmatpush1.bf16.msra.mxu0 0
    %2966 = vmatprep.subr.bf16.mxu0 0
    %2967 = vmatpush1.bf16.msra.mxu0 0
    %2968 = vmatprep.subr.bf16.mxu0 0
    %2969 = vmatpush1.bf16.msra.mxu0 0
    %2970 = vmatprep.subr.bf16.mxu0 0
    %2971 = vmatpush1.bf16.msra.mxu0 0
    %2972 = vmatprep.mubr.bf16.mxu0 0
    %2973 = vmatmul.mubr.bf16.gmra.mrb[0].mxu0 %v2692
    %v2974 = vpop.f32.mrb[0].mxu0
    %v2975 = vadd.f32 %v2934, %v2974
    %v2976 = vpop.f32.mrb[0].mxu0
    %v2977 = vadd.f32 %v2936, %v2976
    %v2978 = vpop.f32.mrb[0].mxu0
    %v2979 = vpop.f32.mrb[0].mxu0
    %2980 = vdwg.mxu0
    %2981 = vmatprep.subr.bf16.mxu0 %v1893
    %2982 = vmatpush1.bf16.msra.mxu0 %v1892
    %2983 = vmatprep.subr.bf16.mxu0 %v1897
    %2984 = vmatpush1.bf16.msra.mxu0 %v1896
    %2985 = vmatprep.subr.bf16.mxu0 %v1901
    %2986 = vmatpush1.bf16.msra.mxu0 %v1900
    %2987 = vmatprep.subr.bf16.mxu0 %v1905
    %2988 = vmatpush1.bf16.msra.mxu0 %v1904
    %2989 = vmatprep.subr.bf16.mxu0 %v1909
    %2990 = vmatpush1.bf16.msra.mxu0 %v1908
    %2991 = vmatprep.subr.bf16.mxu0 %v1913
    %2992 = vmatpush1.bf16.msra.mxu0 %v1912
    %2993 = vmatprep.subr.bf16.mxu0 %v1917
    %2994 = vmatpush1.bf16.msra.mxu0 %v1916
    %2995 = vmatprep.subr.bf16.mxu0 %v1921
    %2996 = vmatpush1.bf16.msra.mxu0 %v1920
    %2997 = vmatprep.subr.bf16.mxu0 %v1925
    %2998 = vmatpush1.bf16.msra.mxu0 %v1924
    %2999 = vmatprep.subr.bf16.mxu0 %v1929
    %3000 = vmatpush1.bf16.msra.mxu0 %v1928
    %3001 = vmatprep.subr.bf16.mxu0 %v1933
    %3002 = vmatpush1.bf16.msra.mxu0 %v1932
    %3003 = vmatprep.subr.bf16.mxu0 %v1937
    %3004 = vmatpush1.bf16.msra.mxu0 %v1936
    %3005 = vmatprep.subr.bf16.mxu0 %v1941
    %3006 = vmatpush1.bf16.msra.mxu0 %v1940
    %3007 = vmatprep.subr.bf16.mxu0 %v1945
    %3008 = vmatpush1.bf16.msra.mxu0 %v1944
    %3009 = vmatprep.subr.bf16.mxu0 %v1949
    %3010 = vmatpush1.bf16.msra.mxu0 %v1948
    %3011 = vmatprep.subr.bf16.mxu0 %v1953
    %3012 = vmatpush1.bf16.msra.mxu0 %v1952
    %3013 = vmatprep.mubr.bf16.mxu0 %v627
    %3014 = vmatmul.mubr.bf16.gmra.mrb[0].mxu0 %v613
    %v3015 = vpop.f32.mrb[0].mxu0
    %v3016 = vadd.f32 %v579, %v3015
    %v3017 = vpop.f32.mrb[0].mxu0
    %v3018 = vadd.f32 %v583, %v3017
    %v3019 = vpop.f32.mrb[0].mxu0
    %v3020 = vpop.f32.mrb[0].mxu0
    %3021 = vdwg.mxu0
    %3022 = vmatprep.subr.bf16.mxu0 %v1957
    %3023 = vmatpush1.bf16.msra.mxu0 %v1956
    %3024 = vmatprep.subr.bf16.mxu0 %v1961
    %3025 = vmatpush1.bf16.msra.mxu0 %v1960
    %3026 = vmatprep.subr.bf16.mxu0 %v1965
    %3027 = vmatpush1.bf16.msra.mxu0 %v1964
    %3028 = vmatprep.subr.bf16.mxu0 %v1969
    %3029 = vmatpush1.bf16.msra.mxu0 %v1968
    %3030 = vmatprep.subr.bf16.mxu0 %v1973
    %3031 = vmatpush1.bf16.msra.mxu0 %v1972
    %3032 = vmatprep.subr.bf16.mxu0 %v1977
    %3033 = vmatpush1.bf16.msra.mxu0 %v1976
    %3034 = vmatprep.subr.bf16.mxu0 %v1981
    %3035 = vmatpush1.bf16.msra.mxu0 %v1980
    %3036 = vmatprep.subr.bf16.mxu0 %v1985
    %3037 = vmatpush1.bf16.msra.mxu0 %v1984
    %3038 = vmatprep.subr.bf16.mxu0 %v1989
    %3039 = vmatpush1.bf16.msra.mxu0 %v1988
    %3040 = vmatprep.subr.bf16.mxu0 %v1993
    %3041 = vmatpush1.bf16.msra.mxu0 %v1992
    %3042 = vmatprep.subr.bf16.mxu0 %v1997
    %3043 = vmatpush1.bf16.msra.mxu0 %v1996
    %3044 = vmatprep.subr.bf16.mxu0 %v2001
    %3045 = vmatpush1.bf16.msra.mxu0 %v2000
    %3046 = vmatprep.subr.bf16.mxu0 %v2005
    %3047 = vmatpush1.bf16.msra.mxu0 %v2004
    %3048 = vmatprep.subr.bf16.mxu0 %v2009
    %3049 = vmatpush1.bf16.msra.mxu0 %v2008
    %3050 = vmatprep.subr.bf16.mxu0 %v2013
    %3051 = vmatpush1.bf16.msra.mxu0 %v2012
    %3052 = vmatprep.subr.bf16.mxu0 %v2017
    %3053 = vmatpush1.bf16.msra.mxu0 %v2016
    %3054 = vmatprep.mubr.bf16.mxu0 %v637
    %3055 = vmatmul.mubr.bf16.gmra.mrb[0].mxu0 %v635
    %v3056 = vpop.f32.mrb[0].mxu0
    %v3057 = vadd.f32 %v3016, %v3056
    %v3058 = vpop.f32.mrb[0].mxu0
    %v3059 = vadd.f32 %v3018, %v3058
    %v3060 = vpop.f32.mrb[0].mxu0
    %v3061 = vpop.f32.mrb[0].mxu0
    %3062 = vdwg.mxu0
    %3063 = vmatprep.subr.bf16.mxu0 %v2021
    %3064 = vmatpush1.bf16.msra.mxu0 %v2020
    %3065 = vmatprep.subr.bf16.mxu0 %v2025
    %3066 = vmatpush1.bf16.msra.mxu0 %v2024
    %3067 = vmatprep.subr.bf16.mxu0 %v2029
    %3068 = vmatpush1.bf16.msra.mxu0 %v2028
    %3069 = vmatprep.subr.bf16.mxu0 %v2033
    %3070 = vmatpush1.bf16.msra.mxu0 %v2032
    %3071 = vmatprep.subr.bf16.mxu0 %v2037
    %3072 = vmatpush1.bf16.msra.mxu0 %v2036
    %3073 = vmatprep.subr.bf16.mxu0 %v2041
    %3074 = vmatpush1.bf16.msra.mxu0 %v2040
    %3075 = vmatprep.subr.bf16.mxu0 %v2045
    %3076 = vmatpush1.bf16.msra.mxu0 %v2044
    %3077 = vmatprep.subr.bf16.mxu0 %v2049
    %3078 = vmatpush1.bf16.msra.mxu0 %v2048
    %3079 = vmatprep.subr.bf16.mxu0 %v2053
    %3080 = vmatpush1.bf16.msra.mxu0 %v2052
    %3081 = vmatprep.subr.bf16.mxu0 %v2057
    %3082 = vmatpush1.bf16.msra.mxu0 %v2056
    %3083 = vmatprep.subr.bf16.mxu0 %v2061
    %3084 = vmatpush1.bf16.msra.mxu0 %v2060
    %3085 = vmatprep.subr.bf16.mxu0 %v2065
    %3086 = vmatpush1.bf16.msra.mxu0 %v2064
    %3087 = vmatprep.subr.bf16.mxu0 %v2069
    %3088 = vmatpush1.bf16.msra.mxu0 %v2068
    %3089 = vmatprep.subr.bf16.mxu0 %v2073
    %3090 = vmatpush1.bf16.msra.mxu0 %v2072
    %3091 = vmatprep.subr.bf16.mxu0 %v2077
    %3092 = vmatpush1.bf16.msra.mxu0 %v2076
    %3093 = vmatprep.subr.bf16.mxu0 %v2081
    %3094 = vmatpush1.bf16.msra.mxu0 %v2080
    %3095 = vmatprep.mubr.bf16.mxu0 %v634
    %3096 = vmatmul.mubr.bf16.gmra.mrb[0].mxu0 %v620
    %v3097 = vpop.f32.mrb[0].mxu0
    %v3098 = vadd.f32 %v3057, %v3097
    %v3099 = vpop.f32.mrb[0].mxu0
    %v3100 = vadd.f32 %v3059, %v3099
    %v3101 = vpop.f32.mrb[0].mxu0
    %v3102 = vpop.f32.mrb[0].mxu0
    %3103 = vdwg.mxu0
    %3104 = vmatprep.subr.bf16.mxu0 %v2085
    %3105 = vmatpush1.bf16.msra.mxu0 %v2084
    %3106 = vmatprep.subr.bf16.mxu0 %v2089
    %3107 = vmatpush1.bf16.msra.mxu0 %v2088
    %3108 = vmatprep.subr.bf16.mxu0 %v2093
    %3109 = vmatpush1.bf16.msra.mxu0 %v2092
    %3110 = vmatprep.subr.bf16.mxu0 %v2097
    %3111 = vmatpush1.bf16.msra.mxu0 %v2096
    %3112 = vmatprep.subr.bf16.mxu0 %v2101
    %3113 = vmatpush1.bf16.msra.mxu0 %v2100
    %3114 = vmatprep.subr.bf16.mxu0 %v2105
    %3115 = vmatpush1.bf16.msra.mxu0 %v2104
    %3116 = vmatprep.subr.bf16.mxu0 %v2109
    %3117 = vmatpush1.bf16.msra.mxu0 %v2108
    %3118 = vmatprep.subr.bf16.mxu0 %v2113
    %3119 = vmatpush1.bf16.msra.mxu0 %v2112
    %3120 = vmatprep.subr.bf16.mxu0 %v2117
    %3121 = vmatpush1.bf16.msra.mxu0 %v2116
    %3122 = vmatprep.subr.bf16.mxu0 %v2121
    %3123 = vmatpush1.bf16.msra.mxu0 %v2120
    %3124 = vmatprep.subr.bf16.mxu0 %v2125
    %3125 = vmatpush1.bf16.msra.mxu0 %v2124
    %3126 = vmatprep.subr.bf16.mxu0 %v2129
    %3127 = vmatpush1.bf16.msra.mxu0 %v2128
    %3128 = vmatprep.subr.bf16.mxu0 %v2133
    %3129 = vmatpush1.bf16.msra.mxu0 %v2132
    %3130 = vmatprep.subr.bf16.mxu0 %v2137
    %3131 = vmatpush1.bf16.msra.mxu0 %v2136
    %3132 = vmatprep.subr.bf16.mxu0 %v2141
    %3133 = vmatpush1.bf16.msra.mxu0 %v2140
    %3134 = vmatprep.subr.bf16.mxu0 %v2145
    %3135 = vmatpush1.bf16.msra.mxu0 %v2144
    %3136 = vmatprep.mubr.bf16.mxu0 %v638
    %3137 = vmatmul.mubr.bf16.gmra.mrb[0].mxu0 %v636
    %v3138 = vpop.f32.mrb[0].mxu0
    %v3139 = vadd.f32 %v3098, %v3138
    %v3140 = vpop.f32.mrb[0].mxu0
    %v3141 = vadd.f32 %v3100, %v3140
    %v3142 = vpop.f32.mrb[0].mxu0
    %v3143 = vpop.f32.mrb[0].mxu0
    %3144 = vdwg.mxu0
    %3145 = vmatprep.subr.bf16.mxu0 %v2149
    %3146 = vmatpush1.bf16.msra.mxu0 %v2148
    %3147 = vmatprep.subr.bf16.mxu0 %v2153
    %3148 = vmatpush1.bf16.msra.mxu0 %v2152
    %3149 = vmatprep.subr.bf16.mxu0 %v2157
    %3150 = vmatpush1.bf16.msra.mxu0 %v2156
    %3151 = vmatprep.subr.bf16.mxu0 %v2161
    %3152 = vmatpush1.bf16.msra.mxu0 %v2160
    %3153 = vmatprep.subr.bf16.mxu0 %v2165
    %3154 = vmatpush1.bf16.msra.mxu0 %v2164
    %3155 = vmatprep.subr.bf16.mxu0 %v2169
    %3156 = vmatpush1.bf16.msra.mxu0 %v2168
    %3157 = vmatprep.subr.bf16.mxu0 %v2173
    %3158 = vmatpush1.bf16.msra.mxu0 %v2172
    %3159 = vmatprep.subr.bf16.mxu0 %v2177
    %3160 = vmatpush1.bf16.msra.mxu0 %v2176
    %3161 = vmatprep.subr.bf16.mxu0 %v2181
    %3162 = vmatpush1.bf16.msra.mxu0 %v2180
    %3163 = vmatprep.subr.bf16.mxu0 %v2185
    %3164 = vmatpush1.bf16.msra.mxu0 %v2184
    %3165 = vmatprep.subr.bf16.mxu0 %v2189
    %3166 = vmatpush1.bf16.msra.mxu0 %v2188
    %3167 = vmatprep.subr.bf16.mxu0 %v2193
    %3168 = vmatpush1.bf16.msra.mxu0 %v2192
    %3169 = vmatprep.subr.bf16.mxu0 %v2197
    %3170 = vmatpush1.bf16.msra.mxu0 %v2196
    %3171 = vmatprep.subr.bf16.mxu0 %v2201
    %3172 = vmatpush1.bf16.msra.mxu0 %v2200
    %3173 = vmatprep.subr.bf16.mxu0 %v2205
    %3174 = vmatpush1.bf16.msra.mxu0 %v2204
    %3175 = vmatprep.subr.bf16.mxu0 %v2209
    %3176 = vmatpush1.bf16.msra.mxu0 %v2208
    %3177 = vmatprep.mubr.bf16.mxu0 %v675
    %3178 = vmatmul.mubr.bf16.gmra.mrb[0].mxu0 %v661
    %v3179 = vpop.f32.mrb[0].mxu0
    %v3180 = vadd.f32 %v3139, %v3179
    %v3181 = vpop.f32.mrb[0].mxu0
    %v3182 = vadd.f32 %v3141, %v3181
    %v3183 = vpop.f32.mrb[0].mxu0
    %v3184 = vpop.f32.mrb[0].mxu0
    %3185 = vdwg.mxu0
    %3186 = vmatprep.subr.bf16.mxu0 %v2213
    %3187 = vmatpush1.bf16.msra.mxu0 %v2212
    %3188 = vmatprep.subr.bf16.mxu0 %v2217
    %3189 = vmatpush1.bf16.msra.mxu0 %v2216
    %3190 = vmatprep.subr.bf16.mxu0 %v2221
    %3191 = vmatpush1.bf16.msra.mxu0 %v2220
    %3192 = vmatprep.subr.bf16.mxu0 %v2225
    %3193 = vmatpush1.bf16.msra.mxu0 %v2224
    %3194 = vmatprep.subr.bf16.mxu0 %v2229
    %3195 = vmatpush1.bf16.msra.mxu0 %v2228
    %3196 = vmatprep.subr.bf16.mxu0 %v2233
    %3197 = vmatpush1.bf16.msra.mxu0 %v2232
    %3198 = vmatprep.subr.bf16.mxu0 %v2237
    %3199 = vmatpush1.bf16.msra.mxu0 %v2236
    %3200 = vmatprep.subr.bf16.mxu0 %v2241
    %3201 = vmatpush1.bf16.msra.mxu0 %v2240
    %3202 = vmatprep.subr.bf16.mxu0 %v2245
    %3203 = vmatpush1.bf16.msra.mxu0 %v2244
    %3204 = vmatprep.subr.bf16.mxu0 %v2249
    %3205 = vmatpush1.bf16.msra.mxu0 %v2248
    %3206 = vmatprep.subr.bf16.mxu0 %v2253
    %3207 = vmatpush1.bf16.msra.mxu0 %v2252
    %3208 = vmatprep.subr.bf16.mxu0 %v2257
    %3209 = vmatpush1.bf16.msra.mxu0 %v2256
    %3210 = vmatprep.subr.bf16.mxu0 %v2261
    %3211 = vmatpush1.bf16.msra.mxu0 %v2260
    %3212 = vmatprep.subr.bf16.mxu0 %v2265
    %3213 = vmatpush1.bf16.msra.mxu0 %v2264
    %3214 = vmatprep.subr.bf16.mxu0 %v2269
    %3215 = vmatpush1.bf16.msra.mxu0 %v2268
    %3216 = vmatprep.subr.bf16.mxu0 %v2273
    %3217 = vmatpush1.bf16.msra.mxu0 %v2272
    %3218 = vmatprep.mubr.bf16.mxu0 %v677
    %3219 = vmatmul.mubr.bf16.gmra.mrb[0].mxu0 %v676
    %v3220 = vpop.f32.mrb[0].mxu0
    %v3221 = vadd.f32 %v3180, %v3220
    %v3222 = vpop.f32.mrb[0].mxu0
    %v3223 = vadd.f32 %v3182, %v3222
    %v3224 = vpop.f32.mrb[0].mxu0
    %v3225 = vpop.f32.mrb[0].mxu0
    %3226 = vdwg.mxu0
    %3227 = vmatprep.subr.bf16.mxu0 %v2277
    %3228 = vmatpush1.bf16.msra.mxu0 %v2276
    %3229 = vmatprep.subr.bf16.mxu0 %v2281
    %3230 = vmatpush1.bf16.msra.mxu0 %v2280
    %3231 = vmatprep.subr.bf16.mxu0 %v2285
    %3232 = vmatpush1.bf16.msra.mxu0 %v2284
    %3233 = vmatprep.subr.bf16.mxu0 %v2289
    %3234 = vmatpush1.bf16.msra.mxu0 %v2288
    %3235 = vmatprep.subr.bf16.mxu0 0
    %3236 = vmatpush1.bf16.msra.mxu0 0
    %3237 = vmatprep.subr.bf16.mxu0 0
    %3238 = vmatpush1.bf16.msra.mxu0 0
    %3239 = vmatprep.subr.bf16.mxu0 0
    %3240 = vmatpush1.bf16.msra.mxu0 0
    %3241 = vmatprep.subr.bf16.mxu0 0
    %3242 = vmatpush1.bf16.msra.mxu0 0
    %3243 = vmatprep.subr.bf16.mxu0 0
    %3244 = vmatpush1.bf16.msra.mxu0 0
    %3245 = vmatprep.subr.bf16.mxu0 0
    %3246 = vmatpush1.bf16.msra.mxu0 0
    %3247 = vmatprep.subr.bf16.mxu0 0
    %3248 = vmatpush1.bf16.msra.mxu0 0
    %3249 = vmatprep.subr.bf16.mxu0 0
    %3250 = vmatpush1.bf16.msra.mxu0 0
    %3251 = vmatprep.subr.bf16.mxu0 0
    %3252 = vmatpush1.bf16.msra.mxu0 0
    %3253 = vmatprep.subr.bf16.mxu0 0
    %3254 = vmatpush1.bf16.msra.mxu0 0
    %3255 = vmatprep.subr.bf16.mxu0 0
    %3256 = vmatpush1.bf16.msra.mxu0 0
    %3257 = vmatprep.subr.bf16.mxu0 0
    %3258 = vmatpush1.bf16.msra.mxu0 0
    %3259 = vmatprep.mubr.bf16.mxu0 0
    %3260 = vmatmul.mubr.bf16.gmra.mrb[0].mxu0 %v2692
    %v3261 = vpop.f32.mrb[0].mxu0
    %v3262 = vadd.f32 %v3221, %v3261
    %v3263 = vpop.f32.mrb[0].mxu0
    %v3264 = vadd.f32 %v3223, %v3263
    %v3265 = vpop.f32.mrb[0].mxu0
    %v3266 = vpop.f32.mrb[0].mxu0
    %3267 = vdwg.mxu0
    %v3268 = vmax.f32 %v2975, 0.0
    %v3269 = vmax.f32 %v2977, 0.0
    %v3270 = vmax.f32 %v3262, 0.0
    %v3271 = vmax.f32 %v3264, 0.0
    %v3272 = vpack.c.bf16 %v3268, %v3268
    %v3273 = vpack.c.bf16 %v3269, %v3269
    %v3274 = vpack.c.bf16 %v3270, %v3270
    %v3275 = vpack.c.bf16 %v3271, %v3271
    %v3276 = vld [vmem:[#allocation8] sm:$0xf]
    %v3277 = vld [vmem:[#allocation8 + $0x4] sm:$0xf]
    %v3278 = vld [vmem:[#allocation8 + $0x8] sm:$0xf]
    %v3279 = vld [vmem:[#allocation8 + $0xc] sm:$0xf]
    %v3280 = vld [vmem:[#allocation8 + $0x10] sm:$0xf]
    %v3281 = vld [vmem:[#allocation8 + $0x14] sm:$0xf]
    %v3282 = vld [vmem:[#allocation8 + $0x18] sm:$0xf]
    %v3283 = vld [vmem:[#allocation8 + $0x1c] sm:$0xf]
    %v3284 = vld [vmem:[#allocation8 + $0x20] sm:$0xf]
    %v3285 = vld [vmem:[#allocation8 + $0x24] sm:$0xf]
    %v3286 = vld [vmem:[#allocation8 + $0x28] sm:$0xf]
    %v3287 = vld [vmem:[#allocation8 + $0x2c] sm:$0xf]
    %v3288 = vld [vmem:[#allocation8 + $0x30] sm:$0xf]
    %v3289 = vld [vmem:[#allocation8 + $0x34] sm:$0xf]
    %v3290 = vld [vmem:[#allocation8 + $0x38] sm:$0xf]
    %v3291 = vld [vmem:[#allocation8 + $0x3c] sm:$0xf]
    %v3292 = vld [vmem:[#allocation8 + $0x40] sm:$0xf]
    %v3293 = vld [vmem:[#allocation8 + $0x44] sm:$0xf]
    %v3294 = vld [vmem:[#allocation8 + $0x48] sm:$0xf]
    %v3295 = vld [vmem:[#allocation8 + $0x4c] sm:$0xf]
    %v3296 = vld [vmem:[#allocation8 + $0x50] sm:$0xf]
    %v3297 = vld [vmem:[#allocation8 + $0x54] sm:$0xf]
    %v3298 = vld [vmem:[#allocation8 + $0x58] sm:$0xf]
    %v3299 = vld [vmem:[#allocation8 + $0x5c] sm:$0xf]
    %v3300 = vld [vmem:[#allocation8 + $0x60] sm:$0xf]
    %v3301 = vld [vmem:[#allocation8 + $0x64] sm:$0xf]
    %v3302 = vld [vmem:[#allocation8 + $0x68] sm:$0xf]
    %v3303 = vld [vmem:[#allocation8 + $0x6c] sm:$0xf]
    %v3304 = vld [vmem:[#allocation8 + $0x70] sm:$0xf]
    %v3305 = vld [vmem:[#allocation8 + $0x74] sm:$0xf]
    %v3306 = vld [vmem:[#allocation8 + $0x78] sm:$0xf]
    %v3307 = vld [vmem:[#allocation8 + $0x7c] sm:$0xf]
    %v3308 = vld [vmem:[#allocation8 + $0x80] sm:$0xf]
    %v3309 = vld [vmem:[#allocation8 + $0x84] sm:$0xf]
    %v3310 = vld [vmem:[#allocation8 + $0x88] sm:$0xf]
    %v3311 = vld [vmem:[#allocation8 + $0x8c] sm:$0xf]
    %v3312 = vld [vmem:[#allocation8 + $0x90] sm:$0xf]
    %v3313 = vld [vmem:[#allocation8 + $0x94] sm:$0xf]
    %v3314 = vld [vmem:[#allocation8 + $0x98] sm:$0xf]
    %v3315 = vld [vmem:[#allocation8 + $0x9c] sm:$0xf]
    %v3316 = vld [vmem:[#allocation8 + $0xa0] sm:$0xf]
    %v3317 = vld [vmem:[#allocation8 + $0xa4] sm:$0xf]
    %v3318 = vld [vmem:[#allocation8 + $0xa8] sm:$0xf]
    %v3319 = vld [vmem:[#allocation8 + $0xac] sm:$0xf]
    %v3320 = vld [vmem:[#allocation8 + $0xb0] sm:$0xf]
    %v3321 = vld [vmem:[#allocation8 + $0xb4] sm:$0xf]
    %v3322 = vld [vmem:[#allocation8 + $0xb8] sm:$0xf]
    %v3323 = vld [vmem:[#allocation8 + $0xbc] sm:$0xf]
    %v3324 = vld [vmem:[#allocation8 + $0xc0] sm:$0xf]
    %v3325 = vld [vmem:[#allocation8 + $0xc4] sm:$0xf]
    %v3326 = vld [vmem:[#allocation8 + $0xc8] sm:$0xf]
    %v3327 = vld [vmem:[#allocation8 + $0xcc] sm:$0xf]
    %v3328 = vld [vmem:[#allocation8 + $0xd0] sm:$0xf]
    %v3329 = vld [vmem:[#allocation8 + $0xd4] sm:$0xf]
    %v3330 = vld [vmem:[#allocation8 + $0xd8] sm:$0xf]
    %v3331 = vld [vmem:[#allocation8 + $0xdc] sm:$0xf]
    %v3332 = vld [vmem:[#allocation8 + $0xe0] sm:$0xf]
    %v3333 = vld [vmem:[#allocation8 + $0xe4] sm:$0xf]
    %v3334 = vld [vmem:[#allocation8 + $0xe8] sm:$0xf]
    %v3335 = vld [vmem:[#allocation8 + $0xec] sm:$0xf]
    %v3336 = vld [vmem:[#allocation8 + $0xf0] sm:$0xf]
    %v3337 = vld [vmem:[#allocation8 + $0xf4] sm:$0xf]
    %v3338 = vld [vmem:[#allocation8 + $0xf8] sm:$0xf]
    %v3339 = vld [vmem:[#allocation8 + $0xfc] sm:$0xf]
    %v3340 = vld [vmem:[#allocation10] sm:$0x1]
    %v3342 = vlaneseq
    %v3343 = vshrl.u32 %v3342, 7
    %v3344 = vsub.s32 0, %v3343
    %v3345 = vrot.slane %v3340, %v3344
    %v3411 = vunpack.c.l.b16 %v3276
    %v3412 = vunpack.c.l.b16 %v3277
    %v3413 = vunpack.c.l.b16 %v3278
    %v3414 = vunpack.c.l.b16 %v3279
    %v3415 = vunpack.c.l.b16 %v3280
    %v3416 = vunpack.c.l.b16 %v3281
    %v3417 = vunpack.c.l.b16 %v3282
    %v3418 = vunpack.c.l.b16 %v3283
    %v3419 = vunpack.c.l.b16 %v3284
    %v3420 = vunpack.c.l.b16 %v3285
    %v3421 = vunpack.c.l.b16 %v3286
    %v3422 = vunpack.c.l.b16 %v3287
    %v3423 = vunpack.c.l.b16 %v3288
    %v3424 = vunpack.c.l.b16 %v3289
    %v3425 = vunpack.c.l.b16 %v3290
    %v3426 = vunpack.c.l.b16 %v3291
    %v3427 = vunpack.c.l.b16 %v3292
    %v3428 = vunpack.c.l.b16 %v3293
    %v3429 = vunpack.c.l.b16 %v3294
    %v3430 = vunpack.c.l.b16 %v3295
    %v3431 = vunpack.c.l.b16 %v3296
    %v3432 = vunpack.c.l.b16 %v3297
    %v3433 = vunpack.c.l.b16 %v3298
    %v3434 = vunpack.c.l.b16 %v3299
    %v3435 = vunpack.c.l.b16 %v3300
    %v3436 = vunpack.c.l.b16 %v3301
    %v3437 = vunpack.c.l.b16 %v3302
    %v3438 = vunpack.c.l.b16 %v3303
    %v3439 = vunpack.c.l.b16 %v3304
    %v3440 = vunpack.c.l.b16 %v3305
    %v3441 = vunpack.c.l.b16 %v3306
    %v3442 = vunpack.c.l.b16 %v3307
    %v3443 = vunpack.c.l.b16 %v3308
    %v3444 = vunpack.c.l.b16 %v3309
    %v3445 = vunpack.c.l.b16 %v3310
    %v3446 = vunpack.c.l.b16 %v3311
    %v3447 = vunpack.c.l.b16 %v3312
    %v3448 = vunpack.c.l.b16 %v3313
    %v3449 = vunpack.c.l.b16 %v3314
    %v3450 = vunpack.c.l.b16 %v3315
    %v3451 = vunpack.c.l.b16 %v3316
    %v3452 = vunpack.c.l.b16 %v3317
    %v3453 = vunpack.c.l.b16 %v3318
    %v3454 = vunpack.c.l.b16 %v3319
    %v3455 = vunpack.c.l.b16 %v3320
    %v3456 = vunpack.c.l.b16 %v3321
    %v3457 = vunpack.c.l.b16 %v3322
    %v3458 = vunpack.c.l.b16 %v3323
    %v3459 = vunpack.c.l.b16 %v3324
    %v3460 = vunpack.c.l.b16 %v3325
    %v3461 = vunpack.c.l.b16 %v3326
    %v3462 = vunpack.c.l.b16 %v3327
    %v3463 = vunpack.c.l.b16 %v3328
    %v3464 = vunpack.c.l.b16 %v3329
    %v3465 = vunpack.c.l.b16 %v3330
    %v3466 = vunpack.c.l.b16 %v3331
    %v3467 = vunpack.c.l.b16 %v3332
    %v3468 = vunpack.c.l.b16 %v3333
    %v3469 = vunpack.c.l.b16 %v3334
    %v3470 = vunpack.c.l.b16 %v3335
    %v3471 = vunpack.c.l.b16 %v3336
    %v3472 = vunpack.c.l.b16 %v3337
    %v3473 = vunpack.c.l.b16 %v3338
    %v3474 = vunpack.c.l.b16 %v3339
    %v3475 = vpack.c.b16 %v3412, %v3411
    %v3476 = vpack.c.b16 %v3414, %v3413
    %v3477 = vpack.c.b16 %v3416, %v3415
    %v3478 = vpack.c.b16 %v3418, %v3417
    %v3479 = vpack.c.b16 %v3420, %v3419
    %v3480 = vpack.c.b16 %v3422, %v3421
    %v3481 = vpack.c.b16 %v3424, %v3423
    %v3482 = vpack.c.b16 %v3426, %v3425
    %v3483 = vpack.c.b16 %v3428, %v3427
    %v3484 = vpack.c.b16 %v3430, %v3429
    %v3485 = vpack.c.b16 %v3432, %v3431
    %v3486 = vpack.c.b16 %v3434, %v3433
    %v3487 = vpack.c.b16 %v3436, %v3435
    %v3488 = vpack.c.b16 %v3438, %v3437
    %v3489 = vpack.c.b16 %v3440, %v3439
    %v3490 = vpack.c.b16 %v3442, %v3441
    %v3491 = vpack.c.b16 %v3444, %v3443
    %v3492 = vpack.c.b16 %v3446, %v3445
    %v3493 = vpack.c.b16 %v3448, %v3447
    %v3494 = vpack.c.b16 %v3450, %v3449
    %v3495 = vpack.c.b16 %v3452, %v3451
    %v3496 = vpack.c.b16 %v3454, %v3453
    %v3497 = vpack.c.b16 %v3456, %v3455
    %v3498 = vpack.c.b16 %v3458, %v3457
    %v3499 = vpack.c.b16 %v3460, %v3459
    %v3500 = vpack.c.b16 %v3462, %v3461
    %v3501 = vpack.c.b16 %v3464, %v3463
    %v3502 = vpack.c.b16 %v3466, %v3465
    %v3503 = vpack.c.b16 %v3468, %v3467
    %v3504 = vpack.c.b16 %v3470, %v3469
    %v3505 = vpack.c.b16 %v3472, %v3471
    %v3506 = vpack.c.b16 %v3474, %v3473
    %3539 = vmatprep.subr.bf16.mxu0 0
    %3540 = vmatpush1.bf16.msra.mxu0 %v3475
    %3541 = vmatprep.subr.bf16.mxu0 0
    %3542 = vmatpush1.bf16.msra.mxu0 %v3476
    %3543 = vmatprep.subr.bf16.mxu0 0
    %3544 = vmatpush1.bf16.msra.mxu0 %v3477
    %3545 = vmatprep.subr.bf16.mxu0 0
    %3546 = vmatpush1.bf16.msra.mxu0 %v3478
    %3547 = vmatprep.subr.bf16.mxu0 0
    %3548 = vmatpush1.bf16.msra.mxu0 %v3479
    %3549 = vmatprep.subr.bf16.mxu0 0
    %3550 = vmatpush1.bf16.msra.mxu0 %v3480
    %3551 = vmatprep.subr.bf16.mxu0 0
    %3552 = vmatpush1.bf16.msra.mxu0 %v3481
    %3553 = vmatprep.subr.bf16.mxu0 0
    %3554 = vmatpush1.bf16.msra.mxu0 %v3482
    %3555 = vmatprep.subr.bf16.mxu0 0
    %3556 = vmatpush1.bf16.msra.mxu0 %v3483
    %3557 = vmatprep.subr.bf16.mxu0 0
    %3558 = vmatpush1.bf16.msra.mxu0 %v3484
    %3559 = vmatprep.subr.bf16.mxu0 0
    %3560 = vmatpush1.bf16.msra.mxu0 %v3485
    %3561 = vmatprep.subr.bf16.mxu0 0
    %3562 = vmatpush1.bf16.msra.mxu0 %v3486
    %3563 = vmatprep.subr.bf16.mxu0 0
    %3564 = vmatpush1.bf16.msra.mxu0 %v3487
    %3565 = vmatprep.subr.bf16.mxu0 0
    %3566 = vmatpush1.bf16.msra.mxu0 %v3488
    %3567 = vmatprep.subr.bf16.mxu0 0
    %3568 = vmatpush1.bf16.msra.mxu0 %v3489
    %3569 = vmatprep.subr.bf16.mxu0 0
    %3570 = vmatpush1.bf16.msra.mxu0 %v3490
    %3571 = vmatprep.mubr.bf16.mxu0 %v3273
    %3572 = vmatmul.mubr.bf16.gmra.mrb[0].mxu0 %v3272
    %v3573 = vpop.f32.mrb[0].mxu0
    %v3574 = vadd.f32 %v3345, %v3573
    %v3575 = vpop.f32.mrb[0].mxu0
    %v3576 = vpop.f32.mrb[0].mxu0
    %v3577 = vpop.f32.mrb[0].mxu0
    %3578 = vdwg.mxu0
    %3579 = vmatprep.subr.bf16.mxu0 0
    %3580 = vmatpush1.bf16.msra.mxu0 %v3491
    %3581 = vmatprep.subr.bf16.mxu0 0
    %3582 = vmatpush1.bf16.msra.mxu0 %v3492
    %3583 = vmatprep.subr.bf16.mxu0 0
    %3584 = vmatpush1.bf16.msra.mxu0 %v3493
    %3585 = vmatprep.subr.bf16.mxu0 0
    %3586 = vmatpush1.bf16.msra.mxu0 %v3494
    %3587 = vmatprep.subr.bf16.mxu0 0
    %3588 = vmatpush1.bf16.msra.mxu0 %v3495
    %3589 = vmatprep.subr.bf16.mxu0 0
    %3590 = vmatpush1.bf16.msra.mxu0 %v3496
    %3591 = vmatprep.subr.bf16.mxu0 0
    %3592 = vmatpush1.bf16.msra.mxu0 %v3497
    %3593 = vmatprep.subr.bf16.mxu0 0
    %3594 = vmatpush1.bf16.msra.mxu0 %v3498
    %3595 = vmatprep.subr.bf16.mxu0 0
    %3596 = vmatpush1.bf16.msra.mxu0 %v3499
    %3597 = vmatprep.subr.bf16.mxu0 0
    %3598 = vmatpush1.bf16.msra.mxu0 %v3500
    %3599 = vmatprep.subr.bf16.mxu0 0
    %3600 = vmatpush1.bf16.msra.mxu0 %v3501
    %3601 = vmatprep.subr.bf16.mxu0 0
    %3602 = vmatpush1.bf16.msra.mxu0 %v3502
    %3603 = vmatprep.subr.bf16.mxu0 0
    %3604 = vmatpush1.bf16.msra.mxu0 %v3503
    %3605 = vmatprep.subr.bf16.mxu0 0
    %3606 = vmatpush1.bf16.msra.mxu0 %v3504
    %3607 = vmatprep.subr.bf16.mxu0 0
    %3608 = vmatpush1.bf16.msra.mxu0 %v3505
    %3609 = vmatprep.subr.bf16.mxu0 0
    %3610 = vmatpush1.bf16.msra.mxu0 %v3506
    %3611 = vmatprep.mubr.bf16.mxu0 %v3275
    %3612 = vmatmul.mubr.bf16.gmra.mrb[0].mxu0 %v3274
    %v3613 = vpop.f32.mrb[0].mxu0
    %v3614 = vadd.f32 %v3574, %v3613
    %v3615 = vpop.f32.mrb[0].mxu0
    %v3616 = vpop.f32.mrb[0].mxu0
    %v3617 = vpop.f32.mrb[0].mxu0
    %3618 = vdwg.mxu0
    %v3619 = vmax.f32 %v3614, 0.0
    %v3620 = vpack.c.bf16 %v3619, %v3619
    %v3621 = vld [vmem:[#allocation11] sm:$0xff]
    %v3622 = vld [vmem:[#allocation11 + $0x8] sm:$0xff]
    %v3623 = vld [vmem:[#allocation11 + $0x10] sm:$0xff]
    %v3624 = vld [vmem:[#allocation11 + $0x18] sm:$0xff]
    %v3625 = vld [vmem:[#allocation11 + $0x20] sm:$0xff]
    %v3626 = vld [vmem:[#allocation11 + $0x28] sm:$0xff]
    %v3627 = vld [vmem:[#allocation11 + $0x30] sm:$0xff]
    %v3628 = vld [vmem:[#allocation11 + $0x38] sm:$0xff]
    %v3629 = vld [vmem:[#allocation11 + $0x40] sm:$0xff]
    %v3630 = vld [vmem:[#allocation11 + $0x48] sm:$0xff]
    %v3631 = vld [vmem:[#allocation11 + $0x50] sm:$0xff]
    %v3632 = vld [vmem:[#allocation11 + $0x58] sm:$0xff]
    %v3633 = vld [vmem:[#allocation11 + $0x60] sm:$0xff]
    %v3634 = vld [vmem:[#allocation11 + $0x68] sm:$0xff]
    %v3635 = vld [vmem:[#allocation11 + $0x70] sm:$0xff]
    %v3636 = vld [vmem:[#allocation11 + $0x78] sm:$0xff]
    %v3637 = vld [vmem:[#allocation13] sm:$0x3]
    %v3639 = vlaneseq
    %v3640 = vshrl.u32 %v3639, 7
    %v3641 = vsub.s32 0, %v3640
    %v3642 = vrot.slane %v3637, %v3641
    %v3643 = vlaneseq
    %v3644 = vshrl.u32 %v3643, 7
    %v3645 = vsub.s32 1, %v3644
    %v3646 = vrot.slane %v3637, %v3645
    %v3665 = vunpack.c.l.b16 %v3621
    %v3666 = vunpack.c.h.b16 %v3621
    %v3667 = vunpack.c.l.b16 %v3622
    %v3668 = vunpack.c.h.b16 %v3622
    %v3669 = vunpack.c.l.b16 %v3623
    %v3670 = vunpack.c.h.b16 %v3623
    %v3671 = vunpack.c.l.b16 %v3624
    %v3672 = vunpack.c.h.b16 %v3624
    %v3673 = vunpack.c.l.b16 %v3625
    %v3674 = vunpack.c.h.b16 %v3625
    %v3675 = vunpack.c.l.b16 %v3626
    %v3676 = vunpack.c.h.b16 %v3626
    %v3677 = vunpack.c.l.b16 %v3627
    %v3678 = vunpack.c.h.b16 %v3627
    %v3679 = vunpack.c.l.b16 %v3628
    %v3680 = vunpack.c.h.b16 %v3628
    %v3681 = vunpack.c.l.b16 %v3629
    %v3682 = vunpack.c.h.b16 %v3629
    %v3683 = vunpack.c.l.b16 %v3630
    %v3684 = vunpack.c.h.b16 %v3630
    %v3685 = vunpack.c.l.b16 %v3631
    %v3686 = vunpack.c.h.b16 %v3631
    %v3687 = vunpack.c.l.b16 %v3632
    %v3688 = vunpack.c.h.b16 %v3632
    %v3689 = vunpack.c.l.b16 %v3633
    %v3690 = vunpack.c.h.b16 %v3633
    %v3691 = vunpack.c.l.b16 %v3634
    %v3692 = vunpack.c.h.b16 %v3634
    %v3693 = vunpack.c.l.b16 %v3635
    %v3694 = vunpack.c.h.b16 %v3635
    %v3695 = vunpack.c.l.b16 %v3636
    %v3696 = vunpack.c.h.b16 %v3636
    %v3697 = vpack.c.b16 %v3667, %v3665
    %v3698 = vpack.c.b16 %v3668, %v3666
    %v3699 = vpack.c.b16 %v3671, %v3669
    %v3700 = vpack.c.b16 %v3672, %v3670
    %v3701 = vpack.c.b16 %v3675, %v3673
    %v3702 = vpack.c.b16 %v3676, %v3674
    %v3703 = vpack.c.b16 %v3679, %v3677
    %v3704 = vpack.c.b16 %v3680, %v3678
    %v3705 = vpack.c.b16 %v3683, %v3681
    %v3706 = vpack.c.b16 %v3684, %v3682
    %v3707 = vpack.c.b16 %v3687, %v3685
    %v3708 = vpack.c.b16 %v3688, %v3686
    %v3709 = vpack.c.b16 %v3691, %v3689
    %v3710 = vpack.c.b16 %v3692, %v3690
    %v3711 = vpack.c.b16 %v3695, %v3693
    %v3712 = vpack.c.b16 %v3696, %v3694
    %3729 = vmatprep.subr.bf16.mxu0 %v3698
    %3730 = vmatpush1.bf16.msra.mxu0 %v3697
    %3731 = vmatprep.subr.bf16.mxu0 %v3700
    %3732 = vmatpush1.bf16.msra.mxu0 %v3699
    %3733 = vmatprep.subr.bf16.mxu0 %v3702
    %3734 = vmatpush1.bf16.msra.mxu0 %v3701
    %3735 = vmatprep.subr.bf16.mxu0 %v3704
    %3736 = vmatpush1.bf16.msra.mxu0 %v3703
    %3737 = vmatprep.subr.bf16.mxu0 %v3706
    %3738 = vmatpush1.bf16.msra.mxu0 %v3705
    %3739 = vmatprep.subr.bf16.mxu0 %v3708
    %3740 = vmatpush1.bf16.msra.mxu0 %v3707
    %3741 = vmatprep.subr.bf16.mxu0 %v3710
    %3742 = vmatpush1.bf16.msra.mxu0 %v3709
    %3743 = vmatprep.subr.bf16.mxu0 %v3712
    %3744 = vmatpush1.bf16.msra.mxu0 %v3711
    %3745 = vmatprep.subr.bf16.mxu0 0
    %3746 = vmatpush1.bf16.msra.mxu0 0
    %3747 = vmatprep.subr.bf16.mxu0 0
    %3748 = vmatpush1.bf16.msra.mxu0 0
    %3749 = vmatprep.subr.bf16.mxu0 0
    %3750 = vmatpush1.bf16.msra.mxu0 0
    %3751 = vmatprep.subr.bf16.mxu0 0
    %3752 = vmatpush1.bf16.msra.mxu0 0
    %3753 = vmatprep.subr.bf16.mxu0 0
    %3754 = vmatpush1.bf16.msra.mxu0 0
    %3755 = vmatprep.subr.bf16.mxu0 0
    %3756 = vmatpush1.bf16.msra.mxu0 0
    %3757 = vmatprep.subr.bf16.mxu0 0
    %3758 = vmatpush1.bf16.msra.mxu0 0
    %3759 = vmatprep.subr.bf16.mxu0 0
    %3760 = vmatpush1.bf16.msra.mxu0 0
    %3761 = vmatprep.mubr.bf16.mxu0 0
    %3762 = vmatmul.mubr.bf16.gmra.mrb[0].mxu0 %v3620
    %v3763 = vpop.f32.mrb[0].mxu0
    %v3764 = vadd.f32 %v3642, %v3763
    %v3765 = vpop.f32.mrb[0].mxu0
    %v3766 = vadd.f32 %v3646, %v3765
    %v3767 = vpop.f32.mrb[0].mxu0
    %v3768 = vpop.f32.mrb[0].mxu0
    %3769 = vdwg.mxu0
    %v3770 = vmax.f32 %v3764, 0.0
    %v3771 = vmax.f32 %v3766, 0.0
    %v3772 = vpack.c.bf16 %v3770, %v3770
    %v3773 = vpack.c.bf16 %v3771, %v3771
    %v3774 = vld [vmem:[%s7] sm:$0xf]
    %v3775 = vld [vmem:[%s7 + $0x4] sm:$0xf]
    %v3776 = vld [vmem:[%s7 + $0x8] sm:$0xf]
    %v3777 = vld [vmem:[%s7 + $0xc] sm:$0xf]
    %v3778 = vld [vmem:[%s7 + $0x10] sm:$0xf]
    %v3779 = vld [vmem:[%s7 + $0x14] sm:$0xf]
    %v3780 = vld [vmem:[%s7 + $0x18] sm:$0xf]
    %v3781 = vld [vmem:[%s7 + $0x1c] sm:$0xf]
    %v3782 = vld [vmem:[%s7 + $0x20] sm:$0xf]
    %v3783 = vld [vmem:[%s7 + $0x24] sm:$0xf]
    %v3784 = vld [vmem:[%s7 + $0x28] sm:$0xf]
    %v3785 = vld [vmem:[%s7 + $0x2c] sm:$0xf]
    %v3786 = vld [vmem:[%s7 + $0x30] sm:$0xf]
    %v3787 = vld [vmem:[%s7 + $0x34] sm:$0xf]
    %v3788 = vld [vmem:[%s7 + $0x38] sm:$0xf]
    %v3789 = vld [vmem:[%s7 + $0x3c] sm:$0xf]
    %v3790 = vld [vmem:[%s7 + $0x40] sm:$0xf]
    %v3791 = vld [vmem:[%s7 + $0x44] sm:$0xf]
    %v3792 = vld [vmem:[%s7 + $0x48] sm:$0xf]
    %v3793 = vld [vmem:[%s7 + $0x4c] sm:$0xf]
    %v3794 = vld [vmem:[%s7 + $0x50] sm:$0xf]
    %v3795 = vld [vmem:[%s7 + $0x54] sm:$0xf]
    %v3796 = vld [vmem:[%s7 + $0x58] sm:$0xf]
    %v3797 = vld [vmem:[%s7 + $0x5c] sm:$0xf]
    %v3798 = vld [vmem:[%s7 + $0x60] sm:$0xf]
    %v3799 = vld [vmem:[%s7 + $0x64] sm:$0xf]
    %v3800 = vld [vmem:[%s7 + $0x68] sm:$0xf]
    %v3801 = vld [vmem:[%s7 + $0x6c] sm:$0xf]
    %v3802 = vld [vmem:[%s7 + $0x70] sm:$0xf]
    %v3803 = vld [vmem:[%s7 + $0x74] sm:$0xf]
    %v3804 = vld [vmem:[%s7 + $0x78] sm:$0xf]
    %v3805 = vld [vmem:[%s7 + $0x7c] sm:$0xf]
    %v3806 = vld [vmem:[#allocation14] sm:$0x1]
    %v3808 = vlaneseq
    %v3809 = vshrl.u32 %v3808, 7
    %v3810 = vsub.s32 0, %v3809
    %v3811 = vrot.slane %v3806, %v3810
    %v3845 = vunpack.c.l.b16 %v3774
    %v3846 = vunpack.c.l.b16 %v3775
    %v3847 = vunpack.c.l.b16 %v3776
    %v3848 = vunpack.c.l.b16 %v3777
    %v3849 = vunpack.c.l.b16 %v3778
    %v3850 = vunpack.c.l.b16 %v3779
    %v3851 = vunpack.c.l.b16 %v3780
    %v3852 = vunpack.c.l.b16 %v3781
    %v3853 = vunpack.c.l.b16 %v3782
    %v3854 = vunpack.c.l.b16 %v3783
    %v3855 = vunpack.c.l.b16 %v3784
    %v3856 = vunpack.c.l.b16 %v3785
    %v3857 = vunpack.c.l.b16 %v3786
    %v3858 = vunpack.c.l.b16 %v3787
    %v3859 = vunpack.c.l.b16 %v3788
    %v3860 = vunpack.c.l.b16 %v3789
    %v3861 = vunpack.c.l.b16 %v3790
    %v3862 = vunpack.c.l.b16 %v3791
    %v3863 = vunpack.c.l.b16 %v3792
    %v3864 = vunpack.c.l.b16 %v3793
    %v3865 = vunpack.c.l.b16 %v3794
    %v3866 = vunpack.c.l.b16 %v3795
    %v3867 = vunpack.c.l.b16 %v3796
    %v3868 = vunpack.c.l.b16 %v3797
    %v3869 = vunpack.c.l.b16 %v3798
    %v3870 = vunpack.c.l.b16 %v3799
    %v3871 = vunpack.c.l.b16 %v3800
    %v3872 = vunpack.c.l.b16 %v3801
    %v3873 = vunpack.c.l.b16 %v3802
    %v3874 = vunpack.c.l.b16 %v3803
    %v3875 = vunpack.c.l.b16 %v3804
    %v3876 = vunpack.c.l.b16 %v3805
    %v3877 = vpack.c.b16 %v3846, %v3845
    %v3878 = vpack.c.b16 %v3848, %v3847
    %v3879 = vpack.c.b16 %v3850, %v3849
    %v3880 = vpack.c.b16 %v3852, %v3851
    %v3881 = vpack.c.b16 %v3854, %v3853
    %v3882 = vpack.c.b16 %v3856, %v3855
    %v3883 = vpack.c.b16 %v3858, %v3857
    %v3884 = vpack.c.b16 %v3860, %v3859
    %v3885 = vpack.c.b16 %v3862, %v3861
    %v3886 = vpack.c.b16 %v3864, %v3863
    %v3887 = vpack.c.b16 %v3866, %v3865
    %v3888 = vpack.c.b16 %v3868, %v3867
    %v3889 = vpack.c.b16 %v3870, %v3869
    %v3890 = vpack.c.b16 %v3872, %v3871
    %v3891 = vpack.c.b16 %v3874, %v3873
    %v3892 = vpack.c.b16 %v3876, %v3875
    %3909 = vmatprep.subr.bf16.mxu0 0
    %3910 = vmatpush1.bf16.msra.mxu0 %v3877
    %3911 = vmatprep.subr.bf16.mxu0 0
    %3912 = vmatpush1.bf16.msra.mxu0 %v3878
    %3913 = vmatprep.subr.bf16.mxu0 0
    %3914 = vmatpush1.bf16.msra.mxu0 %v3879
    %3915 = vmatprep.subr.bf16.mxu0 0
    %3916 = vmatpush1.bf16.msra.mxu0 %v3880
    %3917 = vmatprep.subr.bf16.mxu0 0
    %3918 = vmatpush1.bf16.msra.mxu0 %v3881
    %3919 = vmatprep.subr.bf16.mxu0 0
    %3920 = vmatpush1.bf16.msra.mxu0 %v3882
    %3921 = vmatprep.subr.bf16.mxu0 0
    %3922 = vmatpush1.bf16.msra.mxu0 %v3883
    %3923 = vmatprep.subr.bf16.mxu0 0
    %3924 = vmatpush1.bf16.msra.mxu0 %v3884
    %3925 = vmatprep.subr.bf16.mxu0 0
    %3926 = vmatpush1.bf16.msra.mxu0 %v3885
    %3927 = vmatprep.subr.bf16.mxu0 0
    %3928 = vmatpush1.bf16.msra.mxu0 %v3886
    %3929 = vmatprep.subr.bf16.mxu0 0
    %3930 = vmatpush1.bf16.msra.mxu0 %v3887
    %3931 = vmatprep.subr.bf16.mxu0 0
    %3932 = vmatpush1.bf16.msra.mxu0 %v3888
    %3933 = vmatprep.subr.bf16.mxu0 0
    %3934 = vmatpush1.bf16.msra.mxu0 %v3889
    %3935 = vmatprep.subr.bf16.mxu0 0
    %3936 = vmatpush1.bf16.msra.mxu0 %v3890
    %3937 = vmatprep.subr.bf16.mxu0 0
    %3938 = vmatpush1.bf16.msra.mxu0 %v3891
    %3939 = vmatprep.subr.bf16.mxu0 0
    %3940 = vmatpush1.bf16.msra.mxu0 %v3892
    %3941 = vmatprep.mubr.bf16.mxu0 %v3773
    %3942 = vmatmul.mubr.bf16.gmra.mrb[0].mxu0 %v3772
    %v3943 = vpop.f32.mrb[0].mxu0
    %v3944 = vadd.f32 %v3811, %v3943
    %v3945 = vpop.f32.mrb[0].mxu0
    %v3946 = vpop.f32.mrb[0].mxu0
    %v3947 = vpop.f32.mrb[0].mxu0
    %3948 = vdwg.mxu0
    %v3949 = vmax.f32 %v3944, 0.0
    %v3950 = vpack.c.bf16 %v3949, %v3949
    %v3951 = vld [vmem:[#allocation16] sm:$0xf]
    %v3952 = vld [vmem:[#allocation16 + $0x4] sm:$0xf]
    %v3953 = vld [vmem:[#allocation16 + $0x8] sm:$0xf]
    %v3954 = vld [vmem:[#allocation16 + $0xc] sm:$0xf]
    %v3955 = vld [vmem:[#allocation16 + $0x10] sm:$0xf]
    %v3956 = vld [vmem:[#allocation16 + $0x14] sm:$0xf]
    %v3957 = vld [vmem:[#allocation16 + $0x18] sm:$0xf]
    %v3958 = vld [vmem:[#allocation16 + $0x1c] sm:$0xf]
    %v3959 = vld [vmem:[#allocation17] sm:$0x1]
    %v3961 = vlaneseq
    %v3962 = vshrl.u32 %v3961, 7
    %v3963 = vsub.s32 0, %v3962
    %v3964 = vrot.slane %v3959, %v3963
    %v3974 = vunpack.c.l.b16 %v3951
    %v3975 = vunpack.c.l.b16 %v3952
    %v3976 = vunpack.c.l.b16 %v3953
    %v3977 = vunpack.c.l.b16 %v3954
    %v3978 = vunpack.c.l.b16 %v3955
    %v3979 = vunpack.c.l.b16 %v3956
    %v3980 = vunpack.c.l.b16 %v3957
    %v3981 = vunpack.c.l.b16 %v3958
    %v3982 = vpack.c.b16 %v3975, %v3974
    %v3983 = vpack.c.b16 %v3977, %v3976
    %v3984 = vpack.c.b16 %v3979, %v3978
    %v3985 = vpack.c.b16 %v3981, %v3980
    %v3991 = vsel %vm2690, %v3950, 0
    %3993 = vmatprep.subr.bf16.mxu0 0
    %3994 = vmatpush1.bf16.msra.mxu0 %v3982
    %3995 = vmatprep.subr.bf16.mxu0 0
    %3996 = vmatpush1.bf16.msra.mxu0 %v3983
    %3997 = vmatprep.subr.bf16.mxu0 0
    %3998 = vmatpush1.bf16.msra.mxu0 %v3984
    %3999 = vmatprep.subr.bf16.mxu0 0
    %4000 = vmatpush1.bf16.msra.mxu0 %v3985
    %4001 = vmatprep.subr.bf16.mxu0 0
    %4002 = vmatpush1.bf16.msra.mxu0 0
    %4003 = vmatprep.subr.bf16.mxu0 0
    %4004 = vmatpush1.bf16.msra.mxu0 0
    %4005 = vmatprep.subr.bf16.mxu0 0
    %4006 = vmatpush1.bf16.msra.mxu0 0
    %4007 = vmatprep.subr.bf16.mxu0 0
    %4008 = vmatpush1.bf16.msra.mxu0 0
    %4009 = vmatprep.subr.bf16.mxu0 0
    %4010 = vmatpush1.bf16.msra.mxu0 0
    %4011 = vmatprep.subr.bf16.mxu0 0
    %4012 = vmatpush1.bf16.msra.mxu0 0
    %4013 = vmatprep.subr.bf16.mxu0 0
    %4014 = vmatpush1.bf16.msra.mxu0 0
    %4015 = vmatprep.subr.bf16.mxu0 0
    %4016 = vmatpush1.bf16.msra.mxu0 0
    %4017 = vmatprep.subr.bf16.mxu0 0
    %4018 = vmatpush1.bf16.msra.mxu0 0
    %4019 = vmatprep.subr.bf16.mxu0 0
    %4020 = vmatpush1.bf16.msra.mxu0 0
    %4021 = vmatprep.subr.bf16.mxu0 0
    %4022 = vmatpush1.bf16.msra.mxu0 0
    %4023 = vmatprep.subr.bf16.mxu0 0
    %4024 = vmatpush1.bf16.msra.mxu0 0
    %4025 = vmatprep.mubr.bf16.mxu0 0
    %4026 = vmatmul.mubr.bf16.gmra.mrb[0].mxu0 %v3991
    %v4027 = vpop.f32.mrb[0].mxu0
    %v4028 = vadd.f32 %v3964, %v4027
    %v4029 = vpop.f32.mrb[0].mxu0
    %v4030 = vpop.f32.mrb[0].mxu0
    %v4031 = vpop.f32.mrb[0].mxu0
    %4032 = vdwg.mxu0
    %4033 = vst [vmem:[#allocation19] sm:$0x3] %v4028
    // Predicated region
    $region86: #{tpu_custom_call.1} parent=1 // pred_check
      _
    $region87: #{tpu_custom_call.1} parent=1 // pred_check_branch
      %4035 = sbr.rel (0) target = $region89
    $region88: #{tpu_custom_call.1} parent=1 // pred_region
      %s4037 = ssub.s32 32, 32
      %4038 = vsyncadd [#allocation4], %s4037
      %s4040 = sshll.u32 [#allocation19], 4
      %s4041 = int_to_ptr.vmem [resolvable:$true] %s4040
      %4043 = dma.vmem_to_hbm [thread:$0]  %s4041, 32, %s11, [#allocation4]
    $region89: #{tpu_custom_call.1} parent=1 // pred_fallthru
      _
    // Predicated region
    $region90: #{tpu_custom_call.1} parent=1 // pred_check
      _
    $region91: #{tpu_custom_call.1} parent=1 // pred_check_branch
      %4045 = sbr.rel (0) target = $region93
    $region92: #{tpu_custom_call.1} parent=1 // pred_region
      %4046 = dma.done [#allocation4], 32
    $region93: #{tpu_custom_call.1} parent=1 // pred_fallthru
      _
    %4047 = vsyncpa [#allocation3], 1
    %4048 = vsyncpa [#allocation6], 1
    %4049 = vsyncpa [#allocation9], 1
    %4050 = vsyncpa [#allocation12], 1
    %4051 = vsyncpa [#allocation15], 1
    %4052 = vsyncpa [#allocation18], 1
    %4053 = vsyncpa [#allocation4], 1

</llo_original>
